<compile_context>
chip_gen: v5e
topology: v5e:2x2
jax: 0.10.0
libtpu: 0.0.40
codegen_flags: <defaults>
</compile_context>

<pallas_src>
import functools

import jax
import jax.numpy as jnp
from jax.experimental import pallas as pl
from jax.experimental.pallas import tpu as pltpu


_FUSED_VMEM_BUDGET = 20 * 1024 * 1024   # pick fused path if est. working set <= this
_FUSED_VMEM_LIMIT = 48 * 1024 * 1024    # scoped-VMEM cap for the fused call
_TWO_PASS_VMEM_LIMIT = 32 * 1024 * 1024


# ----------------------------------------------------------------------------
# FUSED single-pass kernel: stats + normalize + SiLU + 3x3 conv per image
# ----------------------------------------------------------------------------
def _fused_gn_silu_conv_kernel(x_ref, gamma_ref, beta_ref, memb_ref, expand_ref,
                               w_ref, b_ref, out_ref, ypad_ref, *, eps, chunk_h):
    # x_ref:      (H, W, C)      one full image (leading N squeezed away)
    # gamma_ref:  (1, C)         GroupNorm weight
    # beta_ref:   (1, C)         GroupNorm bias
    # memb_ref:   (C, G)         one-hot channel -> group membership
    # expand_ref: (G, C)         transpose of memb (group -> channel broadcast)
    # w_ref:      (9, C, Cout)   conv taps, index = ky*3 + kx
    # b_ref:      (1, Cout)
    # out_ref:    (H, W, Cout)
    # ypad_ref:   (H+2, W, C) f32 scratch: SiLU(GN(x)) with zero top/bottom rows
    H, W, C = x_ref.shape
    Cout = out_ref.shape[-1]
    G = memb_ref.shape[-1]
    cg = C // G

    # ---- GroupNorm statistics (single HBM read of x) ------------------------
    x = x_ref[...].astype(jnp.float32).reshape(H * W, C)
    s1 = jnp.sum(x, axis=0, keepdims=True)                       # (1, C)
    s2 = jnp.sum(x * x, axis=0, keepdims=True)                   # (1, C)
    memb = memb_ref[...]                                         # (C, G)
    expand = expand_ref[...]                                     # (G, C)
    cnt = jnp.float32(H * W * cg)
    s1g = jnp.dot(s1, memb, preferred_element_type=jnp.float32)  # (1, G)
    s2g = jnp.dot(s2, memb, preferred_element_type=jnp.float32)  # (1, G)
    mu_g = s1g / cnt
    var_g = s2g / cnt - mu_g * mu_g                              # biased variance
    inv_g = jax.lax.rsqrt(var_g + jnp.float32(eps))
    mu_c = jnp.dot(mu_g, expand, preferred_element_type=jnp.float32)   # (1, C)
    inv_c = jnp.dot(inv_g, expand, preferred_element_type=jnp.float32)  # (1, C)
    scale = inv_c * gamma_ref[...]                               # (1, C)
    shift = beta_ref[...] - mu_c * scale                         # (1, C)

    # ---- Normalize + SiLU into zero-row-padded VMEM scratch -----------------
    y = x * scale + shift
    y = y * jax.nn.sigmoid(y)
    ypad_ref[0] = jnp.zeros((W, C), jnp.float32)
    ypad_ref[H + 1] = jnp.zeros((W, C), jnp.float32)
    ypad_ref[pl.ds(1, H)] = y.reshape(H, W, C)

    # ---- 3x3 conv (padding=1), chunked over rows to bound temporaries -------
    wk = w_ref[...]                                              # (9, C, Cout)
    bias = b_ref[...]                                            # (1, Cout)
    ch = chunk_h

    @pl.loop(0, H // ch)
    def _(ci):
        base = pl.multiple_of(ci * ch, ch)
        yp = ypad_ref[pl.ds(base, ch + 2)]                       # (ch+2, W, C)
        zcol = jnp.zeros_like(yp[:, :1, :])
        slabs = (
            jnp.concatenate([zcol, yp[:, :W - 1, :]], axis=1),   # kx = 0 (col-1)
            yp,                                                  # kx = 1
            jnp.concatenate([yp[:, 1:, :], zcol], axis=1),       # kx = 2 (col+1)
        )
        acc = jnp.zeros((ch * W, Cout), jnp.float32)
        for dy in range(3):
            for dx in range(3):
                lhs = slabs[dx][dy:dy + ch].reshape(ch * W, C)
                acc = acc + jnp.dot(lhs, wk[dy * 3 + dx],
                                    preferred_element_type=jnp.float32)
        acc = acc + bias
        out_ref[pl.ds(base, ch)] = acc.reshape(ch, W, Cout).astype(out_ref.dtype)


def _pick_chunk_h(H, W, C, budget_bytes=6 * 1024 * 1024):
    for ch in (64, 32, 16, 8, 4, 2, 1):
        if H % ch == 0 and 3 * (ch + 2) * W * C * 4 <= budget_bytes:
            return ch
    return 1


def _fused_vmem_estimate(x):
    _, H, W, C = x.shape
    img_in = H * W * C * x.dtype.itemsize
    img_f32 = H * W * C * 4
    ch = _pick_chunk_h(H, W, C)
    chunk_tmp = 3 * (ch + 2) * W * C * 4
    # 2x double-buffered input block + f32 copy + normalized values +
    # zero-padded scratch + per-chunk shifted slabs
    return 2 * img_in + 2 * img_f32 + (H + 2) * W * C * 4 + chunk_tmp


def _fused_path(x, gamma, beta, w9, b2, groups, eps):
    N, H, W, C = x.shape
    Cout = w9.shape[-1]
    G = groups
    Cg = C // G
    CH = _pick_chunk_h(H, W, C)

    ch_ids = jnp.arange(C, dtype=jnp.int32) // Cg
    memb = (ch_ids[:, None] == jnp.arange(G, dtype=jnp.int32)[None, :]).astype(jnp.float32)
    expand = memb.T                                   # built host-side (tiny)
    g2 = gamma.reshape(1, C).astype(jnp.float32)
    bt2 = beta.reshape(1, C).astype(jnp.float32)

    kernel = functools.partial(_fused_gn_silu_conv_kernel, eps=eps, chunk_h=CH)
    return pl.pallas_call(
        kernel,
        out_shape=jax.ShapeDtypeStruct((N, H, W, Cout), x.dtype),
        grid_spec=pltpu.PrefetchScalarGridSpec(
            num_scalar_prefetch=0,
            grid=(N,),
            in_specs=[
                pl.BlockSpec((None, H, W, C), lambda n: (n, 0, 0, 0)),   # image
                pl.BlockSpec((1, C), lambda n: (0, 0)),                  # gamma
                pl.BlockSpec((1, C), lambda n: (0, 0)),                  # beta
                pl.BlockSpec((C, G), lambda n: (0, 0)),                  # memb
                pl.BlockSpec((G, C), lambda n: (0, 0)),                  # expand
                pl.BlockSpec((9, C, Cout), lambda n: (0, 0, 0)),         # weights
                pl.BlockSpec((1, Cout), lambda n: (0, 0)),               # bias
            ],
            out_specs=pl.BlockSpec((None, H, W, Cout), lambda n: (n, 0, 0, 0)),
            scratch_shapes=[pltpu.VMEM((H + 2, W, C), jnp.float32)]),
        compiler_params=pltpu.CompilerParams(
            dimension_semantics=("parallel",),
            vmem_limit_bytes=_FUSED_VMEM_LIMIT),
    )(x, g2, bt2, memb, expand, w9, b2)


# ----------------------------------------------------------------------------
# TWO-PASS streaming fallback (large images)
# ----------------------------------------------------------------------------
def _gn_stats_kernel(x_ref, s1_ref, s2_ref):
    # x_ref: (1, TH, W, C) row tile;  s1/s2: (1, 1, C) per-image accumulators
    # resident across the (arbitrary) row axis.
    i = pl.program_id(1)
    _, th, w, c = x_ref.shape
    x = x_ref[0].astype(jnp.float32).reshape(th * w, c)
    ps1 = jnp.sum(x, axis=0, keepdims=True)            # (1, C)
    ps2 = jnp.sum(x * x, axis=0, keepdims=True)        # (1, C)

    @pl.when(i == 0)
    def _():
        s1_ref[0] = ps1
        s2_ref[0] = ps2

    @pl.when(i != 0)
    def _():
        s1_ref[0] = s1_ref[0] + ps1
        s2_ref[0] = s2_ref[0] + ps2


def _norm_silu_conv_kernel(x_ref, xprev_ref, xnext_ref, scale_ref, shift_ref,
                           w_ref, b_ref, out_ref):
    # x_ref:     (1, TH, W, C)   current row tile
    # xprev_ref: (1, 1, W, C)    image row just above the tile (clamped)
    # xnext_ref: (1, 1, W, C)    image row just below the tile (clamped)
    # scale/shift: (1, 1, C)     folded GroupNorm affine (per image)
    # w_ref:     (9, C, Cout)    conv taps, index = ky*3 + kx
    # b_ref:     (1, Cout)
    # out_ref:   (1, TH, W, Cout)
    i = pl.program_id(1)
    nt = pl.num_programs(1)
    _, th, w, c = x_ref.shape
    cout = out_ref.shape[-1]

    scale = scale_ref[...]
    shift = shift_ref[...]

    def norm_silu(v):
        t = v.astype(jnp.float32) * scale + shift       # folded GroupNorm
        return t * jax.nn.sigmoid(t)                    # SiLU

    y_cur = norm_silu(x_ref[0])                         # (TH, W, C)
    y_top = norm_silu(xprev_ref[0])                     # (1, W, C)
    y_bot = norm_silu(xnext_ref[0])                     # (1, W, C)

    # Halo rows outside the image contribute zero (conv zero padding).
    top = jnp.where(i == 0, jnp.zeros_like(y_top), y_top)
    bottom = jnp.where(i == nt - 1, jnp.zeros_like(y_bot), y_bot)

    y_pad = jnp.concatenate([top, y_cur, bottom], axis=0)       # (TH+2, W, C)

    # Column-shifted slabs built once: every tap is a leading-dim row slice.
    zcol = jnp.zeros_like(y_pad[:, :1, :])
    y_m1 = jnp.concatenate([zcol, y_pad[:, :w - 1, :]], axis=1)
    y_p1 = jnp.concatenate([y_pad[:, 1:, :], zcol], axis=1)
    slabs = (y_m1, y_pad, y_p1)                                  # dx = 0, 1, 2

    w_all = w_ref[...]                                           # (9, C, Cout)
    acc = jnp.zeros((th * w, cout), jnp.float32)
    for dy in range(3):
        for dx in range(3):
            lhs = slabs[dx][dy:dy + th].reshape(th * w, c)
            acc = acc + jnp.dot(lhs, w_all[dy * 3 + dx],
                                preferred_element_type=jnp.float32)
    acc = acc + b_ref[...]

    out_ref[0] = acc.reshape(th, w, cout).astype(out_ref.dtype)


def _two_pass_path(x, gamma, beta, w9, b2, groups, eps, block_h):
    N, H, W, C = x.shape
    Cout = w9.shape[-1]
    G = groups
    Cg = C // G

    if block_h is None:
        block_h = next((t for t in (32, 16, 8) if H % t == 0), H)
    TH = block_h
    assert H % TH == 0, (H, TH)
    NT = H // TH

    # ---- Pass 1: per-channel sums, row-tiled accumulation --------------------
    s1, s2 = pl.pallas_call(
        _gn_stats_kernel,
        out_shape=(jax.ShapeDtypeStruct((N, 1, C), jnp.float32),
                   jax.ShapeDtypeStruct((N, 1, C), jnp.float32)),
        grid_spec=pltpu.PrefetchScalarGridSpec(
            num_scalar_prefetch=0,
            grid=(N, NT),
            in_specs=[pl.BlockSpec((1, TH, W, C), lambda n, i: (n, i, 0, 0))],
            out_specs=[pl.BlockSpec((1, 1, C), lambda n, i: (n, 0, 0)),
                       pl.BlockSpec((1, 1, C), lambda n, i: (n, 0, 0))]),
        compiler_params=pltpu.CompilerParams(
            dimension_semantics=("parallel", "arbitrary"),
            vmem_limit_bytes=_TWO_PASS_VMEM_LIMIT),
    )(x)

    # ---- Group fold -> per-channel scale/shift (tiny, plain JAX) -------------
    cnt = jnp.float32(H * W * Cg)
    s1g = s1.reshape(N, G, Cg).sum(axis=-1)             # (N, G)
    s2g = s2.reshape(N, G, Cg).sum(axis=-1)
    mu_g = s1g / cnt
    var_g = s2g / cnt - mu_g * mu_g
    inv_g = jax.lax.rsqrt(var_g + jnp.float32(eps))
    mu_c = jnp.repeat(mu_g, Cg, axis=1)                 # (N, C)
    inv_c = jnp.repeat(inv_g, Cg, axis=1)
    g32 = gamma.astype(jnp.float32)[None, :]
    b32 = beta.astype(jnp.float32)[None, :]
    scale = (inv_c * g32).reshape(N, 1, C)
    shift = (b32 - mu_c * inv_c * g32).reshape(N, 1, C)

    # ---- Pass 2: normalize + SiLU + conv, row-tiled, fully parallel grid -----
    out = pl.pallas_call(
        _norm_silu_conv_kernel,
        out_shape=jax.ShapeDtypeStruct((N, H, W, Cout), x.dtype),
        grid_spec=pltpu.PrefetchScalarGridSpec(
            num_scalar_prefetch=0,
            grid=(N, NT),
            in_specs=[
                pl.BlockSpec((1, TH, W, C), lambda n, i: (n, i, 0, 0)),
                # 1-row halo above (block size 1 row -> block index == row idx)
                pl.BlockSpec((1, 1, W, C),
                             lambda n, i: (n, jnp.maximum(i * TH - 1, 0), 0, 0)),
                # 1-row halo below
                pl.BlockSpec((1, 1, W, C),
                             lambda n, i: (n, jnp.minimum((i + 1) * TH, H - 1),
                                           0, 0)),
                pl.BlockSpec((1, 1, C), lambda n, i: (n, 0, 0)),     # scale
                pl.BlockSpec((1, 1, C), lambda n, i: (n, 0, 0)),     # shift
                pl.BlockSpec((9, C, Cout), lambda n, i: (0, 0, 0)),  # weights
                pl.BlockSpec((1, Cout), lambda n, i: (0, 0)),        # bias
            ],
            out_specs=pl.BlockSpec((1, TH, W, Cout),
                                   lambda n, i: (n, i, 0, 0))),
        compiler_params=pltpu.CompilerParams(
            dimension_semantics=("parallel", "parallel"),
            vmem_limit_bytes=_TWO_PASS_VMEM_LIMIT),
    )(x, x, x, scale, shift, w9, b2)

    return out


# ----------------------------------------------------------------------------
# NHWC core (no layout transposes) + NCHW adapter
# ----------------------------------------------------------------------------
def unet_output_layer_nhwc(x, gamma, beta, conv_w, conv_b, *,
                           groups=32, eps=1e-5, block_h=None, force_path=None):
    """x: (N, H, W, C) NHWC. Returns (N, H, W, Cout) NHWC."""
    N, H, W, C = x.shape
    Cout = conv_w.shape[0]
    assert C % groups == 0, (C, groups)

    # conv weights: (Cout, Cin, 3, 3) -> (ky*3+kx, Cin, Cout)
    w9 = jnp.transpose(conv_w, (2, 3, 1, 0)).reshape(9, C, Cout).astype(jnp.float32)
    b2 = conv_b.reshape(1, Cout).astype(jnp.float32)

    if force_path is None:
        path = "fused" if _fused_vmem_estimate(x) <= _FUSED_VMEM_BUDGET else "two_pass"
    else:
        path = force_path

    if path == "fused":
        return _fused_path(x, gamma, beta, w9, b2, groups, eps)
    return _two_pass_path(x, gamma, beta, w9, b2, groups, eps, block_h)


def unet_output_layer(x_nchw, gamma, beta, conv_w, conv_b, *,
                      groups=32, eps=1e-5, block_h=None, force_path=None):
    """Pallas UNET_OutputLayer.forward. x_nchw: (N, C, H, W).

    The transposes are adapter glue only; an NHWC pipeline should call
    unet_output_layer_nhwc directly and skip them.
    """
    x = jnp.transpose(x_nchw, (0, 2, 3, 1))
    out = unet_output_layer_nhwc(x, gamma, beta, conv_w, conv_b, groups=groups,
                                 eps=eps, block_h=block_h, force_path=force_path)
    return jnp.transpose(out, (0, 3, 1, 2))


# ----------------------------------------------------------------------------
# Pure-JAX reference
# ----------------------------------------------------------------------------
def _reference(x, gamma, beta, conv_w, conv_b, groups=32, eps=1e-5):
    N, C, H, W = x.shape
    xg = x.reshape(N, groups, C // groups, H, W)
    mu = xg.mean(axis=(2, 3, 4), keepdims=True)
    var = xg.var(axis=(2, 3, 4), keepdims=True)
    xn = ((xg - mu) / jnp.sqrt(var + eps)).reshape(N, C, H, W)
    xn = xn * gamma[None, :, None, None] + beta[None, :, None, None]
    y = xn * jax.nn.sigmoid(xn)
    out = jax.lax.conv_general_dilated(
        y, conv_w, window_strides=(1, 1), padding=((1, 1), (1, 1)),
        dimension_numbers=("NCHW", "OIHW", "NCHW"))
    return out + conv_b[None, :, None, None]


if __name__ == "__main__":
    # GroupNorm(32, C) requires C % 32 == 0.
    N, C_in, C_out, H, W = 2, 64, 4, 16, 16

    key = jax.random.PRNGKey(0)
    kx, kg, kb, kw, kc = jax.random.split(key, 5)
    x = jax.random.normal(kx, (N, C_in, H, W), dtype=jnp.float32)
    gamma = 1.0 + 0.1 * jax.random.normal(kg, (C_in,), dtype=jnp.float32)
    beta = 0.1 * jax.random.normal(kb, (C_in,), dtype=jnp.float32)
    conv_w = 0.05 * jax.random.normal(kw, (C_out, C_in, 3, 3), dtype=jnp.float32)
    conv_b = 0.1 * jax.random.normal(kc, (C_out,), dtype=jnp.float32)

    ref = jax.block_until_ready(_reference(x, gamma, beta, conv_w, conv_b))

    # Fused single-pass path (auto-selected: the image is VMEM-resident).
    out_f = jax.block_until_ready(unet_output_layer(x, gamma, beta, conv_w, conv_b))
    assert out_f.shape == (N, C_out, H, W), out_f.shape
    err_f = float(jnp.max(jnp.abs(out_f - ref)))
    assert jnp.allclose(out_f, ref, atol=1e-3, rtol=1e-3), err_f

    # Two-pass streaming path (block_h=8 -> 2 row tiles: exercises the halos).
    out_t = jax.block_until_ready(
        unet_output_layer(x, gamma, beta, conv_w, conv_b,
                          force_path="two_pass", block_h=8))
    err_t = float(jnp.max(jnp.abs(out_t - ref)))
    assert jnp.allclose(out_t, ref, atol=1e-3, rtol=1e-3), err_t

    print("KERNEL_OK")
</pallas_src>

<mosaic_0001>
module attributes {stable_mosaic.version = 11 : i64} {
  func.func @_fused_gn_silu_conv_kernel(%arg0: i32, %arg1: memref<1x16x16x64xf32, #tpu.memory_space<vmem>>, %arg2: memref<1x64xf32, #tpu.memory_space<vmem>>, %arg3: memref<1x64xf32, #tpu.memory_space<vmem>>, %arg4: memref<64x32xf32, #tpu.memory_space<vmem>>, %arg5: memref<32x64xf32, #tpu.memory_space<vmem>>, %arg6: memref<9x64x4xf32, #tpu.memory_space<vmem>>, %arg7: memref<1x4xf32, #tpu.memory_space<vmem>>, %arg8: memref<1x16x16x4xf32, #tpu.memory_space<vmem>>, %arg9: memref<18x16x64xf32, #tpu.memory_space<vmem>>) attributes {dimension_semantics = [#tpu.dimension_semantics<parallel>], iteration_bounds = array<i64: 2>, scalar_prefetch = 0 : i64, scratch_operands = 1 : i64, tpu.core_type = #tpu.core_type<tc>, window_params = [{transform_indices = @transform_0, window_bounds = array<i64: 1, 16, 16, 64>}, {pipeline_mode = #tpu.pipeline_mode<synchronous>, transform_indices = @transform_1, window_bounds = array<i64: 1, 64>}, {pipeline_mode = #tpu.pipeline_mode<synchronous>, transform_indices = @transform_2, window_bounds = array<i64: 1, 64>}, {pipeline_mode = #tpu.pipeline_mode<synchronous>, transform_indices = @transform_3, window_bounds = array<i64: 64, 32>}, {pipeline_mode = #tpu.pipeline_mode<synchronous>, transform_indices = @transform_4, window_bounds = array<i64: 32, 64>}, {pipeline_mode = #tpu.pipeline_mode<synchronous>, transform_indices = @transform_5, window_bounds = array<i64: 9, 64, 4>}, {pipeline_mode = #tpu.pipeline_mode<synchronous>, transform_indices = @transform_6, window_bounds = array<i64: 1, 4>}, {transform_indices = @transform_7, window_bounds = array<i64: 1, 16, 16, 4>}]} {
    %c0 = arith.constant 0 : index
    %c0_0 = arith.constant 0 : index
    %c0_1 = arith.constant 0 : index
    %c0_2 = arith.constant 0 : index
    %0 = vector.load %arg1[%c0, %c0_0, %c0_1, %c0_2] : memref<1x16x16x64xf32, #tpu.memory_space<vmem>>, vector<1x16x16x64xf32>
    %1 = vector.shape_cast %0 : vector<1x16x16x64xf32> to vector<16x16x64xf32>
    %2 = vector.shape_cast %1 : vector<16x16x64xf32> to vector<256x64xf32>
    %cst = arith.constant dense<0.000000e+00> : vector<64xf32>
    %3 = vector.multi_reduction <add>, %2, %cst [0] : vector<256x64xf32> to vector<64xf32>
    %4 = vector.shape_cast %3 : vector<64xf32> to vector<1x64xf32>
    %5 = arith.mulf %2, %2 : vector<256x64xf32>
    %cst_3 = arith.constant dense<0.000000e+00> : vector<64xf32>
    %6 = vector.multi_reduction <add>, %5, %cst_3 [0] : vector<256x64xf32> to vector<64xf32>
    %7 = vector.shape_cast %6 : vector<64xf32> to vector<1x64xf32>
    %c0_4 = arith.constant 0 : index
    %c0_5 = arith.constant 0 : index
    %8 = vector.load %arg4[%c0_4, %c0_5] : memref<64x32xf32, #tpu.memory_space<vmem>>, vector<64x32xf32>
    %c0_6 = arith.constant 0 : index
    %c0_7 = arith.constant 0 : index
    %9 = vector.load %arg5[%c0_6, %c0_7] : memref<32x64xf32, #tpu.memory_space<vmem>>, vector<32x64xf32>
    %cst_8 = arith.constant dense<0.000000e+00> : vector<1x32xf32>
    %10 = tpu.matmul %4, %8, %cst_8 {dimension_numbers = #tpu.dot_dimension_numbers<[1], [0], [0], [1], [0, 0, 1, 1], [], []>} : vector<1x64xf32>, vector<64x32xf32>, vector<1x32xf32> -> vector<1x32xf32>
    %cst_9 = arith.constant dense<0.000000e+00> : vector<1x32xf32>
    %11 = tpu.matmul %7, %8, %cst_9 {dimension_numbers = #tpu.dot_dimension_numbers<[1], [0], [0], [1], [0, 0, 1, 1], [], []>} : vector<1x64xf32>, vector<64x32xf32>, vector<1x32xf32> -> vector<1x32xf32>
    %cst_10 = arith.constant 5.120000e+02 : f32
    %12 = vector.broadcast %cst_10 : f32 to vector<1x32xf32>
    %13 = arith.divf %10, %12 : vector<1x32xf32>
    %cst_11 = arith.constant 5.120000e+02 : f32
    %14 = vector.broadcast %cst_11 : f32 to vector<1x32xf32>
    %15 = arith.divf %11, %14 : vector<1x32xf32>
    %16 = arith.mulf %13, %13 : vector<1x32xf32>
    %17 = arith.subf %15, %16 : vector<1x32xf32>
    %cst_12 = arith.constant 9.99999974E-6 : f32
    %18 = vector.broadcast %cst_12 : f32 to vector<1x32xf32>
    %19 = arith.addf %17, %18 : vector<1x32xf32>
    %20 = math.rsqrt %19 : vector<1x32xf32>
    %cst_13 = arith.constant dense<0.000000e+00> : vector<1x64xf32>
    %21 = tpu.matmul %13, %9, %cst_13 {dimension_numbers = #tpu.dot_dimension_numbers<[1], [0], [0], [1], [0, 0, 1, 1], [], []>} : vector<1x32xf32>, vector<32x64xf32>, vector<1x64xf32> -> vector<1x64xf32>
    %cst_14 = arith.constant dense<0.000000e+00> : vector<1x64xf32>
    %22 = tpu.matmul %20, %9, %cst_14 {dimension_numbers = #tpu.dot_dimension_numbers<[1], [0], [0], [1], [0, 0, 1, 1], [], []>} : vector<1x32xf32>, vector<32x64xf32>, vector<1x64xf32> -> vector<1x64xf32>
    %c0_15 = arith.constant 0 : index
    %c0_16 = arith.constant 0 : index
    %23 = vector.load %arg2[%c0_15, %c0_16] : memref<1x64xf32, #tpu.memory_space<vmem>>, vector<1x64xf32>
    %24 = arith.mulf %22, %23 : vector<1x64xf32>
    %c0_17 = arith.constant 0 : index
    %c0_18 = arith.constant 0 : index
    %25 = vector.load %arg3[%c0_17, %c0_18] : memref<1x64xf32, #tpu.memory_space<vmem>>, vector<1x64xf32>
    %26 = arith.mulf %21, %24 : vector<1x64xf32>
    %27 = arith.subf %25, %26 : vector<1x64xf32>
    %28 = vector.broadcast %24 : vector<1x64xf32> to vector<256x64xf32>
    %29 = arith.mulf %2, %28 : vector<256x64xf32>
    %30 = vector.broadcast %27 : vector<1x64xf32> to vector<256x64xf32>
    %31 = arith.addf %29, %30 : vector<256x64xf32>
    %32 = arith.negf %31 : vector<256x64xf32>
    %33 = math.exp %32 : vector<256x64xf32>
    %cst_19 = arith.constant 1.000000e+00 : f32
    %34 = vector.broadcast %cst_19 : f32 to vector<256x64xf32>
    %35 = arith.addf %34, %33 : vector<256x64xf32>
    %36 = arith.divf %34, %35 : vector<256x64xf32>
    %37 = arith.mulf %31, %36 : vector<256x64xf32>
    %cst_20 = arith.constant 0.000000e+00 : f32
    %38 = vector.broadcast %cst_20 : f32 to vector<16x64xf32>
    %c0_21 = arith.constant 0 : index
    %c0_22 = arith.constant 0 : index
    %c0_23 = arith.constant 0 : index
    %39 = vector.load %arg9[%c0_21, %c0_22, %c0_23] : memref<18x16x64xf32, #tpu.memory_space<vmem>>, vector<1x16x64xf32>
    %40 = vector.shape_cast %39 : vector<1x16x64xf32> to vector<16x64xf32>
    %41 = vector.shape_cast %38 : vector<16x64xf32> to vector<1x16x64xf32>
    tpu.vector_store %arg9[%c0_21, %c0_22, %c0_23], %41 {strides = array<i32>} : memref<18x16x64xf32, #tpu.memory_space<vmem>>, vector<1x16x64xf32>,
    %cst_24 = arith.constant 0.000000e+00 : f32
    %42 = vector.broadcast %cst_24 : f32 to vector<16x64xf32>
    %c17 = arith.constant 17 : index
    %c0_25 = arith.constant 0 : index
    %c0_26 = arith.constant 0 : index
    %43 = vector.load %arg9[%c17, %c0_25, %c0_26] : memref<18x16x64xf32, #tpu.memory_space<vmem>>, vector<1x16x64xf32>
    %44 = vector.shape_cast %43 : vector<1x16x64xf32> to vector<16x64xf32>
    %45 = vector.shape_cast %42 : vector<16x64xf32> to vector<1x16x64xf32>
    tpu.vector_store %arg9[%c17, %c0_25, %c0_26], %45 {strides = array<i32>} : memref<18x16x64xf32, #tpu.memory_space<vmem>>, vector<1x16x64xf32>,
    %46 = vector.shape_cast %37 : vector<256x64xf32> to vector<16x16x64xf32>
    %c1 = arith.constant 1 : index
    %c0_27 = arith.constant 0 : index
    %c0_28 = arith.constant 0 : index
    %47 = vector.load %arg9[%c1, %c0_27, %c0_28] : memref<18x16x64xf32, #tpu.memory_space<vmem>>, vector<16x16x64xf32>
    tpu.vector_store %arg9[%c1, %c0_27, %c0_28], %46 {strides = array<i32>} : memref<18x16x64xf32, #tpu.memory_space<vmem>>, vector<16x16x64xf32>,
    %c0_29 = arith.constant 0 : index
    %c0_30 = arith.constant 0 : index
    %c0_31 = arith.constant 0 : index
    %48 = vector.load %arg6[%c0_29, %c0_30, %c0_31] : memref<9x64x4xf32, #tpu.memory_space<vmem>>, vector<9x64x4xf32>
    %c0_32 = arith.constant 0 : index
    %c0_33 = arith.constant 0 : index
    %49 = vector.load %arg7[%c0_32, %c0_33] : memref<1x4xf32, #tpu.memory_space<vmem>>, vector<1x4xf32>
    %c0_i32 = arith.constant 0 : i32
    %c1_i32 = arith.constant 1 : i32
    %50 = arith.muli %c0_i32, %c1_i32 : i32
    %c0_i32_34 = arith.constant 0 : i32
    %51 = arith.addi %c0_i32_34, %50 : i32
    %c16_i32 = arith.constant 16 : i32
    %52 = arith.muli %51, %c16_i32 : i32
    %53 = tpu.assume_multiple %52, 16 : i32
    %54 = arith.index_cast %53 : i32 to index
    %c0_35 = arith.constant 0 : index
    %c0_36 = arith.constant 0 : index
    %55 = vector.load %arg9[%54, %c0_35, %c0_36] : memref<18x16x64xf32, #tpu.memory_space<vmem>>, vector<18x16x64xf32>
    %cst_37 = arith.constant 0.000000e+00 : f32
    %56 = vector.broadcast %cst_37 : f32 to vector<18x1x64xf32>
    %57 = vector.extract_strided_slice %55 {offsets = [0, 0, 0], sizes = [18, 15, 64], strides = [1, 1, 1]} : vector<18x16x64xf32> to vector<18x15x64xf32>
    %58 = tpu.concatenate %56, %57 in 1 : vector<18x1x64xf32>, vector<18x15x64xf32> -> vector<18x16x64xf32>
    %59 = vector.extract_strided_slice %55 {offsets = [0, 1, 0], sizes = [18, 15, 64], strides = [1, 1, 1]} : vector<18x16x64xf32> to vector<18x15x64xf32>
    %60 = tpu.concatenate %59, %56 in 1 : vector<18x15x64xf32>, vector<18x1x64xf32> -> vector<18x16x64xf32>
    %cst_38 = arith.constant 0.000000e+00 : f32
    %61 = vector.broadcast %cst_38 : f32 to vector<256x4xf32>
    %62 = vector.extract_strided_slice %58 {offsets = [0, 0, 0], sizes = [16, 16, 64], strides = [1, 1, 1]} : vector<18x16x64xf32> to vector<16x16x64xf32>
    %63 = vector.shape_cast %62 : vector<16x16x64xf32> to vector<256x64xf32>
    %64 = vector.extract_strided_slice %48 {offsets = [0, 0, 0], sizes = [1, 64, 4], strides = [1, 1, 1]} : vector<9x64x4xf32> to vector<1x64x4xf32>
    %65 = vector.shape_cast %64 : vector<1x64x4xf32> to vector<64x4xf32>
    %cst_39 = arith.constant dense<0.000000e+00> : vector<256x4xf32>
    %66 = tpu.matmul %63, %65, %cst_39 {dimension_numbers = #tpu.dot_dimension_numbers<[1], [0], [0], [1], [0, 0, 1, 1], [], []>} : vector<256x64xf32>, vector<64x4xf32>, vector<256x4xf32> -> vector<256x4xf32>
    %67 = arith.addf %61, %66 : vector<256x4xf32>
    %68 = vector.extract_strided_slice %55 {offsets = [0, 0, 0], sizes = [16, 16, 64], strides = [1, 1, 1]} : vector<18x16x64xf32> to vector<16x16x64xf32>
    %69 = vector.shape_cast %68 : vector<16x16x64xf32> to vector<256x64xf32>
    %70 = vector.extract_strided_slice %48 {offsets = [1, 0, 0], sizes = [1, 64, 4], strides = [1, 1, 1]} : vector<9x64x4xf32> to vector<1x64x4xf32>
    %71 = vector.shape_cast %70 : vector<1x64x4xf32> to vector<64x4xf32>
    %cst_40 = arith.constant dense<0.000000e+00> : vector<256x4xf32>
    %72 = tpu.matmul %69, %71, %cst_40 {dimension_numbers = #tpu.dot_dimension_numbers<[1], [0], [0], [1], [0, 0, 1, 1], [], []>} : vector<256x64xf32>, vector<64x4xf32>, vector<256x4xf32> -> vector<256x4xf32>
    %73 = arith.addf %67, %72 : vector<256x4xf32>
    %74 = vector.extract_strided_slice %60 {offsets = [0, 0, 0], sizes = [16, 16, 64], strides = [1, 1, 1]} : vector<18x16x64xf32> to vector<16x16x64xf32>
    %75 = vector.shape_cast %74 : vector<16x16x64xf32> to vector<256x64xf32>
    %76 = vector.extract_strided_slice %48 {offsets = [2, 0, 0], sizes = [1, 64, 4], strides = [1, 1, 1]} : vector<9x64x4xf32> to vector<1x64x4xf32>
    %77 = vector.shape_cast %76 : vector<1x64x4xf32> to vector<64x4xf32>
    %cst_41 = arith.constant dense<0.000000e+00> : vector<256x4xf32>
    %78 = tpu.matmul %75, %77, %cst_41 {dimension_numbers = #tpu.dot_dimension_numbers<[1], [0], [0], [1], [0, 0, 1, 1], [], []>} : vector<256x64xf32>, vector<64x4xf32>, vector<256x4xf32> -> vector<256x4xf32>
    %79 = arith.addf %73, %78 : vector<256x4xf32>
    %80 = vector.extract_strided_slice %58 {offsets = [1, 0, 0], sizes = [16, 16, 64], strides = [1, 1, 1]} : vector<18x16x64xf32> to vector<16x16x64xf32>
    %81 = vector.shape_cast %80 : vector<16x16x64xf32> to vector<256x64xf32>
    %82 = vector.extract_strided_slice %48 {offsets = [3, 0, 0], sizes = [1, 64, 4], strides = [1, 1, 1]} : vector<9x64x4xf32> to vector<1x64x4xf32>
    %83 = vector.shape_cast %82 : vector<1x64x4xf32> to vector<64x4xf32>
    %cst_42 = arith.constant dense<0.000000e+00> : vector<256x4xf32>
    %84 = tpu.matmul %81, %83, %cst_42 {dimension_numbers = #tpu.dot_dimension_numbers<[1], [0], [0], [1], [0, 0, 1, 1], [], []>} : vector<256x64xf32>, vector<64x4xf32>, vector<256x4xf32> -> vector<256x4xf32>
    %85 = arith.addf %79, %84 : vector<256x4xf32>
    %86 = vector.extract_strided_slice %55 {offsets = [1, 0, 0], sizes = [16, 16, 64], strides = [1, 1, 1]} : vector<18x16x64xf32> to vector<16x16x64xf32>
    %87 = vector.shape_cast %86 : vector<16x16x64xf32> to vector<256x64xf32>
    %88 = vector.extract_strided_slice %48 {offsets = [4, 0, 0], sizes = [1, 64, 4], strides = [1, 1, 1]} : vector<9x64x4xf32> to vector<1x64x4xf32>
    %89 = vector.shape_cast %88 : vector<1x64x4xf32> to vector<64x4xf32>
    %cst_43 = arith.constant dense<0.000000e+00> : vector<256x4xf32>
    %90 = tpu.matmul %87, %89, %cst_43 {dimension_numbers = #tpu.dot_dimension_numbers<[1], [0], [0], [1], [0, 0, 1, 1], [], []>} : vector<256x64xf32>, vector<64x4xf32>, vector<256x4xf32> -> vector<256x4xf32>
    %91 = arith.addf %85, %90 : vector<256x4xf32>
    %92 = vector.extract_strided_slice %60 {offsets = [1, 0, 0], sizes = [16, 16, 64], strides = [1, 1, 1]} : vector<18x16x64xf32> to vector<16x16x64xf32>
    %93 = vector.shape_cast %92 : vector<16x16x64xf32> to vector<256x64xf32>
    %94 = vector.extract_strided_slice %48 {offsets = [5, 0, 0], sizes = [1, 64, 4], strides = [1, 1, 1]} : vector<9x64x4xf32> to vector<1x64x4xf32>
    %95 = vector.shape_cast %94 : vector<1x64x4xf32> to vector<64x4xf32>
    %cst_44 = arith.constant dense<0.000000e+00> : vector<256x4xf32>
    %96 = tpu.matmul %93, %95, %cst_44 {dimension_numbers = #tpu.dot_dimension_numbers<[1], [0], [0], [1], [0, 0, 1, 1], [], []>} : vector<256x64xf32>, vector<64x4xf32>, vector<256x4xf32> -> vector<256x4xf32>
    %97 = arith.addf %91, %96 : vector<256x4xf32>
    %98 = vector.extract_strided_slice %58 {offsets = [2, 0, 0], sizes = [16, 16, 64], strides = [1, 1, 1]} : vector<18x16x64xf32> to vector<16x16x64xf32>
    %99 = vector.shape_cast %98 : vector<16x16x64xf32> to vector<256x64xf32>
    %100 = vector.extract_strided_slice %48 {offsets = [6, 0, 0], sizes = [1, 64, 4], strides = [1, 1, 1]} : vector<9x64x4xf32> to vector<1x64x4xf32>
    %101 = vector.shape_cast %100 : vector<1x64x4xf32> to vector<64x4xf32>
    %cst_45 = arith.constant dense<0.000000e+00> : vector<256x4xf32>
    %102 = tpu.matmul %99, %101, %cst_45 {dimension_numbers = #tpu.dot_dimension_numbers<[1], [0], [0], [1], [0, 0, 1, 1], [], []>} : vector<256x64xf32>, vector<64x4xf32>, vector<256x4xf32> -> vector<256x4xf32>
    %103 = arith.addf %97, %102 : vector<256x4xf32>
    %104 = vector.extract_strided_slice %55 {offsets = [2, 0, 0], sizes = [16, 16, 64], strides = [1, 1, 1]} : vector<18x16x64xf32> to vector<16x16x64xf32>
    %105 = vector.shape_cast %104 : vector<16x16x64xf32> to vector<256x64xf32>
    %106 = vector.extract_strided_slice %48 {offsets = [7, 0, 0], sizes = [1, 64, 4], strides = [1, 1, 1]} : vector<9x64x4xf32> to vector<1x64x4xf32>
    %107 = vector.shape_cast %106 : vector<1x64x4xf32> to vector<64x4xf32>
    %cst_46 = arith.constant dense<0.000000e+00> : vector<256x4xf32>
    %108 = tpu.matmul %105, %107, %cst_46 {dimension_numbers = #tpu.dot_dimension_numbers<[1], [0], [0], [1], [0, 0, 1, 1], [], []>} : vector<256x64xf32>, vector<64x4xf32>, vector<256x4xf32> -> vector<256x4xf32>
    %109 = arith.addf %103, %108 : vector<256x4xf32>
    %110 = vector.extract_strided_slice %60 {offsets = [2, 0, 0], sizes = [16, 16, 64], strides = [1, 1, 1]} : vector<18x16x64xf32> to vector<16x16x64xf32>
    %111 = vector.shape_cast %110 : vector<16x16x64xf32> to vector<256x64xf32>
    %112 = vector.extract_strided_slice %48 {offsets = [8, 0, 0], sizes = [1, 64, 4], strides = [1, 1, 1]} : vector<9x64x4xf32> to vector<1x64x4xf32>
    %113 = vector.shape_cast %112 : vector<1x64x4xf32> to vector<64x4xf32>
    %cst_47 = arith.constant dense<0.000000e+00> : vector<256x4xf32>
    %114 = tpu.matmul %111, %113, %cst_47 {dimension_numbers = #tpu.dot_dimension_numbers<[1], [0], [0], [1], [0, 0, 1, 1], [], []>} : vector<256x64xf32>, vector<64x4xf32>, vector<256x4xf32> -> vector<256x4xf32>
    %115 = arith.addf %109, %114 : vector<256x4xf32>
    %116 = vector.broadcast %49 : vector<1x4xf32> to vector<256x4xf32>
    %117 = arith.addf %115, %116 : vector<256x4xf32>
    %118 = vector.shape_cast %117 : vector<256x4xf32> to vector<16x16x4xf32>
    %c0_48 = arith.constant 0 : index
    %119 = arith.index_cast %53 : i32 to index
    %c0_49 = arith.constant 0 : index
    %c0_50 = arith.constant 0 : index
    %120 = vector.load %arg8[%c0_48, %119, %c0_49, %c0_50] : memref<1x16x16x4xf32, #tpu.memory_space<vmem>>, vector<1x16x16x4xf32>
    %121 = vector.shape_cast %120 : vector<1x16x16x4xf32> to vector<16x16x4xf32>
    %122 = vector.shape_cast %118 : vector<16x16x4xf32> to vector<1x16x16x4xf32>
    tpu.vector_store %arg8[%c0_48, %119, %c0_49, %c0_50], %122 {strides = array<i32>} : memref<1x16x16x4xf32, #tpu.memory_space<vmem>>, vector<1x16x16x4xf32>,
    %c1_i32_51 = arith.constant 1 : i32
    return
  }
  func.func @transform_0(%arg0: i32) -> (i32, i32, i32, i32) {
    %c0_i32 = arith.constant 0 : i32
    %c0_i32_0 = arith.constant 0 : i32
    %c0_i32_1 = arith.constant 0 : i32
    %c0_i32_2 = arith.constant 0 : i32
    return %arg0, %c0_i32, %c0_i32_0, %c0_i32_1 : i32, i32, i32, i32
  }
  func.func @transform_1(%arg0: i32) -> (i32, i32) {
    %c0_i32 = arith.constant 0 : i32
    %c0_i32_0 = arith.constant 0 : i32
    %c0_i32_1 = arith.constant 0 : i32
    return %c0_i32, %c0_i32_0 : i32, i32
  }
  func.func @transform_2(%arg0: i32) -> (i32, i32) {
    %c0_i32 = arith.constant 0 : i32
    %c0_i32_0 = arith.constant 0 : i32
    %c0_i32_1 = arith.constant 0 : i32
    return %c0_i32, %c0_i32_0 : i32, i32
  }
  func.func @transform_3(%arg0: i32) -> (i32, i32) {
    %c0_i32 = arith.constant 0 : i32
    %c0_i32_0 = arith.constant 0 : i32
    %c0_i32_1 = arith.constant 0 : i32
    return %c0_i32, %c0_i32_0 : i32, i32
  }
  func.func @transform_4(%arg0: i32) -> (i32, i32) {
    %c0_i32 = arith.constant 0 : i32
    %c0_i32_0 = arith.constant 0 : i32
    %c0_i32_1 = arith.constant 0 : i32
    return %c0_i32, %c0_i32_0 : i32, i32
  }
  func.func @transform_5(%arg0: i32) -> (i32, i32, i32) {
    %c0_i32 = arith.constant 0 : i32
    %c0_i32_0 = arith.constant 0 : i32
    %c0_i32_1 = arith.constant 0 : i32
    %c0_i32_2 = arith.constant 0 : i32
    return %c0_i32, %c0_i32_0, %c0_i32_1 : i32, i32, i32
  }
  func.func @transform_6(%arg0: i32) -> (i32, i32) {
    %c0_i32 = arith.constant 0 : i32
    %c0_i32_0 = arith.constant 0 : i32
    %c0_i32_1 = arith.constant 0 : i32
    return %c0_i32, %c0_i32_0 : i32, i32
  }
  func.func @transform_7(%arg0: i32) -> (i32, i32, i32, i32) {
    %c0_i32 = arith.constant 0 : i32
    %c0_i32_0 = arith.constant 0 : i32
    %c0_i32_1 = arith.constant 0 : i32
    %c0_i32_2 = arith.constant 0 : i32
    return %arg0, %c0_i32, %c0_i32_0, %c0_i32_1 : i32, i32, i32, i32
  }
}

</mosaic_0001>

<llo_original>
// kernel: tpu_custom_call.1
$region0: #{tpu_custom_call.1}
  #allocation0 [shape = 'u32[]', space=smem, size = 0x4, offset = 0x4, fixed_abs, tag = 'smem constant byte address 0x4 - core index']
  #allocation1 [shape = 'u32[72,128]{1,0:T(1,128)}', space=vmem, size = 0x9000, scoped, tag = 'internal scratch']
  #allocation2 [shape = 'f32[18,16,64]{2,1,0:T(8,128)}', space=vmem, size = 0x24000, scoped, tag = 'scratch operand']
  %s0 = inlined_call_operand.vmem [shape: f32[2,16,16,64], index: 0, kind: input, shape index: {}]
  %s1 = inlined_call_operand.vmem [shape: f32[1,64], index: 1, kind: input, shape index: {}]
  %s2 = inlined_call_operand.vmem [shape: f32[1,64], index: 2, kind: input, shape index: {}]
  %s3 = inlined_call_operand.vmem [shape: f32[64,32], index: 3, kind: input, shape index: {}]
  %s4 = inlined_call_operand.vmem [shape: f32[32,64], index: 4, kind: input, shape index: {}]
  %s5 = inlined_call_operand.vmem [shape: f32[9,64,4], index: 5, kind: input, shape index: {}]
  %s6 = inlined_call_operand.vmem [shape: f32[1,4], index: 6, kind: input, shape index: {}]
  %s7 = inlined_call_operand.vmem [shape: f32[2,16,16,4], index: 7, kind: output, shape index: {}]
  %s8 = sld [smem:[#allocation0]]
  $region61: #{tpu_custom_call.1} parent=0
    _
  %s10 = ssub.s32 1, %s8
  %s11 = scalar_select 0, %s10, %s8
  loop: start=0, step=1, limit=4
  $region2: #{tpu_custom_call.1} parent=0 // loop_pre_header
    _
  $region3: #{tpu_custom_call.1} parent=0 // loop_header
    %s13 = sphi 0, %s17
    %p14 = scmp.ge.s32.totalorder %s13, 4
    %s23 = sphi 0, %s25
    %s26 = sphi 0, %s23
    %s27 = sphi 0, %s26
    %s43 = sphi 0, %s27
    %s47 = sphi 0, %s47
    %s49 = sphi 0, %s47
    %s50 = sphi 0, %s49
    %s64 = sphi 0, %s50
    %s68 = sphi 0, %s68
    %s70 = sphi 0, %s68
    %s71 = sphi 0, %s70
    %s85 = sphi 0, %s71
    %s89 = sphi 0, %s89
    %s91 = sphi 0, %s89
    %s92 = sphi 0, %s91
    %s106 = sphi 0, %s92
    %s110 = sphi 0, %s110
    %s112 = sphi 0, %s110
    %s113 = sphi 0, %s112
    %s127 = sphi 0, %s113
    %s131 = sphi 0, %s131
    %s133 = sphi 0, %s131
    %s134 = sphi 0, %s133
    %s148 = sphi 0, %s134
    %s152 = sphi 0, %s152
    %s154 = sphi 0, %s152
    %s155 = sphi 0, %s154
    %s169 = sphi 0, %s155
    %s175 = sphi 0, %s177
    %s178 = sphi 0, %s175
    %s179 = sphi 0, %s178
    %s195 = sphi 0, %s179
  $region4: #{tpu_custom_call.1} parent=0 // loop_header_branch
    %16 = sbr.rel (%p14) target = $region8
  $region5: #{tpu_custom_call.1} parent=0 // loop_body
    %s18 = ssub.s32 %s13, 1
    %s19 = ssub.s32 %s13, 2
    %s20 = sadd.s32 %s13, 1
    %s21 = ssub.s32 %s13, %s20
    %p22 = scmp.eq.s32.totalorder %s21, 0
    %s24 = sadd.s32 %s23, 1
    %s25 = scalar_select %p22, %s23, %s24
    %p28 = pneg %p22
    %p29 = scmp.eq.s32.totalorder %s13, 1
    %p30 = por %p28, %p29
    %p31 = scmp.ne.s32.totalorder %s23, %s26
    %p32 = scmp.eq.s32.totalorder %s13, 0
    %p33 = por %p31, %p32
    %p34 = scmp.ne.s32.totalorder %s23, %s26
    %p35 = scmp.eq.s32.totalorder %s18, 1
    %p36 = por %p34, %p35
    %p37 = scmp.ne.s32.totalorder %s26, %s27
    %p38 = scmp.eq.s32.totalorder %s18, 0
    %p39 = por %p37, %p38
    %p40 = scmp.ne.s32.totalorder %s26, %s27
    %p41 = scmp.eq.s32.totalorder %s19, 1
    %p42 = por %p40, %p41
    %p44 = scmp.ne.s32.totalorder %s27, %s43
    %p45 = scmp.eq.s32.totalorder %s19, 0
    %p46 = por %p44, %p45
    %s48 = sadd.s32 %s47, 1
    %p51 = scmp.eq.s32.totalorder %s13, 1
    %p52 = scmp.ne.s32.totalorder %s47, %s49
    %p53 = scmp.eq.s32.totalorder %s13, 0
    %p54 = por %p52, %p53
    %p55 = scmp.ne.s32.totalorder %s47, %s49
    %p56 = scmp.eq.s32.totalorder %s18, 1
    %p57 = por %p55, %p56
    %p58 = scmp.ne.s32.totalorder %s49, %s50
    %p59 = scmp.eq.s32.totalorder %s18, 0
    %p60 = por %p58, %p59
    %p61 = scmp.ne.s32.totalorder %s49, %s50
    %p62 = scmp.eq.s32.totalorder %s19, 1
    %p63 = por %p61, %p62
    %p65 = scmp.ne.s32.totalorder %s50, %s64
    %p66 = scmp.eq.s32.totalorder %s19, 0
    %p67 = por %p65, %p66
    %s69 = sadd.s32 %s68, 1
    %p72 = scmp.eq.s32.totalorder %s13, 1
    %p73 = scmp.ne.s32.totalorder %s68, %s70
    %p74 = scmp.eq.s32.totalorder %s13, 0
    %p75 = por %p73, %p74
    %p76 = scmp.ne.s32.totalorder %s68, %s70
    %p77 = scmp.eq.s32.totalorder %s18, 1
    %p78 = por %p76, %p77
    %p79 = scmp.ne.s32.totalorder %s70, %s71
    %p80 = scmp.eq.s32.totalorder %s18, 0
    %p81 = por %p79, %p80
    %p82 = scmp.ne.s32.totalorder %s70, %s71
    %p83 = scmp.eq.s32.totalorder %s19, 1
    %p84 = por %p82, %p83
    %p86 = scmp.ne.s32.totalorder %s71, %s85
    %p87 = scmp.eq.s32.totalorder %s19, 0
    %p88 = por %p86, %p87
    %s90 = sadd.s32 %s89, 1
    %p93 = scmp.eq.s32.totalorder %s13, 1
    %p94 = scmp.ne.s32.totalorder %s89, %s91
    %p95 = scmp.eq.s32.totalorder %s13, 0
    %p96 = por %p94, %p95
    %p97 = scmp.ne.s32.totalorder %s89, %s91
    %p98 = scmp.eq.s32.totalorder %s18, 1
    %p99 = por %p97, %p98
    %p100 = scmp.ne.s32.totalorder %s91, %s92
    %p101 = scmp.eq.s32.totalorder %s18, 0
    %p102 = por %p100, %p101
    %p103 = scmp.ne.s32.totalorder %s91, %s92
    %p104 = scmp.eq.s32.totalorder %s19, 1
    %p105 = por %p103, %p104
    %p107 = scmp.ne.s32.totalorder %s92, %s106
    %p108 = scmp.eq.s32.totalorder %s19, 0
    %p109 = por %p107, %p108
    %s111 = sadd.s32 %s110, 1
    %p114 = scmp.eq.s32.totalorder %s13, 1
    %p115 = scmp.ne.s32.totalorder %s110, %s112
    %p116 = scmp.eq.s32.totalorder %s13, 0
    %p117 = por %p115, %p116
    %p118 = scmp.ne.s32.totalorder %s110, %s112
    %p119 = scmp.eq.s32.totalorder %s18, 1
    %p120 = por %p118, %p119
    %p121 = scmp.ne.s32.totalorder %s112, %s113
    %p122 = scmp.eq.s32.totalorder %s18, 0
    %p123 = por %p121, %p122
    %p124 = scmp.ne.s32.totalorder %s112, %s113
    %p125 = scmp.eq.s32.totalorder %s19, 1
    %p126 = por %p124, %p125
    %p128 = scmp.ne.s32.totalorder %s113, %s127
    %p129 = scmp.eq.s32.totalorder %s19, 0
    %p130 = por %p128, %p129
    %s132 = sadd.s32 %s131, 1
    %p135 = scmp.eq.s32.totalorder %s13, 1
    %p136 = scmp.ne.s32.totalorder %s131, %s133
    %p137 = scmp.eq.s32.totalorder %s13, 0
    %p138 = por %p136, %p137
    %p139 = scmp.ne.s32.totalorder %s131, %s133
    %p140 = scmp.eq.s32.totalorder %s18, 1
    %p141 = por %p139, %p140
    %p142 = scmp.ne.s32.totalorder %s133, %s134
    %p143 = scmp.eq.s32.totalorder %s18, 0
    %p144 = por %p142, %p143
    %p145 = scmp.ne.s32.totalorder %s133, %s134
    %p146 = scmp.eq.s32.totalorder %s19, 1
    %p147 = por %p145, %p146
    %p149 = scmp.ne.s32.totalorder %s134, %s148
    %p150 = scmp.eq.s32.totalorder %s19, 0
    %p151 = por %p149, %p150
    %s153 = sadd.s32 %s152, 1
    %p156 = scmp.eq.s32.totalorder %s13, 1
    %p157 = scmp.ne.s32.totalorder %s152, %s154
    %p158 = scmp.eq.s32.totalorder %s13, 0
    %p159 = por %p157, %p158
    %p160 = scmp.ne.s32.totalorder %s152, %s154
    %p161 = scmp.eq.s32.totalorder %s18, 1
    %p162 = por %p160, %p161
    %p163 = scmp.ne.s32.totalorder %s154, %s155
    %p164 = scmp.eq.s32.totalorder %s18, 0
    %p165 = por %p163, %p164
    %p166 = scmp.ne.s32.totalorder %s154, %s155
    %p167 = scmp.eq.s32.totalorder %s19, 1
    %p168 = por %p166, %p167
    %p170 = scmp.ne.s32.totalorder %s155, %s169
    %p171 = scmp.eq.s32.totalorder %s19, 0
    %p172 = por %p170, %p171
    %s173 = ssub.s32 %s13, %s20
    %p174 = scmp.eq.s32.totalorder %s173, 0
    %s176 = sadd.s32 %s175, 1
    %s177 = scalar_select %p174, %s175, %s176
    %p180 = pneg %p174
    %p181 = scmp.eq.s32.totalorder %s13, 1
    %p182 = por %p180, %p181
    %p183 = scmp.ne.s32.totalorder %s175, %s178
    %p184 = scmp.eq.s32.totalorder %s13, 0
    %p185 = por %p183, %p184
    %p186 = scmp.ne.s32.totalorder %s175, %s178
    %p187 = scmp.eq.s32.totalorder %s18, 1
    %p188 = por %p186, %p187
    %p189 = scmp.ne.s32.totalorder %s178, %s179
    %p190 = scmp.eq.s32.totalorder %s18, 0
    %p191 = por %p189, %p190
    %p192 = scmp.ne.s32.totalorder %s178, %s179
    %p193 = scmp.eq.s32.totalorder %s19, 1
    %p194 = por %p192, %p193
    %p196 = scmp.ne.s32.totalorder %s179, %s195
    %p197 = scmp.eq.s32.totalorder %s19, 0
    %p198 = por %p196, %p197
    %p199 = scmp.le.s32.totalorder 1, %s13
    %p200 = scmp.lt.s32.totalorder %s13, 3
    %p201 = pnand %p199, %p200
    %p202 = pneg %p201
    // Predicated region
    $region9: #{tpu_custom_call.1} parent=5 // pred_check
      _
    $region10: #{tpu_custom_call.1} parent=5 // pred_check_branch
      %204 = sbr.rel (%p201) target = $region12
    $region11: #{tpu_custom_call.1} parent=5 // pred_region
      %s205 = ssub.s32 %s13, 1
      // Predicated region
      $region13: #{tpu_custom_call.1} parent=11 // pred_check
        %p206 = pneg %p60
      $region14: #{tpu_custom_call.1} parent=11 // pred_check_branch
        %208 = sbr.rel (%p206) target = $region16
      $region15: #{tpu_custom_call.1} parent=11 // pred_region
        _
      $region16: #{tpu_custom_call.1} parent=11 // pred_fallthru
        _
      // Predicated region
      $region17: #{tpu_custom_call.1} parent=11 // pred_check
        %p209 = pneg %p81
      $region18: #{tpu_custom_call.1} parent=11 // pred_check_branch
        %211 = sbr.rel (%p209) target = $region20
      $region19: #{tpu_custom_call.1} parent=11 // pred_region
        _
      $region20: #{tpu_custom_call.1} parent=11 // pred_fallthru
        _
      // Predicated region
      $region21: #{tpu_custom_call.1} parent=11 // pred_check
        %p212 = pneg %p102
      $region22: #{tpu_custom_call.1} parent=11 // pred_check_branch
        %214 = sbr.rel (%p212) target = $region24
      $region23: #{tpu_custom_call.1} parent=11 // pred_region
        _
      $region24: #{tpu_custom_call.1} parent=11 // pred_fallthru
        _
      // Predicated region
      $region25: #{tpu_custom_call.1} parent=11 // pred_check
        %p215 = pneg %p123
      $region26: #{tpu_custom_call.1} parent=11 // pred_check_branch
        %217 = sbr.rel (%p215) target = $region28
      $region27: #{tpu_custom_call.1} parent=11 // pred_region
        _
      $region28: #{tpu_custom_call.1} parent=11 // pred_fallthru
        _
      // Predicated region
      $region29: #{tpu_custom_call.1} parent=11 // pred_check
        %p218 = pneg %p144
      $region30: #{tpu_custom_call.1} parent=11 // pred_check_branch
        %220 = sbr.rel (%p218) target = $region32
      $region31: #{tpu_custom_call.1} parent=11 // pred_region
        _
      $region32: #{tpu_custom_call.1} parent=11 // pred_fallthru
        _
      // Predicated region
      $region33: #{tpu_custom_call.1} parent=11 // pred_check
        %p221 = pneg %p165
      $region34: #{tpu_custom_call.1} parent=11 // pred_check_branch
        %223 = sbr.rel (%p221) target = $region36
      $region35: #{tpu_custom_call.1} parent=11 // pred_region
        _
      $region36: #{tpu_custom_call.1} parent=11 // pred_fallthru
        _
    $region12: #{tpu_custom_call.1} parent=5 // pred_fallthru
      _
    %p224 = scmp.lt.s32.totalorder %s13, 2
    // Predicated region
    $region37: #{tpu_custom_call.1} parent=5 // pred_check
      %p225 = pneg %p224
    $region38: #{tpu_custom_call.1} parent=5 // pred_check_branch
      %227 = sbr.rel (%p225) target = $region40
    $region39: #{tpu_custom_call.1} parent=5 // pred_region
      // Predicated region
      $region41: #{tpu_custom_call.1} parent=39 // pred_check
        %p228 = pneg %p33
      $region42: #{tpu_custom_call.1} parent=39 // pred_check_branch
        %230 = sbr.rel (%p228) target = $region44
      $region43: #{tpu_custom_call.1} parent=39 // pred_region
        %p231 = scmp.lt.s32.totalorder %s13, 1
        %s232 = scalar_select %p231, %s13, 1
        %s233 = smul.addr %s232, 32
        %s234 = smul.addr %s233, 8
        %s235 = scalar_lea.vmem %s0, %s234
      $region44: #{tpu_custom_call.1} parent=39 // pred_fallthru
        _
    $region40: #{tpu_custom_call.1} parent=5 // pred_fallthru
      _
    %p236 = scmp.le.s32.totalorder 1, %s13
    %p237 = scmp.lt.s32.totalorder %s13, 3
    %p238 = pnand %p236, %p237
    %p239 = pneg %p238
    // Predicated region
    $region45: #{tpu_custom_call.1} parent=5 // pred_check
      _
    $region46: #{tpu_custom_call.1} parent=5 // pred_check_branch
      %241 = sbr.rel (%p238) target = $region48
    $region47: #{tpu_custom_call.1} parent=5 // pred_region
      %s242 = ssub.s32 %s13, 1
      %p243 = scmp.lt.s32.totalorder %s18, 1
      %s244 = scalar_select %p243, %s18, 1
      %s245 = smul.addr %s244, 32
      %s246 = smul.addr %s245, 8
      %s247 = scalar_lea.vmem %s0, %s246
      %p248 = pneg %p39
      %p249 = pneg %p36
      %p250 = pneg %p60
      %p251 = pneg %p57
      %p252 = pneg %p81
      %p253 = pneg %p78
      %p254 = pneg %p102
      %p255 = pneg %p99
      %p256 = pneg %p123
      %p257 = pneg %p120
      %p258 = pneg %p144
      %p259 = pneg %p141
      %p260 = pneg %p165
      %p261 = pneg %p162
      %p262 = pneg %p191
      %p263 = pneg %p188
      %p264 = scmp.lt.s32.totalorder %s18, 1
      %s265 = scalar_select %p264, %s18, 1
      %s266 = smul.addr %s265, 32
      %s267 = smul.addr %s266, 8
      %s268 = scalar_lea.vmem %s7, %s267
      %p269 = scmp.lt.s32.totalorder %s18, 1
      %s270 = scalar_select %p269, %s18, 1
      %s271 = smul.addr %s270, 32
      %s272 = smul.addr %s271, 8
      %s273 = scalar_lea.vmem %s0, %s272
      %p274 = scmp.lt.s32.totalorder %s18, 1
      %s275 = scalar_select %p274, %s18, 1
      %s276 = smul.addr %s275, 32
      %s277 = smul.addr %s276, 8
      %s278 = scalar_lea.vmem %s7, %s277
      %v279 = vld [vmem:[%s273] sm:$0xff]
      %v280 = vld [vmem:[%s273 + $0x8] sm:$0xff]
      %v281 = vld [vmem:[%s273 + $0x10] sm:$0xff]
      %v282 = vld [vmem:[%s273 + $0x18] sm:$0xff]
      %v283 = vld [vmem:[%s273 + $0x20] sm:$0xff]
      %v284 = vld [vmem:[%s273 + $0x28] sm:$0xff]
      %v285 = vld [vmem:[%s273 + $0x30] sm:$0xff]
      %v286 = vld [vmem:[%s273 + $0x38] sm:$0xff]
      %v287 = vld [vmem:[%s273 + $0x40] sm:$0xff]
      %v288 = vld [vmem:[%s273 + $0x48] sm:$0xff]
      %v289 = vld [vmem:[%s273 + $0x50] sm:$0xff]
      %v290 = vld [vmem:[%s273 + $0x58] sm:$0xff]
      %v291 = vld [vmem:[%s273 + $0x60] sm:$0xff]
      %v292 = vld [vmem:[%s273 + $0x68] sm:$0xff]
      %v293 = vld [vmem:[%s273 + $0x70] sm:$0xff]
      %v294 = vld [vmem:[%s273 + $0x78] sm:$0xff]
      %v295 = vld [vmem:[%s273 + $0x80] sm:$0xff]
      %v296 = vld [vmem:[%s273 + $0x88] sm:$0xff]
      %v297 = vld [vmem:[%s273 + $0x90] sm:$0xff]
      %v298 = vld [vmem:[%s273 + $0x98] sm:$0xff]
      %v299 = vld [vmem:[%s273 + $0xa0] sm:$0xff]
      %v300 = vld [vmem:[%s273 + $0xa8] sm:$0xff]
      %v301 = vld [vmem:[%s273 + $0xb0] sm:$0xff]
      %v302 = vld [vmem:[%s273 + $0xb8] sm:$0xff]
      %v303 = vld [vmem:[%s273 + $0xc0] sm:$0xff]
      %v304 = vld [vmem:[%s273 + $0xc8] sm:$0xff]
      %v305 = vld [vmem:[%s273 + $0xd0] sm:$0xff]
      %v306 = vld [vmem:[%s273 + $0xd8] sm:$0xff]
      %v307 = vld [vmem:[%s273 + $0xe0] sm:$0xff]
      %v308 = vld [vmem:[%s273 + $0xe8] sm:$0xff]
      %v309 = vld [vmem:[%s273 + $0xf0] sm:$0xff]
      %v310 = vld [vmem:[%s273 + $0xf8] sm:$0xff]
      %vm311 = vcmask 523264
      %v312 = vsel %vm311, %v279, 0.0
      %v313 = vsel %vm311, %v280, 0.0
      %v314 = vadd.f32 %v312, %v313
      %v315 = vsel %vm311, %v281, 0.0
      %v316 = vadd.f32 %v314, %v315
      %v317 = vsel %vm311, %v282, 0.0
      %v318 = vadd.f32 %v316, %v317
      %v319 = vsel %vm311, %v283, 0.0
      %v320 = vadd.f32 %v318, %v319
      %v321 = vsel %vm311, %v284, 0.0
      %v322 = vadd.f32 %v320, %v321
      %v323 = vsel %vm311, %v285, 0.0
      %v324 = vadd.f32 %v322, %v323
      %v325 = vsel %vm311, %v286, 0.0
      %v326 = vadd.f32 %v324, %v325
      %v327 = vsel %vm311, %v287, 0.0
      %v328 = vadd.f32 %v326, %v327
      %v329 = vsel %vm311, %v288, 0.0
      %v330 = vadd.f32 %v328, %v329
      %v331 = vsel %vm311, %v289, 0.0
      %v332 = vadd.f32 %v330, %v331
      %v333 = vsel %vm311, %v290, 0.0
      %v334 = vadd.f32 %v332, %v333
      %v335 = vsel %vm311, %v291, 0.0
      %v336 = vadd.f32 %v334, %v335
      %v337 = vsel %vm311, %v292, 0.0
      %v338 = vadd.f32 %v336, %v337
      %v339 = vsel %vm311, %v293, 0.0
      %v340 = vadd.f32 %v338, %v339
      %v341 = vsel %vm311, %v294, 0.0
      %v342 = vadd.f32 %v340, %v341
      %v343 = vsel %vm311, %v295, 0.0
      %v344 = vadd.f32 %v342, %v343
      %v345 = vsel %vm311, %v296, 0.0
      %v346 = vadd.f32 %v344, %v345
      %v347 = vsel %vm311, %v297, 0.0
      %v348 = vadd.f32 %v346, %v347
      %v349 = vsel %vm311, %v298, 0.0
      %v350 = vadd.f32 %v348, %v349
      %v351 = vsel %vm311, %v299, 0.0
      %v352 = vadd.f32 %v350, %v351
      %v353 = vsel %vm311, %v300, 0.0
      %v354 = vadd.f32 %v352, %v353
      %v355 = vsel %vm311, %v301, 0.0
      %v356 = vadd.f32 %v354, %v355
      %v357 = vsel %vm311, %v302, 0.0
      %v358 = vadd.f32 %v356, %v357
      %v359 = vsel %vm311, %v303, 0.0
      %v360 = vadd.f32 %v358, %v359
      %v361 = vsel %vm311, %v304, 0.0
      %v362 = vadd.f32 %v360, %v361
      %v363 = vsel %vm311, %v305, 0.0
      %v364 = vadd.f32 %v362, %v363
      %v365 = vsel %vm311, %v306, 0.0
      %v366 = vadd.f32 %v364, %v365
      %v367 = vsel %vm311, %v307, 0.0
      %v368 = vadd.f32 %v366, %v367
      %v369 = vsel %vm311, %v308, 0.0
      %v370 = vadd.f32 %v368, %v369
      %v371 = vsel %vm311, %v309, 0.0
      %v372 = vadd.f32 %v370, %v371
      %v373 = vsel %vm311, %v310, 0.0
      %v374 = vadd.f32 %v372, %v373
      %v375 = vrot.slane %v374, 4
      %v376 = vadd.f32 %v374, %v375
      %v377 = vrot.slane %v376, 2
      %v378 = vadd.f32 %v376, %v377
      %v379 = vrot.slane %v378, 1
      %v380 = vadd.f32 %v378, %v379
      %v381 = vmul.f32 %v279, %v279
      %v382 = vmul.f32 %v280, %v280
      %v383 = vmul.f32 %v281, %v281
      %v384 = vmul.f32 %v282, %v282
      %v385 = vmul.f32 %v283, %v283
      %v386 = vmul.f32 %v284, %v284
      %v387 = vmul.f32 %v285, %v285
      %v388 = vmul.f32 %v286, %v286
      %v389 = vmul.f32 %v287, %v287
      %v390 = vmul.f32 %v288, %v288
      %v391 = vmul.f32 %v289, %v289
      %v392 = vmul.f32 %v290, %v290
      %v393 = vmul.f32 %v291, %v291
      %v394 = vmul.f32 %v292, %v292
      %v395 = vmul.f32 %v293, %v293
      %v396 = vmul.f32 %v294, %v294
      %v397 = vmul.f32 %v295, %v295
      %v398 = vmul.f32 %v296, %v296
      %v399 = vmul.f32 %v297, %v297
      %v400 = vmul.f32 %v298, %v298
      %v401 = vmul.f32 %v299, %v299
      %v402 = vmul.f32 %v300, %v300
      %v403 = vmul.f32 %v301, %v301
      %v404 = vmul.f32 %v302, %v302
      %v405 = vmul.f32 %v303, %v303
      %v406 = vmul.f32 %v304, %v304
      %v407 = vmul.f32 %v305, %v305
      %v408 = vmul.f32 %v306, %v306
      %v409 = vmul.f32 %v307, %v307
      %v410 = vmul.f32 %v308, %v308
      %v411 = vmul.f32 %v309, %v309
      %v412 = vmul.f32 %v310, %v310
      %v413 = vsel %vm311, %v381, 0.0
      %v414 = vsel %vm311, %v382, 0.0
      %v415 = vadd.f32 %v413, %v414
      %v416 = vsel %vm311, %v383, 0.0
      %v417 = vadd.f32 %v415, %v416
      %v418 = vsel %vm311, %v384, 0.0
      %v419 = vadd.f32 %v417, %v418
      %v420 = vsel %vm311, %v385, 0.0
      %v421 = vadd.f32 %v419, %v420
      %v422 = vsel %vm311, %v386, 0.0
      %v423 = vadd.f32 %v421, %v422
      %v424 = vsel %vm311, %v387, 0.0
      %v425 = vadd.f32 %v423, %v424
      %v426 = vsel %vm311, %v388, 0.0
      %v427 = vadd.f32 %v425, %v426
      %v428 = vsel %vm311, %v389, 0.0
      %v429 = vadd.f32 %v427, %v428
      %v430 = vsel %vm311, %v390, 0.0
      %v431 = vadd.f32 %v429, %v430
      %v432 = vsel %vm311, %v391, 0.0
      %v433 = vadd.f32 %v431, %v432
      %v434 = vsel %vm311, %v392, 0.0
      %v435 = vadd.f32 %v433, %v434
      %v436 = vsel %vm311, %v393, 0.0
      %v437 = vadd.f32 %v435, %v436
      %v438 = vsel %vm311, %v394, 0.0
      %v439 = vadd.f32 %v437, %v438
      %v440 = vsel %vm311, %v395, 0.0
      %v441 = vadd.f32 %v439, %v440
      %v442 = vsel %vm311, %v396, 0.0
      %v443 = vadd.f32 %v441, %v442
      %v444 = vsel %vm311, %v397, 0.0
      %v445 = vadd.f32 %v443, %v444
      %v446 = vsel %vm311, %v398, 0.0
      %v447 = vadd.f32 %v445, %v446
      %v448 = vsel %vm311, %v399, 0.0
      %v449 = vadd.f32 %v447, %v448
      %v450 = vsel %vm311, %v400, 0.0
      %v451 = vadd.f32 %v449, %v450
      %v452 = vsel %vm311, %v401, 0.0
      %v453 = vadd.f32 %v451, %v452
      %v454 = vsel %vm311, %v402, 0.0
      %v455 = vadd.f32 %v453, %v454
      %v456 = vsel %vm311, %v403, 0.0
      %v457 = vadd.f32 %v455, %v456
      %v458 = vsel %vm311, %v404, 0.0
      %v459 = vadd.f32 %v457, %v458
      %v460 = vsel %vm311, %v405, 0.0
      %v461 = vadd.f32 %v459, %v460
      %v462 = vsel %vm311, %v406, 0.0
      %v463 = vadd.f32 %v461, %v462
      %v464 = vsel %vm311, %v407, 0.0
      %v465 = vadd.f32 %v463, %v464
      %v466 = vsel %vm311, %v408, 0.0
      %v467 = vadd.f32 %v465, %v466
      %v468 = vsel %vm311, %v409, 0.0
      %v469 = vadd.f32 %v467, %v468
      %v470 = vsel %vm311, %v410, 0.0
      %v471 = vadd.f32 %v469, %v470
      %v472 = vsel %vm311, %v411, 0.0
      %v473 = vadd.f32 %v471, %v472
      %v474 = vsel %vm311, %v412, 0.0
      %v475 = vadd.f32 %v473, %v474
      %v476 = vrot.slane %v475, 4
      %v477 = vadd.f32 %v475, %v476
      %v478 = vrot.slane %v477, 2
      %v479 = vadd.f32 %v477, %v478
      %v480 = vrot.slane %v479, 1
      %v481 = vadd.f32 %v479, %v480
      %v482 = vld [vmem:[%s3] sm:$0xff]
      %v483 = vld [vmem:[%s3 + $0x8] sm:$0xff]
      %v484 = vld [vmem:[%s3 + $0x10] sm:$0xff]
      %v485 = vld [vmem:[%s3 + $0x18] sm:$0xff]
      %v486 = vld [vmem:[%s3 + $0x20] sm:$0xff]
      %v487 = vld [vmem:[%s3 + $0x28] sm:$0xff]
      %v488 = vld [vmem:[%s3 + $0x30] sm:$0xff]
      %v489 = vld [vmem:[%s3 + $0x38] sm:$0xff]
      %v490 = vld [vmem:[%s4] sm:$0xff]
      %v491 = vld [vmem:[%s4 + $0x8] sm:$0xff]
      %v492 = vld [vmem:[%s4 + $0x10] sm:$0xff]
      %v493 = vld [vmem:[%s4 + $0x18] sm:$0xff]
      %v495 = vsel %vm311, %v380, 0
      %497 = vmatpush.msra.mxu0 0.0
      %498 = vmatpush.msra.mxu0 0.0
      %499 = vmatpush.msra.mxu0 0.0
      %500 = vmatpush.msra.mxu0 0.0
      %501 = vmatpush.msra.mxu0 0.0
      %502 = vmatpush.msra.mxu0 0.0
      %503 = vmatpush.msra.mxu0 0.0
      %504 = vmatpush.msra.mxu0 0.0
      %505 = vmatpush.msra.mxu0 %v489
      %506 = vmatpush.msra.mxu0 %v488
      %507 = vmatpush.msra.mxu0 %v487
      %508 = vmatpush.msra.mxu0 %v486
      %509 = vmatpush.msra.mxu0 %v485
      %510 = vmatpush.msra.mxu0 %v484
      %511 = vmatpush.msra.mxu0 %v483
      %512 = vmatpush.msra.mxu0 %v482
      %513 = vmatmul.f32.gmra.mxu0 %v495
      %v514 = vpop.f32.mrf.mxu0
      %v515 = vadd.f32 0.0, %v514
      %516 = vdwg.mxu0
      %v518 = vsel %vm311, %v481, 0
      %520 = vmatpush.msra.mxu0 0.0
      %521 = vmatpush.msra.mxu0 0.0
      %522 = vmatpush.msra.mxu0 0.0
      %523 = vmatpush.msra.mxu0 0.0
      %524 = vmatpush.msra.mxu0 0.0
      %525 = vmatpush.msra.mxu0 0.0
      %526 = vmatpush.msra.mxu0 0.0
      %527 = vmatpush.msra.mxu0 0.0
      %528 = vmatpush.msra.mxu0 %v489
      %529 = vmatpush.msra.mxu0 %v488
      %530 = vmatpush.msra.mxu0 %v487
      %531 = vmatpush.msra.mxu0 %v486
      %532 = vmatpush.msra.mxu0 %v485
      %533 = vmatpush.msra.mxu0 %v484
      %534 = vmatpush.msra.mxu0 %v483
      %535 = vmatpush.msra.mxu0 %v482
      %536 = vmatmul.f32.gmra.mxu0 %v518
      %v537 = vpop.f32.mrf.mxu0
      %v538 = vadd.f32 0.0, %v537
      %539 = vdwg.mxu0
      %v540 = vrcp.pop 512.0
      %v541 = vmul.f32 512.0, %v540
      %v542 = vsub.f32 1.0, %v541
      %v543 = vmul.f32 %v540, %v542
      %v544 = vadd.f32 %v540, %v543
      %vm545 = vweird.f32 %v540
      %v546 = vsel %vm545, %v540, %v544
      %v547 = vmul.f32 %v515, %v546
      %v548 = vmul.f32 %v538, %v546
      %v549 = vmul.f32 %v547, %v547
      %v550 = vsub.f32 %v548, %v549
      %v551 = vadd.f32 %v550, 1e-05
      %v552 = vrsqrt.pop %v551
      %v553 = vmul.f32 %v552, %v551
      %v554 = vmul.f32 %v553, %v552
      %v555 = vmul.f32 0.5, %v554
      %v556 = vsub.f32 1.5, %v555
      %v557 = vmul.f32 %v552, %v556
      %vm558 = vweird.f32 %v551
      %vm559 = vweird.f32 %v552
      %vm560 = vmor %vm558, %vm559
      %v561 = vsel %vm560, %v552, %v557
      %vm562 = vcmask 261120
      %v564 = vsel %vm562, %v547, 0
      %566 = vmatpush.msra.mxu0 0.0
      %567 = vmatpush.msra.mxu0 0.0
      %568 = vmatpush.msra.mxu0 0.0
      %569 = vmatpush.msra.mxu0 0.0
      %570 = vmatpush.msra.mxu0 0.0
      %571 = vmatpush.msra.mxu0 0.0
      %572 = vmatpush.msra.mxu0 0.0
      %573 = vmatpush.msra.mxu0 0.0
      %574 = vmatpush.msra.mxu0 0.0
      %575 = vmatpush.msra.mxu0 0.0
      %576 = vmatpush.msra.mxu0 0.0
      %577 = vmatpush.msra.mxu0 0.0
      %578 = vmatpush.msra.mxu0 %v493
      %579 = vmatpush.msra.mxu0 %v492
      %580 = vmatpush.msra.mxu0 %v491
      %581 = vmatpush.msra.mxu0 %v490
      %582 = vmatmul.f32.gmra.mxu0 %v564
      %v583 = vpop.f32.mrf.mxu0
      %v584 = vadd.f32 0.0, %v583
      %585 = vdwg.mxu0
      %v587 = vsel %vm562, %v561, 0
      %589 = vmatpush.msra.mxu0 0.0
      %590 = vmatpush.msra.mxu0 0.0
      %591 = vmatpush.msra.mxu0 0.0
      %592 = vmatpush.msra.mxu0 0.0
      %593 = vmatpush.msra.mxu0 0.0
      %594 = vmatpush.msra.mxu0 0.0
      %595 = vmatpush.msra.mxu0 0.0
      %596 = vmatpush.msra.mxu0 0.0
      %597 = vmatpush.msra.mxu0 0.0
      %598 = vmatpush.msra.mxu0 0.0
      %599 = vmatpush.msra.mxu0 0.0
      %600 = vmatpush.msra.mxu0 0.0
      %601 = vmatpush.msra.mxu0 %v493
      %602 = vmatpush.msra.mxu0 %v492
      %603 = vmatpush.msra.mxu0 %v491
      %604 = vmatpush.msra.mxu0 %v490
      %605 = vmatmul.f32.gmra.mxu0 %v587
      %v606 = vpop.f32.mrf.mxu0
      %v607 = vadd.f32 0.0, %v606
      %608 = vdwg.mxu0
      %v609 = vld [vmem:[%s1] sm:$0x1]
      %v610 = vmul.f32 %v607, %v609
      %v611 = vld [vmem:[%s2] sm:$0x1]
      %v612 = vmul.f32 %v584, %v610
      %v613 = vsub.f32 %v611, %v612
      %v614 = vperm.slane %v610, 0
      %v615 = vmul.f32 %v279, %v614
      %v616 = vmul.f32 %v280, %v614
      %v617 = vmul.f32 %v281, %v614
      %v618 = vmul.f32 %v282, %v614
      %v619 = vmul.f32 %v283, %v614
      %v620 = vmul.f32 %v284, %v614
      %v621 = vmul.f32 %v285, %v614
      %v622 = vmul.f32 %v286, %v614
      %v623 = vmul.f32 %v287, %v614
      %v624 = vmul.f32 %v288, %v614
      %v625 = vmul.f32 %v289, %v614
      %v626 = vmul.f32 %v290, %v614
      %v627 = vmul.f32 %v291, %v614
      %v628 = vmul.f32 %v292, %v614
      %v629 = vmul.f32 %v293, %v614
      %v630 = vmul.f32 %v294, %v614
      %v631 = vmul.f32 %v295, %v614
      %v632 = vmul.f32 %v296, %v614
      %v633 = vmul.f32 %v297, %v614
      %v634 = vmul.f32 %v298, %v614
      %v635 = vmul.f32 %v299, %v614
      %v636 = vmul.f32 %v300, %v614
      %v637 = vmul.f32 %v301, %v614
      %v638 = vmul.f32 %v302, %v614
      %v639 = vmul.f32 %v303, %v614
      %v640 = vmul.f32 %v304, %v614
      %v641 = vmul.f32 %v305, %v614
      %v642 = vmul.f32 %v306, %v614
      %v643 = vmul.f32 %v307, %v614
      %v644 = vmul.f32 %v308, %v614
      %v645 = vmul.f32 %v309, %v614
      %v646 = vmul.f32 %v310, %v614
      %v648 = vperm.slane %v613, 0
      %v650 = vadd.f32 %v615, %v648
      %v651 = vadd.f32 %v616, %v648
      %v652 = vadd.f32 %v617, %v648
      %v653 = vadd.f32 %v618, %v648
      %v654 = vadd.f32 %v619, %v648
      %v655 = vadd.f32 %v620, %v648
      %v656 = vadd.f32 %v621, %v648
      %v657 = vadd.f32 %v622, %v648
      %v658 = vadd.f32 %v623, %v648
      %v659 = vadd.f32 %v624, %v648
      %v660 = vadd.f32 %v625, %v648
      %v661 = vadd.f32 %v626, %v648
      %v662 = vadd.f32 %v627, %v648
      %v663 = vadd.f32 %v628, %v648
      %v664 = vadd.f32 %v629, %v648
      %v665 = vadd.f32 %v630, %v648
      %v666 = vadd.f32 %v631, %v648
      %v667 = vadd.f32 %v632, %v648
      %v668 = vadd.f32 %v633, %v648
      %v669 = vadd.f32 %v634, %v648
      %v670 = vadd.f32 %v635, %v648
      %v671 = vadd.f32 %v636, %v648
      %v672 = vadd.f32 %v637, %v648
      %v673 = vadd.f32 %v638, %v648
      %v674 = vadd.f32 %v639, %v648
      %v675 = vadd.f32 %v640, %v648
      %v676 = vadd.f32 %v641, %v648
      %v677 = vadd.f32 %v642, %v648
      %v678 = vadd.f32 %v643, %v648
      %v679 = vadd.f32 %v644, %v648
      %v680 = vadd.f32 %v645, %v648
      %v681 = vadd.f32 %v646, %v648
      %v682 = vxor.u32 %v650, 2147483648
      %v683 = vxor.u32 %v651, 2147483648
      %v684 = vxor.u32 %v652, 2147483648
      %v685 = vxor.u32 %v653, 2147483648
      %v686 = vxor.u32 %v654, 2147483648
      %v687 = vxor.u32 %v655, 2147483648
      %v688 = vxor.u32 %v656, 2147483648
      %v689 = vxor.u32 %v657, 2147483648
      %v690 = vxor.u32 %v658, 2147483648
      %v691 = vxor.u32 %v659, 2147483648
      %v692 = vxor.u32 %v660, 2147483648
      %v693 = vxor.u32 %v661, 2147483648
      %v694 = vxor.u32 %v662, 2147483648
      %v695 = vxor.u32 %v663, 2147483648
      %v696 = vxor.u32 %v664, 2147483648
      %v697 = vxor.u32 %v665, 2147483648
      %v698 = vxor.u32 %v666, 2147483648
      %v699 = vxor.u32 %v667, 2147483648
      %v700 = vxor.u32 %v668, 2147483648
      %v701 = vxor.u32 %v669, 2147483648
      %v702 = vxor.u32 %v670, 2147483648
      %v703 = vxor.u32 %v671, 2147483648
      %v704 = vxor.u32 %v672, 2147483648
      %v705 = vxor.u32 %v673, 2147483648
      %v706 = vxor.u32 %v674, 2147483648
      %v707 = vxor.u32 %v675, 2147483648
      %v708 = vxor.u32 %v676, 2147483648
      %v709 = vxor.u32 %v677, 2147483648
      %v710 = vxor.u32 %v678, 2147483648
      %v711 = vxor.u32 %v679, 2147483648
      %v712 = vxor.u32 %v680, 2147483648
      %v713 = vxor.u32 %v681, 2147483648
      %v714 = vmul.f32 %v682, 1.442695
      %v715 = vpow.pop %v714
      %v716 = vmul.f32 %v683, 1.442695
      %v717 = vpow.pop %v716
      %v718 = vmul.f32 %v684, 1.442695
      %v719 = vpow.pop %v718
      %v720 = vmul.f32 %v685, 1.442695
      %v721 = vpow.pop %v720
      %v722 = vmul.f32 %v686, 1.442695
      %v723 = vpow.pop %v722
      %v724 = vmul.f32 %v687, 1.442695
      %v725 = vpow.pop %v724
      %v726 = vmul.f32 %v688, 1.442695
      %v727 = vpow.pop %v726
      %v728 = vmul.f32 %v689, 1.442695
      %v729 = vpow.pop %v728
      %v730 = vmul.f32 %v690, 1.442695
      %v731 = vpow.pop %v730
      %v732 = vmul.f32 %v691, 1.442695
      %v733 = vpow.pop %v732
      %v734 = vmul.f32 %v692, 1.442695
      %v735 = vpow.pop %v734
      %v736 = vmul.f32 %v693, 1.442695
      %v737 = vpow.pop %v736
      %v738 = vmul.f32 %v694, 1.442695
      %v739 = vpow.pop %v738
      %v740 = vmul.f32 %v695, 1.442695
      %v741 = vpow.pop %v740
      %v742 = vmul.f32 %v696, 1.442695
      %v743 = vpow.pop %v742
      %v744 = vmul.f32 %v697, 1.442695
      %v745 = vpow.pop %v744
      %v746 = vmul.f32 %v698, 1.442695
      %v747 = vpow.pop %v746
      %v748 = vmul.f32 %v699, 1.442695
      %v749 = vpow.pop %v748
      %v750 = vmul.f32 %v700, 1.442695
      %v751 = vpow.pop %v750
      %v752 = vmul.f32 %v701, 1.442695
      %v753 = vpow.pop %v752
      %v754 = vmul.f32 %v702, 1.442695
      %v755 = vpow.pop %v754
      %v756 = vmul.f32 %v703, 1.442695
      %v757 = vpow.pop %v756
      %v758 = vmul.f32 %v704, 1.442695
      %v759 = vpow.pop %v758
      %v760 = vmul.f32 %v705, 1.442695
      %v761 = vpow.pop %v760
      %v762 = vmul.f32 %v706, 1.442695
      %v763 = vpow.pop %v762
      %v764 = vmul.f32 %v707, 1.442695
      %v765 = vpow.pop %v764
      %v766 = vmul.f32 %v708, 1.442695
      %v767 = vpow.pop %v766
      %v768 = vmul.f32 %v709, 1.442695
      %v769 = vpow.pop %v768
      %v770 = vmul.f32 %v710, 1.442695
      %v771 = vpow.pop %v770
      %v772 = vmul.f32 %v711, 1.442695
      %v773 = vpow.pop %v772
      %v774 = vmul.f32 %v712, 1.442695
      %v775 = vpow.pop %v774
      %v776 = vmul.f32 %v713, 1.442695
      %v777 = vpow.pop %v776
      %v778 = vadd.f32 %v715, 1.0
      %v779 = vadd.f32 %v717, 1.0
      %v780 = vadd.f32 %v719, 1.0
      %v781 = vadd.f32 %v721, 1.0
      %v782 = vadd.f32 %v723, 1.0
      %v783 = vadd.f32 %v725, 1.0
      %v784 = vadd.f32 %v727, 1.0
      %v785 = vadd.f32 %v729, 1.0
      %v786 = vadd.f32 %v731, 1.0
      %v787 = vadd.f32 %v733, 1.0
      %v788 = vadd.f32 %v735, 1.0
      %v789 = vadd.f32 %v737, 1.0
      %v790 = vadd.f32 %v739, 1.0
      %v791 = vadd.f32 %v741, 1.0
      %v792 = vadd.f32 %v743, 1.0
      %v793 = vadd.f32 %v745, 1.0
      %v794 = vadd.f32 %v747, 1.0
      %v795 = vadd.f32 %v749, 1.0
      %v796 = vadd.f32 %v751, 1.0
      %v797 = vadd.f32 %v753, 1.0
      %v798 = vadd.f32 %v755, 1.0
      %v799 = vadd.f32 %v757, 1.0
      %v800 = vadd.f32 %v759, 1.0
      %v801 = vadd.f32 %v761, 1.0
      %v802 = vadd.f32 %v763, 1.0
      %v803 = vadd.f32 %v765, 1.0
      %v804 = vadd.f32 %v767, 1.0
      %v805 = vadd.f32 %v769, 1.0
      %v806 = vadd.f32 %v771, 1.0
      %v807 = vadd.f32 %v773, 1.0
      %v808 = vadd.f32 %v775, 1.0
      %v809 = vadd.f32 %v777, 1.0
      %v810 = vrcp.pop %v778
      %v811 = vmul.f32 %v778, %v810
      %v812 = vsub.f32 1.0, %v811
      %v813 = vmul.f32 %v810, %v812
      %v814 = vadd.f32 %v810, %v813
      %vm815 = vweird.f32 %v778
      %vm816 = vweird.f32 %v810
      %vm817 = vmor %vm815, %vm816
      %v818 = vsel %vm817, %v810, %v814
      %v819 = vand.u32 2147483647, %v778
      %vm820 = vcmp.eq.f32.partialorder %v819, 8.507059e+37
      %v821 = vand.u32 %v778, 2147483648
      %v822 = vor.u32 1.1754944e-38, %v821
      %v823 = vsel %vm820, %v822, %v818
      %v824 = vmul.f32 1.0, %v823
      %v825 = vrcp.pop %v779
      %v826 = vmul.f32 %v779, %v825
      %v827 = vsub.f32 1.0, %v826
      %v828 = vmul.f32 %v825, %v827
      %v829 = vadd.f32 %v825, %v828
      %vm830 = vweird.f32 %v779
      %vm831 = vweird.f32 %v825
      %vm832 = vmor %vm830, %vm831
      %v833 = vsel %vm832, %v825, %v829
      %v834 = vand.u32 2147483647, %v779
      %vm835 = vcmp.eq.f32.partialorder %v834, 8.507059e+37
      %v836 = vand.u32 %v779, 2147483648
      %v837 = vor.u32 1.1754944e-38, %v836
      %v838 = vsel %vm835, %v837, %v833
      %v839 = vmul.f32 1.0, %v838
      %v840 = vrcp.pop %v780
      %v841 = vmul.f32 %v780, %v840
      %v842 = vsub.f32 1.0, %v841
      %v843 = vmul.f32 %v840, %v842
      %v844 = vadd.f32 %v840, %v843
      %vm845 = vweird.f32 %v780
      %vm846 = vweird.f32 %v840
      %vm847 = vmor %vm845, %vm846
      %v848 = vsel %vm847, %v840, %v844
      %v849 = vand.u32 2147483647, %v780
      %vm850 = vcmp.eq.f32.partialorder %v849, 8.507059e+37
      %v851 = vand.u32 %v780, 2147483648
      %v852 = vor.u32 1.1754944e-38, %v851
      %v853 = vsel %vm850, %v852, %v848
      %v854 = vmul.f32 1.0, %v853
      %v855 = vrcp.pop %v781
      %v856 = vmul.f32 %v781, %v855
      %v857 = vsub.f32 1.0, %v856
      %v858 = vmul.f32 %v855, %v857
      %v859 = vadd.f32 %v855, %v858
      %vm860 = vweird.f32 %v781
      %vm861 = vweird.f32 %v855
      %vm862 = vmor %vm860, %vm861
      %v863 = vsel %vm862, %v855, %v859
      %v864 = vand.u32 2147483647, %v781
      %vm865 = vcmp.eq.f32.partialorder %v864, 8.507059e+37
      %v866 = vand.u32 %v781, 2147483648
      %v867 = vor.u32 1.1754944e-38, %v866
      %v868 = vsel %vm865, %v867, %v863
      %v869 = vmul.f32 1.0, %v868
      %v870 = vrcp.pop %v782
      %v871 = vmul.f32 %v782, %v870
      %v872 = vsub.f32 1.0, %v871
      %v873 = vmul.f32 %v870, %v872
      %v874 = vadd.f32 %v870, %v873
      %vm875 = vweird.f32 %v782
      %vm876 = vweird.f32 %v870
      %vm877 = vmor %vm875, %vm876
      %v878 = vsel %vm877, %v870, %v874
      %v879 = vand.u32 2147483647, %v782
      %vm880 = vcmp.eq.f32.partialorder %v879, 8.507059e+37
      %v881 = vand.u32 %v782, 2147483648
      %v882 = vor.u32 1.1754944e-38, %v881
      %v883 = vsel %vm880, %v882, %v878
      %v884 = vmul.f32 1.0, %v883
      %v885 = vrcp.pop %v783
      %v886 = vmul.f32 %v783, %v885
      %v887 = vsub.f32 1.0, %v886
      %v888 = vmul.f32 %v885, %v887
      %v889 = vadd.f32 %v885, %v888
      %vm890 = vweird.f32 %v783
      %vm891 = vweird.f32 %v885
      %vm892 = vmor %vm890, %vm891
      %v893 = vsel %vm892, %v885, %v889
      %v894 = vand.u32 2147483647, %v783
      %vm895 = vcmp.eq.f32.partialorder %v894, 8.507059e+37
      %v896 = vand.u32 %v783, 2147483648
      %v897 = vor.u32 1.1754944e-38, %v896
      %v898 = vsel %vm895, %v897, %v893
      %v899 = vmul.f32 1.0, %v898
      %v900 = vrcp.pop %v784
      %v901 = vmul.f32 %v784, %v900
      %v902 = vsub.f32 1.0, %v901
      %v903 = vmul.f32 %v900, %v902
      %v904 = vadd.f32 %v900, %v903
      %vm905 = vweird.f32 %v784
      %vm906 = vweird.f32 %v900
      %vm907 = vmor %vm905, %vm906
      %v908 = vsel %vm907, %v900, %v904
      %v909 = vand.u32 2147483647, %v784
      %vm910 = vcmp.eq.f32.partialorder %v909, 8.507059e+37
      %v911 = vand.u32 %v784, 2147483648
      %v912 = vor.u32 1.1754944e-38, %v911
      %v913 = vsel %vm910, %v912, %v908
      %v914 = vmul.f32 1.0, %v913
      %v915 = vrcp.pop %v785
      %v916 = vmul.f32 %v785, %v915
      %v917 = vsub.f32 1.0, %v916
      %v918 = vmul.f32 %v915, %v917
      %v919 = vadd.f32 %v915, %v918
      %vm920 = vweird.f32 %v785
      %vm921 = vweird.f32 %v915
      %vm922 = vmor %vm920, %vm921
      %v923 = vsel %vm922, %v915, %v919
      %v924 = vand.u32 2147483647, %v785
      %vm925 = vcmp.eq.f32.partialorder %v924, 8.507059e+37
      %v926 = vand.u32 %v785, 2147483648
      %v927 = vor.u32 1.1754944e-38, %v926
      %v928 = vsel %vm925, %v927, %v923
      %v929 = vmul.f32 1.0, %v928
      %v930 = vrcp.pop %v786
      %v931 = vmul.f32 %v786, %v930
      %v932 = vsub.f32 1.0, %v931
      %v933 = vmul.f32 %v930, %v932
      %v934 = vadd.f32 %v930, %v933
      %vm935 = vweird.f32 %v786
      %vm936 = vweird.f32 %v930
      %vm937 = vmor %vm935, %vm936
      %v938 = vsel %vm937, %v930, %v934
      %v939 = vand.u32 2147483647, %v786
      %vm940 = vcmp.eq.f32.partialorder %v939, 8.507059e+37
      %v941 = vand.u32 %v786, 2147483648
      %v942 = vor.u32 1.1754944e-38, %v941
      %v943 = vsel %vm940, %v942, %v938
      %v944 = vmul.f32 1.0, %v943
      %v945 = vrcp.pop %v787
      %v946 = vmul.f32 %v787, %v945
      %v947 = vsub.f32 1.0, %v946
      %v948 = vmul.f32 %v945, %v947
      %v949 = vadd.f32 %v945, %v948
      %vm950 = vweird.f32 %v787
      %vm951 = vweird.f32 %v945
      %vm952 = vmor %vm950, %vm951
      %v953 = vsel %vm952, %v945, %v949
      %v954 = vand.u32 2147483647, %v787
      %vm955 = vcmp.eq.f32.partialorder %v954, 8.507059e+37
      %v956 = vand.u32 %v787, 2147483648
      %v957 = vor.u32 1.1754944e-38, %v956
      %v958 = vsel %vm955, %v957, %v953
      %v959 = vmul.f32 1.0, %v958
      %v960 = vrcp.pop %v788
      %v961 = vmul.f32 %v788, %v960
      %v962 = vsub.f32 1.0, %v961
      %v963 = vmul.f32 %v960, %v962
      %v964 = vadd.f32 %v960, %v963
      %vm965 = vweird.f32 %v788
      %vm966 = vweird.f32 %v960
      %vm967 = vmor %vm965, %vm966
      %v968 = vsel %vm967, %v960, %v964
      %v969 = vand.u32 2147483647, %v788
      %vm970 = vcmp.eq.f32.partialorder %v969, 8.507059e+37
      %v971 = vand.u32 %v788, 2147483648
      %v972 = vor.u32 1.1754944e-38, %v971
      %v973 = vsel %vm970, %v972, %v968
      %v974 = vmul.f32 1.0, %v973
      %v975 = vrcp.pop %v789
      %v976 = vmul.f32 %v789, %v975
      %v977 = vsub.f32 1.0, %v976
      %v978 = vmul.f32 %v975, %v977
      %v979 = vadd.f32 %v975, %v978
      %vm980 = vweird.f32 %v789
      %vm981 = vweird.f32 %v975
      %vm982 = vmor %vm980, %vm981
      %v983 = vsel %vm982, %v975, %v979
      %v984 = vand.u32 2147483647, %v789
      %vm985 = vcmp.eq.f32.partialorder %v984, 8.507059e+37
      %v986 = vand.u32 %v789, 2147483648
      %v987 = vor.u32 1.1754944e-38, %v986
      %v988 = vsel %vm985, %v987, %v983
      %v989 = vmul.f32 1.0, %v988
      %v990 = vrcp.pop %v790
      %v991 = vmul.f32 %v790, %v990
      %v992 = vsub.f32 1.0, %v991
      %v993 = vmul.f32 %v990, %v992
      %v994 = vadd.f32 %v990, %v993
      %vm995 = vweird.f32 %v790
      %vm996 = vweird.f32 %v990
      %vm997 = vmor %vm995, %vm996
      %v998 = vsel %vm997, %v990, %v994
      %v999 = vand.u32 2147483647, %v790
      %vm1000 = vcmp.eq.f32.partialorder %v999, 8.507059e+37
      %v1001 = vand.u32 %v790, 2147483648
      %v1002 = vor.u32 1.1754944e-38, %v1001
      %v1003 = vsel %vm1000, %v1002, %v998
      %v1004 = vmul.f32 1.0, %v1003
      %v1005 = vrcp.pop %v791
      %v1006 = vmul.f32 %v791, %v1005
      %v1007 = vsub.f32 1.0, %v1006
      %v1008 = vmul.f32 %v1005, %v1007
      %v1009 = vadd.f32 %v1005, %v1008
      %vm1010 = vweird.f32 %v791
      %vm1011 = vweird.f32 %v1005
      %vm1012 = vmor %vm1010, %vm1011
      %v1013 = vsel %vm1012, %v1005, %v1009
      %v1014 = vand.u32 2147483647, %v791
      %vm1015 = vcmp.eq.f32.partialorder %v1014, 8.507059e+37
      %v1016 = vand.u32 %v791, 2147483648
      %v1017 = vor.u32 1.1754944e-38, %v1016
      %v1018 = vsel %vm1015, %v1017, %v1013
      %v1019 = vmul.f32 1.0, %v1018
      %v1020 = vrcp.pop %v792
      %v1021 = vmul.f32 %v792, %v1020
      %v1022 = vsub.f32 1.0, %v1021
      %v1023 = vmul.f32 %v1020, %v1022
      %v1024 = vadd.f32 %v1020, %v1023
      %vm1025 = vweird.f32 %v792
      %vm1026 = vweird.f32 %v1020
      %vm1027 = vmor %vm1025, %vm1026
      %v1028 = vsel %vm1027, %v1020, %v1024
      %v1029 = vand.u32 2147483647, %v792
      %vm1030 = vcmp.eq.f32.partialorder %v1029, 8.507059e+37
      %v1031 = vand.u32 %v792, 2147483648
      %v1032 = vor.u32 1.1754944e-38, %v1031
      %v1033 = vsel %vm1030, %v1032, %v1028
      %v1034 = vmul.f32 1.0, %v1033
      %v1035 = vrcp.pop %v793
      %v1036 = vmul.f32 %v793, %v1035
      %v1037 = vsub.f32 1.0, %v1036
      %v1038 = vmul.f32 %v1035, %v1037
      %v1039 = vadd.f32 %v1035, %v1038
      %vm1040 = vweird.f32 %v793
      %vm1041 = vweird.f32 %v1035
      %vm1042 = vmor %vm1040, %vm1041
      %v1043 = vsel %vm1042, %v1035, %v1039
      %v1044 = vand.u32 2147483647, %v793
      %vm1045 = vcmp.eq.f32.partialorder %v1044, 8.507059e+37
      %v1046 = vand.u32 %v793, 2147483648
      %v1047 = vor.u32 1.1754944e-38, %v1046
      %v1048 = vsel %vm1045, %v1047, %v1043
      %v1049 = vmul.f32 1.0, %v1048
      %v1050 = vrcp.pop %v794
      %v1051 = vmul.f32 %v794, %v1050
      %v1052 = vsub.f32 1.0, %v1051
      %v1053 = vmul.f32 %v1050, %v1052
      %v1054 = vadd.f32 %v1050, %v1053
      %vm1055 = vweird.f32 %v794
      %vm1056 = vweird.f32 %v1050
      %vm1057 = vmor %vm1055, %vm1056
      %v1058 = vsel %vm1057, %v1050, %v1054
      %v1059 = vand.u32 2147483647, %v794
      %vm1060 = vcmp.eq.f32.partialorder %v1059, 8.507059e+37
      %v1061 = vand.u32 %v794, 2147483648
      %v1062 = vor.u32 1.1754944e-38, %v1061
      %v1063 = vsel %vm1060, %v1062, %v1058
      %v1064 = vmul.f32 1.0, %v1063
      %v1065 = vrcp.pop %v795
      %v1066 = vmul.f32 %v795, %v1065
      %v1067 = vsub.f32 1.0, %v1066
      %v1068 = vmul.f32 %v1065, %v1067
      %v1069 = vadd.f32 %v1065, %v1068
      %vm1070 = vweird.f32 %v795
      %vm1071 = vweird.f32 %v1065
      %vm1072 = vmor %vm1070, %vm1071
      %v1073 = vsel %vm1072, %v1065, %v1069
      %v1074 = vand.u32 2147483647, %v795
      %vm1075 = vcmp.eq.f32.partialorder %v1074, 8.507059e+37
      %v1076 = vand.u32 %v795, 2147483648
      %v1077 = vor.u32 1.1754944e-38, %v1076
      %v1078 = vsel %vm1075, %v1077, %v1073
      %v1079 = vmul.f32 1.0, %v1078
      %v1080 = vrcp.pop %v796
      %v1081 = vmul.f32 %v796, %v1080
      %v1082 = vsub.f32 1.0, %v1081
      %v1083 = vmul.f32 %v1080, %v1082
      %v1084 = vadd.f32 %v1080, %v1083
      %vm1085 = vweird.f32 %v796
      %vm1086 = vweird.f32 %v1080
      %vm1087 = vmor %vm1085, %vm1086
      %v1088 = vsel %vm1087, %v1080, %v1084
      %v1089 = vand.u32 2147483647, %v796
      %vm1090 = vcmp.eq.f32.partialorder %v1089, 8.507059e+37
      %v1091 = vand.u32 %v796, 2147483648
      %v1092 = vor.u32 1.1754944e-38, %v1091
      %v1093 = vsel %vm1090, %v1092, %v1088
      %v1094 = vmul.f32 1.0, %v1093
      %v1095 = vrcp.pop %v797
      %v1096 = vmul.f32 %v797, %v1095
      %v1097 = vsub.f32 1.0, %v1096
      %v1098 = vmul.f32 %v1095, %v1097
      %v1099 = vadd.f32 %v1095, %v1098
      %vm1100 = vweird.f32 %v797
      %vm1101 = vweird.f32 %v1095
      %vm1102 = vmor %vm1100, %vm1101
      %v1103 = vsel %vm1102, %v1095, %v1099
      %v1104 = vand.u32 2147483647, %v797
      %vm1105 = vcmp.eq.f32.partialorder %v1104, 8.507059e+37
      %v1106 = vand.u32 %v797, 2147483648
      %v1107 = vor.u32 1.1754944e-38, %v1106
      %v1108 = vsel %vm1105, %v1107, %v1103
      %v1109 = vmul.f32 1.0, %v1108
      %v1110 = vrcp.pop %v798
      %v1111 = vmul.f32 %v798, %v1110
      %v1112 = vsub.f32 1.0, %v1111
      %v1113 = vmul.f32 %v1110, %v1112
      %v1114 = vadd.f32 %v1110, %v1113
      %vm1115 = vweird.f32 %v798
      %vm1116 = vweird.f32 %v1110
      %vm1117 = vmor %vm1115, %vm1116
      %v1118 = vsel %vm1117, %v1110, %v1114
      %v1119 = vand.u32 2147483647, %v798
      %vm1120 = vcmp.eq.f32.partialorder %v1119, 8.507059e+37
      %v1121 = vand.u32 %v798, 2147483648
      %v1122 = vor.u32 1.1754944e-38, %v1121
      %v1123 = vsel %vm1120, %v1122, %v1118
      %v1124 = vmul.f32 1.0, %v1123
      %v1125 = vrcp.pop %v799
      %v1126 = vmul.f32 %v799, %v1125
      %v1127 = vsub.f32 1.0, %v1126
      %v1128 = vmul.f32 %v1125, %v1127
      %v1129 = vadd.f32 %v1125, %v1128
      %vm1130 = vweird.f32 %v799
      %vm1131 = vweird.f32 %v1125
      %vm1132 = vmor %vm1130, %vm1131
      %v1133 = vsel %vm1132, %v1125, %v1129
      %v1134 = vand.u32 2147483647, %v799
      %vm1135 = vcmp.eq.f32.partialorder %v1134, 8.507059e+37
      %v1136 = vand.u32 %v799, 2147483648
      %v1137 = vor.u32 1.1754944e-38, %v1136
      %v1138 = vsel %vm1135, %v1137, %v1133
      %v1139 = vmul.f32 1.0, %v1138
      %v1140 = vrcp.pop %v800
      %v1141 = vmul.f32 %v800, %v1140
      %v1142 = vsub.f32 1.0, %v1141
      %v1143 = vmul.f32 %v1140, %v1142
      %v1144 = vadd.f32 %v1140, %v1143
      %vm1145 = vweird.f32 %v800
      %vm1146 = vweird.f32 %v1140
      %vm1147 = vmor %vm1145, %vm1146
      %v1148 = vsel %vm1147, %v1140, %v1144
      %v1149 = vand.u32 2147483647, %v800
      %vm1150 = vcmp.eq.f32.partialorder %v1149, 8.507059e+37
      %v1151 = vand.u32 %v800, 2147483648
      %v1152 = vor.u32 1.1754944e-38, %v1151
      %v1153 = vsel %vm1150, %v1152, %v1148
      %v1154 = vmul.f32 1.0, %v1153
      %v1155 = vrcp.pop %v801
      %v1156 = vmul.f32 %v801, %v1155
      %v1157 = vsub.f32 1.0, %v1156
      %v1158 = vmul.f32 %v1155, %v1157
      %v1159 = vadd.f32 %v1155, %v1158
      %vm1160 = vweird.f32 %v801
      %vm1161 = vweird.f32 %v1155
      %vm1162 = vmor %vm1160, %vm1161
      %v1163 = vsel %vm1162, %v1155, %v1159
      %v1164 = vand.u32 2147483647, %v801
      %vm1165 = vcmp.eq.f32.partialorder %v1164, 8.507059e+37
      %v1166 = vand.u32 %v801, 2147483648
      %v1167 = vor.u32 1.1754944e-38, %v1166
      %v1168 = vsel %vm1165, %v1167, %v1163
      %v1169 = vmul.f32 1.0, %v1168
      %v1170 = vrcp.pop %v802
      %v1171 = vmul.f32 %v802, %v1170
      %v1172 = vsub.f32 1.0, %v1171
      %v1173 = vmul.f32 %v1170, %v1172
      %v1174 = vadd.f32 %v1170, %v1173
      %vm1175 = vweird.f32 %v802
      %vm1176 = vweird.f32 %v1170
      %vm1177 = vmor %vm1175, %vm1176
      %v1178 = vsel %vm1177, %v1170, %v1174
      %v1179 = vand.u32 2147483647, %v802
      %vm1180 = vcmp.eq.f32.partialorder %v1179, 8.507059e+37
      %v1181 = vand.u32 %v802, 2147483648
      %v1182 = vor.u32 1.1754944e-38, %v1181
      %v1183 = vsel %vm1180, %v1182, %v1178
      %v1184 = vmul.f32 1.0, %v1183
      %v1185 = vrcp.pop %v803
      %v1186 = vmul.f32 %v803, %v1185
      %v1187 = vsub.f32 1.0, %v1186
      %v1188 = vmul.f32 %v1185, %v1187
      %v1189 = vadd.f32 %v1185, %v1188
      %vm1190 = vweird.f32 %v803
      %vm1191 = vweird.f32 %v1185
      %vm1192 = vmor %vm1190, %vm1191
      %v1193 = vsel %vm1192, %v1185, %v1189
      %v1194 = vand.u32 2147483647, %v803
      %vm1195 = vcmp.eq.f32.partialorder %v1194, 8.507059e+37
      %v1196 = vand.u32 %v803, 2147483648
      %v1197 = vor.u32 1.1754944e-38, %v1196
      %v1198 = vsel %vm1195, %v1197, %v1193
      %v1199 = vmul.f32 1.0, %v1198
      %v1200 = vrcp.pop %v804
      %v1201 = vmul.f32 %v804, %v1200
      %v1202 = vsub.f32 1.0, %v1201
      %v1203 = vmul.f32 %v1200, %v1202
      %v1204 = vadd.f32 %v1200, %v1203
      %vm1205 = vweird.f32 %v804
      %vm1206 = vweird.f32 %v1200
      %vm1207 = vmor %vm1205, %vm1206
      %v1208 = vsel %vm1207, %v1200, %v1204
      %v1209 = vand.u32 2147483647, %v804
      %vm1210 = vcmp.eq.f32.partialorder %v1209, 8.507059e+37
      %v1211 = vand.u32 %v804, 2147483648
      %v1212 = vor.u32 1.1754944e-38, %v1211
      %v1213 = vsel %vm1210, %v1212, %v1208
      %v1214 = vmul.f32 1.0, %v1213
      %v1215 = vrcp.pop %v805
      %v1216 = vmul.f32 %v805, %v1215
      %v1217 = vsub.f32 1.0, %v1216
      %v1218 = vmul.f32 %v1215, %v1217
      %v1219 = vadd.f32 %v1215, %v1218
      %vm1220 = vweird.f32 %v805
      %vm1221 = vweird.f32 %v1215
      %vm1222 = vmor %vm1220, %vm1221
      %v1223 = vsel %vm1222, %v1215, %v1219
      %v1224 = vand.u32 2147483647, %v805
      %vm1225 = vcmp.eq.f32.partialorder %v1224, 8.507059e+37
      %v1226 = vand.u32 %v805, 2147483648
      %v1227 = vor.u32 1.1754944e-38, %v1226
      %v1228 = vsel %vm1225, %v1227, %v1223
      %v1229 = vmul.f32 1.0, %v1228
      %v1230 = vrcp.pop %v806
      %v1231 = vmul.f32 %v806, %v1230
      %v1232 = vsub.f32 1.0, %v1231
      %v1233 = vmul.f32 %v1230, %v1232
      %v1234 = vadd.f32 %v1230, %v1233
      %vm1235 = vweird.f32 %v806
      %vm1236 = vweird.f32 %v1230
      %vm1237 = vmor %vm1235, %vm1236
      %v1238 = vsel %vm1237, %v1230, %v1234
      %v1239 = vand.u32 2147483647, %v806
      %vm1240 = vcmp.eq.f32.partialorder %v1239, 8.507059e+37
      %v1241 = vand.u32 %v806, 2147483648
      %v1242 = vor.u32 1.1754944e-38, %v1241
      %v1243 = vsel %vm1240, %v1242, %v1238
      %v1244 = vmul.f32 1.0, %v1243
      %v1245 = vrcp.pop %v807
      %v1246 = vmul.f32 %v807, %v1245
      %v1247 = vsub.f32 1.0, %v1246
      %v1248 = vmul.f32 %v1245, %v1247
      %v1249 = vadd.f32 %v1245, %v1248
      %vm1250 = vweird.f32 %v807
      %vm1251 = vweird.f32 %v1245
      %vm1252 = vmor %vm1250, %vm1251
      %v1253 = vsel %vm1252, %v1245, %v1249
      %v1254 = vand.u32 2147483647, %v807
      %vm1255 = vcmp.eq.f32.partialorder %v1254, 8.507059e+37
      %v1256 = vand.u32 %v807, 2147483648
      %v1257 = vor.u32 1.1754944e-38, %v1256
      %v1258 = vsel %vm1255, %v1257, %v1253
      %v1259 = vmul.f32 1.0, %v1258
      %v1260 = vrcp.pop %v808
      %v1261 = vmul.f32 %v808, %v1260
      %v1262 = vsub.f32 1.0, %v1261
      %v1263 = vmul.f32 %v1260, %v1262
      %v1264 = vadd.f32 %v1260, %v1263
      %vm1265 = vweird.f32 %v808
      %vm1266 = vweird.f32 %v1260
      %vm1267 = vmor %vm1265, %vm1266
      %v1268 = vsel %vm1267, %v1260, %v1264
      %v1269 = vand.u32 2147483647, %v808
      %vm1270 = vcmp.eq.f32.partialorder %v1269, 8.507059e+37
      %v1271 = vand.u32 %v808, 2147483648
      %v1272 = vor.u32 1.1754944e-38, %v1271
      %v1273 = vsel %vm1270, %v1272, %v1268
      %v1274 = vmul.f32 1.0, %v1273
      %v1275 = vrcp.pop %v809
      %v1276 = vmul.f32 %v809, %v1275
      %v1277 = vsub.f32 1.0, %v1276
      %v1278 = vmul.f32 %v1275, %v1277
      %v1279 = vadd.f32 %v1275, %v1278
      %vm1280 = vweird.f32 %v809
      %vm1281 = vweird.f32 %v1275
      %vm1282 = vmor %vm1280, %vm1281
      %v1283 = vsel %vm1282, %v1275, %v1279
      %v1284 = vand.u32 2147483647, %v809
      %vm1285 = vcmp.eq.f32.partialorder %v1284, 8.507059e+37
      %v1286 = vand.u32 %v809, 2147483648
      %v1287 = vor.u32 1.1754944e-38, %v1286
      %v1288 = vsel %vm1285, %v1287, %v1283
      %v1289 = vmul.f32 1.0, %v1288
      %v1290 = vmul.f32 %v650, %v824
      %v1291 = vmul.f32 %v651, %v839
      %v1292 = vmul.f32 %v652, %v854
      %v1293 = vmul.f32 %v653, %v869
      %v1294 = vmul.f32 %v654, %v884
      %v1295 = vmul.f32 %v655, %v899
      %v1296 = vmul.f32 %v656, %v914
      %v1297 = vmul.f32 %v657, %v929
      %v1298 = vmul.f32 %v658, %v944
      %v1299 = vmul.f32 %v659, %v959
      %v1300 = vmul.f32 %v660, %v974
      %v1301 = vmul.f32 %v661, %v989
      %v1302 = vmul.f32 %v662, %v1004
      %v1303 = vmul.f32 %v663, %v1019
      %v1304 = vmul.f32 %v664, %v1034
      %v1305 = vmul.f32 %v665, %v1049
      %v1306 = vmul.f32 %v666, %v1064
      %v1307 = vmul.f32 %v667, %v1079
      %v1308 = vmul.f32 %v668, %v1094
      %v1309 = vmul.f32 %v669, %v1109
      %v1310 = vmul.f32 %v670, %v1124
      %v1311 = vmul.f32 %v671, %v1139
      %v1312 = vmul.f32 %v672, %v1154
      %v1313 = vmul.f32 %v673, %v1169
      %v1314 = vmul.f32 %v674, %v1184
      %v1315 = vmul.f32 %v675, %v1199
      %v1316 = vmul.f32 %v676, %v1214
      %v1317 = vmul.f32 %v677, %v1229
      %v1318 = vmul.f32 %v678, %v1244
      %v1319 = vmul.f32 %v679, %v1259
      %v1320 = vmul.f32 %v680, %v1274
      %v1321 = vmul.f32 %v681, %v1289
      %1322 = vst.msk [vmem:[#allocation2] sm:$0xff] %vm311, 0.0
      %1323 = vst.msk [vmem:[#allocation2 + $0x8] sm:$0xff] %vm311, 0.0
      %s1324 = scalar_lea.vmem [#allocation2], 272
      %1325 = vst.msk [vmem:[%s1324] sm:$0xff] %vm311, 0.0
      %1326 = vst.msk [vmem:[%s1324 + $0x8] sm:$0xff] %vm311, 0.0
      %s1327 = scalar_lea.vmem [#allocation2], 16
      %1328 = vst.msk [vmem:[%s1327] sm:$0xff] %vm311, %v1290
      %1329 = vst.msk [vmem:[%s1327 + $0x8] sm:$0xff] %vm311, %v1291
      %1330 = vst.msk [vmem:[%s1327 + $0x10] sm:$0xff] %vm311, %v1292
      %1331 = vst.msk [vmem:[%s1327 + $0x18] sm:$0xff] %vm311, %v1293
      %1332 = vst.msk [vmem:[%s1327 + $0x20] sm:$0xff] %vm311, %v1294
      %1333 = vst.msk [vmem:[%s1327 + $0x28] sm:$0xff] %vm311, %v1295
      %1334 = vst.msk [vmem:[%s1327 + $0x30] sm:$0xff] %vm311, %v1296
      %1335 = vst.msk [vmem:[%s1327 + $0x38] sm:$0xff] %vm311, %v1297
      %1336 = vst.msk [vmem:[%s1327 + $0x40] sm:$0xff] %vm311, %v1298
      %1337 = vst.msk [vmem:[%s1327 + $0x48] sm:$0xff] %vm311, %v1299
      %1338 = vst.msk [vmem:[%s1327 + $0x50] sm:$0xff] %vm311, %v1300
      %1339 = vst.msk [vmem:[%s1327 + $0x58] sm:$0xff] %vm311, %v1301
      %1340 = vst.msk [vmem:[%s1327 + $0x60] sm:$0xff] %vm311, %v1302
      %1341 = vst.msk [vmem:[%s1327 + $0x68] sm:$0xff] %vm311, %v1303
      %1342 = vst.msk [vmem:[%s1327 + $0x70] sm:$0xff] %vm311, %v1304
      %1343 = vst.msk [vmem:[%s1327 + $0x78] sm:$0xff] %vm311, %v1305
      %1344 = vst.msk [vmem:[%s1327 + $0x80] sm:$0xff] %vm311, %v1306
      %1345 = vst.msk [vmem:[%s1327 + $0x88] sm:$0xff] %vm311, %v1307
      %1346 = vst.msk [vmem:[%s1327 + $0x90] sm:$0xff] %vm311, %v1308
      %1347 = vst.msk [vmem:[%s1327 + $0x98] sm:$0xff] %vm311, %v1309
      %1348 = vst.msk [vmem:[%s1327 + $0xa0] sm:$0xff] %vm311, %v1310
      %1349 = vst.msk [vmem:[%s1327 + $0xa8] sm:$0xff] %vm311, %v1311
      %1350 = vst.msk [vmem:[%s1327 + $0xb0] sm:$0xff] %vm311, %v1312
      %1351 = vst.msk [vmem:[%s1327 + $0xb8] sm:$0xff] %vm311, %v1313
      %1352 = vst.msk [vmem:[%s1327 + $0xc0] sm:$0xff] %vm311, %v1314
      %1353 = vst.msk [vmem:[%s1327 + $0xc8] sm:$0xff] %vm311, %v1315
      %1354 = vst.msk [vmem:[%s1327 + $0xd0] sm:$0xff] %vm311, %v1316
      %1355 = vst.msk [vmem:[%s1327 + $0xd8] sm:$0xff] %vm311, %v1317
      %1356 = vst.msk [vmem:[%s1327 + $0xe0] sm:$0xff] %vm311, %v1318
      %1357 = vst.msk [vmem:[%s1327 + $0xe8] sm:$0xff] %vm311, %v1319
      %1358 = vst.msk [vmem:[%s1327 + $0xf0] sm:$0xff] %vm311, %v1320
      %1359 = vst.msk [vmem:[%s1327 + $0xf8] sm:$0xff] %vm311, %v1321
      %v1360 = vld [vmem:[%s5] sm:$0xff]
      %v1361 = vld [vmem:[%s5 + $0x8] sm:$0xff]
      %v1362 = vld [vmem:[%s5 + $0x10] sm:$0xff]
      %v1363 = vld [vmem:[%s5 + $0x18] sm:$0xff]
      %v1364 = vld [vmem:[%s5 + $0x20] sm:$0xff]
      %v1365 = vld [vmem:[%s5 + $0x28] sm:$0xff]
      %v1366 = vld [vmem:[%s5 + $0x30] sm:$0xff]
      %v1367 = vld [vmem:[%s5 + $0x38] sm:$0xff]
      %v1368 = vld [vmem:[%s5 + $0x40] sm:$0xff]
      %v1369 = vld [vmem:[%s5 + $0x48] sm:$0xff]
      %v1370 = vld [vmem:[%s5 + $0x50] sm:$0xff]
      %v1371 = vld [vmem:[%s5 + $0x58] sm:$0xff]
      %v1372 = vld [vmem:[%s5 + $0x60] sm:$0xff]
      %v1373 = vld [vmem:[%s5 + $0x68] sm:$0xff]
      %v1374 = vld [vmem:[%s5 + $0x70] sm:$0xff]
      %v1375 = vld [vmem:[%s5 + $0x78] sm:$0xff]
      %v1376 = vld [vmem:[%s5 + $0x80] sm:$0xff]
      %v1377 = vld [vmem:[%s5 + $0x88] sm:$0xff]
      %v1378 = vld [vmem:[%s5 + $0x90] sm:$0xff]
      %v1379 = vld [vmem:[%s5 + $0x98] sm:$0xff]
      %v1380 = vld [vmem:[%s5 + $0xa0] sm:$0xff]
      %v1381 = vld [vmem:[%s5 + $0xa8] sm:$0xff]
      %v1382 = vld [vmem:[%s5 + $0xb0] sm:$0xff]
      %v1383 = vld [vmem:[%s5 + $0xb8] sm:$0xff]
      %v1384 = vld [vmem:[%s5 + $0xc0] sm:$0xff]
      %v1385 = vld [vmem:[%s5 + $0xc8] sm:$0xff]
      %v1386 = vld [vmem:[%s5 + $0xd0] sm:$0xff]
      %v1387 = vld [vmem:[%s5 + $0xd8] sm:$0xff]
      %v1388 = vld [vmem:[%s5 + $0xe0] sm:$0xff]
      %v1389 = vld [vmem:[%s5 + $0xe8] sm:$0xff]
      %v1390 = vld [vmem:[%s5 + $0xf0] sm:$0xff]
      %v1391 = vld [vmem:[%s5 + $0xf8] sm:$0xff]
      %v1392 = vld [vmem:[%s5 + $0x100] sm:$0xff]
      %v1393 = vld [vmem:[%s5 + $0x108] sm:$0xff]
      %v1394 = vld [vmem:[%s5 + $0x110] sm:$0xff]
      %v1395 = vld [vmem:[%s5 + $0x118] sm:$0xff]
      %v1396 = vld [vmem:[%s5 + $0x120] sm:$0xff]
      %v1397 = vld [vmem:[%s5 + $0x128] sm:$0xff]
      %v1398 = vld [vmem:[%s5 + $0x130] sm:$0xff]
      %v1399 = vld [vmem:[%s5 + $0x138] sm:$0xff]
      %v1400 = vld [vmem:[%s5 + $0x140] sm:$0xff]
      %v1401 = vld [vmem:[%s5 + $0x148] sm:$0xff]
      %v1402 = vld [vmem:[%s5 + $0x150] sm:$0xff]
      %v1403 = vld [vmem:[%s5 + $0x158] sm:$0xff]
      %v1404 = vld [vmem:[%s5 + $0x160] sm:$0xff]
      %v1405 = vld [vmem:[%s5 + $0x168] sm:$0xff]
      %v1406 = vld [vmem:[%s5 + $0x170] sm:$0xff]
      %v1407 = vld [vmem:[%s5 + $0x178] sm:$0xff]
      %v1408 = vld [vmem:[%s5 + $0x180] sm:$0xff]
      %v1409 = vld [vmem:[%s5 + $0x188] sm:$0xff]
      %v1410 = vld [vmem:[%s5 + $0x190] sm:$0xff]
      %v1411 = vld [vmem:[%s5 + $0x198] sm:$0xff]
      %v1412 = vld [vmem:[%s5 + $0x1a0] sm:$0xff]
      %v1413 = vld [vmem:[%s5 + $0x1a8] sm:$0xff]
      %v1414 = vld [vmem:[%s5 + $0x1b0] sm:$0xff]
      %v1415 = vld [vmem:[%s5 + $0x1b8] sm:$0xff]
      %v1416 = vld [vmem:[%s5 + $0x1c0] sm:$0xff]
      %v1417 = vld [vmem:[%s5 + $0x1c8] sm:$0xff]
      %v1418 = vld [vmem:[%s5 + $0x1d0] sm:$0xff]
      %v1419 = vld [vmem:[%s5 + $0x1d8] sm:$0xff]
      %v1420 = vld [vmem:[%s5 + $0x1e0] sm:$0xff]
      %v1421 = vld [vmem:[%s5 + $0x1e8] sm:$0xff]
      %v1422 = vld [vmem:[%s5 + $0x1f0] sm:$0xff]
      %v1423 = vld [vmem:[%s5 + $0x1f8] sm:$0xff]
      %v1424 = vld [vmem:[%s5 + $0x200] sm:$0xff]
      %v1425 = vld [vmem:[%s5 + $0x208] sm:$0xff]
      %v1426 = vld [vmem:[%s5 + $0x210] sm:$0xff]
      %v1427 = vld [vmem:[%s5 + $0x218] sm:$0xff]
      %v1428 = vld [vmem:[%s5 + $0x220] sm:$0xff]
      %v1429 = vld [vmem:[%s5 + $0x228] sm:$0xff]
      %v1430 = vld [vmem:[%s5 + $0x230] sm:$0xff]
      %v1431 = vld [vmem:[%s5 + $0x238] sm:$0xff]
      %v1432 = vld [vmem:[%s6] sm:$0x1]
      %s1433 = smul.u32 0, 16
      %s1434 = scalar_lea.vmem [#allocation2], %s1433
      %v1435 = vld [vmem:[%s1434] sm:$0xff]
      %v1436 = vld [vmem:[%s1434 + $0x8] sm:$0xff]
      %v1437 = vld [vmem:[%s1434 + $0x10] sm:$0xff]
      %v1438 = vld [vmem:[%s1434 + $0x18] sm:$0xff]
      %v1439 = vld [vmem:[%s1434 + $0x20] sm:$0xff]
      %v1440 = vld [vmem:[%s1434 + $0x28] sm:$0xff]
      %v1441 = vld [vmem:[%s1434 + $0x30] sm:$0xff]
      %v1442 = vld [vmem:[%s1434 + $0x38] sm:$0xff]
      %v1443 = vld [vmem:[%s1434 + $0x40] sm:$0xff]
      %v1444 = vld [vmem:[%s1434 + $0x48] sm:$0xff]
      %v1445 = vld [vmem:[%s1434 + $0x50] sm:$0xff]
      %v1446 = vld [vmem:[%s1434 + $0x58] sm:$0xff]
      %v1447 = vld [vmem:[%s1434 + $0x60] sm:$0xff]
      %v1448 = vld [vmem:[%s1434 + $0x68] sm:$0xff]
      %v1449 = vld [vmem:[%s1434 + $0x70] sm:$0xff]
      %v1450 = vld [vmem:[%s1434 + $0x78] sm:$0xff]
      %v1451 = vld [vmem:[%s1434 + $0x80] sm:$0xff]
      %v1452 = vld [vmem:[%s1434 + $0x88] sm:$0xff]
      %v1453 = vld [vmem:[%s1434 + $0x90] sm:$0xff]
      %v1454 = vld [vmem:[%s1434 + $0x98] sm:$0xff]
      %v1455 = vld [vmem:[%s1434 + $0xa0] sm:$0xff]
      %v1456 = vld [vmem:[%s1434 + $0xa8] sm:$0xff]
      %v1457 = vld [vmem:[%s1434 + $0xb0] sm:$0xff]
      %v1458 = vld [vmem:[%s1434 + $0xb8] sm:$0xff]
      %v1459 = vld [vmem:[%s1434 + $0xc0] sm:$0xff]
      %v1460 = vld [vmem:[%s1434 + $0xc8] sm:$0xff]
      %v1461 = vld [vmem:[%s1434 + $0xd0] sm:$0xff]
      %v1462 = vld [vmem:[%s1434 + $0xd8] sm:$0xff]
      %v1463 = vld [vmem:[%s1434 + $0xe0] sm:$0xff]
      %v1464 = vld [vmem:[%s1434 + $0xe8] sm:$0xff]
      %v1465 = vld [vmem:[%s1434 + $0xf0] sm:$0xff]
      %v1466 = vld [vmem:[%s1434 + $0xf8] sm:$0xff]
      %v1467 = vld [vmem:[%s1434 + $0x100] sm:$0xff]
      %v1468 = vld [vmem:[%s1434 + $0x108] sm:$0xff]
      %v1469 = vld [vmem:[%s1434 + $0x110] sm:$0xff]
      %v1470 = vld [vmem:[%s1434 + $0x118] sm:$0xff]
      %vm1507 = vcmask 1040384
      %v1508 = vrot.slane %v1435, 7
      %v1509 = vrot.slane %v1436, 7
      %v1510 = vsel %vm1507, %v1508, %v1509
      %v1511 = vrot.slane %v1437, 7
      %v1512 = vrot.slane %v1438, 7
      %v1513 = vsel %vm1507, %v1511, %v1512
      %v1514 = vrot.slane %v1439, 7
      %v1515 = vrot.slane %v1440, 7
      %v1516 = vsel %vm1507, %v1514, %v1515
      %v1517 = vrot.slane %v1441, 7
      %v1518 = vrot.slane %v1442, 7
      %v1519 = vsel %vm1507, %v1517, %v1518
      %v1520 = vrot.slane %v1443, 7
      %v1521 = vrot.slane %v1444, 7
      %v1522 = vsel %vm1507, %v1520, %v1521
      %v1523 = vrot.slane %v1445, 7
      %v1524 = vrot.slane %v1446, 7
      %v1525 = vsel %vm1507, %v1523, %v1524
      %v1526 = vrot.slane %v1447, 7
      %v1527 = vrot.slane %v1448, 7
      %v1528 = vsel %vm1507, %v1526, %v1527
      %v1529 = vrot.slane %v1449, 7
      %v1530 = vrot.slane %v1450, 7
      %v1531 = vsel %vm1507, %v1529, %v1530
      %v1532 = vrot.slane %v1451, 7
      %v1533 = vrot.slane %v1452, 7
      %v1534 = vsel %vm1507, %v1532, %v1533
      %v1535 = vrot.slane %v1453, 7
      %v1536 = vrot.slane %v1454, 7
      %v1537 = vsel %vm1507, %v1535, %v1536
      %v1538 = vrot.slane %v1455, 7
      %v1539 = vrot.slane %v1456, 7
      %v1540 = vsel %vm1507, %v1538, %v1539
      %v1541 = vrot.slane %v1457, 7
      %v1542 = vrot.slane %v1458, 7
      %v1543 = vsel %vm1507, %v1541, %v1542
      %v1544 = vrot.slane %v1459, 7
      %v1545 = vrot.slane %v1460, 7
      %v1546 = vsel %vm1507, %v1544, %v1545
      %v1547 = vrot.slane %v1461, 7
      %v1548 = vrot.slane %v1462, 7
      %v1549 = vsel %vm1507, %v1547, %v1548
      %v1550 = vrot.slane %v1463, 7
      %v1551 = vrot.slane %v1464, 7
      %v1552 = vsel %vm1507, %v1550, %v1551
      %v1553 = vrot.slane %v1465, 7
      %v1554 = vrot.slane %v1466, 7
      %v1555 = vsel %vm1507, %v1553, %v1554
      %v1556 = vrot.slane %v1467, 7
      %v1557 = vrot.slane %v1468, 7
      %v1558 = vsel %vm1507, %v1556, %v1557
      %v1559 = vrot.slane %v1469, 7
      %v1560 = vrot.slane %v1470, 7
      %v1561 = vsel %vm1507, %v1559, %v1560
      %v1580 = vsel %vm1507, 0.0, %v1508
      %v1581 = vsel %vm1507, 0.0, %v1511
      %v1582 = vsel %vm1507, 0.0, %v1514
      %v1583 = vsel %vm1507, 0.0, %v1517
      %v1584 = vsel %vm1507, 0.0, %v1520
      %v1585 = vsel %vm1507, 0.0, %v1523
      %v1586 = vsel %vm1507, 0.0, %v1526
      %v1587 = vsel %vm1507, 0.0, %v1529
      %v1588 = vsel %vm1507, 0.0, %v1532
      %v1589 = vsel %vm1507, 0.0, %v1535
      %v1590 = vsel %vm1507, 0.0, %v1538
      %v1591 = vsel %vm1507, 0.0, %v1541
      %v1592 = vsel %vm1507, 0.0, %v1544
      %v1593 = vsel %vm1507, 0.0, %v1547
      %v1594 = vsel %vm1507, 0.0, %v1550
      %v1595 = vsel %vm1507, 0.0, %v1553
      %v1596 = vsel %vm1507, 0.0, %v1556
      %v1597 = vsel %vm1507, 0.0, %v1559
      %vm1598 = vcmask 1046528
      %v1599 = vrot.slane %v1435, 1
      %v1600 = vrot.slane %v1436, 1
      %v1601 = vsel %vm1598, %v1599, %v1600
      %v1602 = vrot.slane %v1437, 1
      %v1603 = vrot.slane %v1438, 1
      %v1604 = vsel %vm1598, %v1602, %v1603
      %v1605 = vrot.slane %v1439, 1
      %v1606 = vrot.slane %v1440, 1
      %v1607 = vsel %vm1598, %v1605, %v1606
      %v1608 = vrot.slane %v1441, 1
      %v1609 = vrot.slane %v1442, 1
      %v1610 = vsel %vm1598, %v1608, %v1609
      %v1611 = vrot.slane %v1443, 1
      %v1612 = vrot.slane %v1444, 1
      %v1613 = vsel %vm1598, %v1611, %v1612
      %v1614 = vrot.slane %v1445, 1
      %v1615 = vrot.slane %v1446, 1
      %v1616 = vsel %vm1598, %v1614, %v1615
      %v1617 = vrot.slane %v1447, 1
      %v1618 = vrot.slane %v1448, 1
      %v1619 = vsel %vm1598, %v1617, %v1618
      %v1620 = vrot.slane %v1449, 1
      %v1621 = vrot.slane %v1450, 1
      %v1622 = vsel %vm1598, %v1620, %v1621
      %v1623 = vrot.slane %v1451, 1
      %v1624 = vrot.slane %v1452, 1
      %v1625 = vsel %vm1598, %v1623, %v1624
      %v1626 = vrot.slane %v1453, 1
      %v1627 = vrot.slane %v1454, 1
      %v1628 = vsel %vm1598, %v1626, %v1627
      %v1629 = vrot.slane %v1455, 1
      %v1630 = vrot.slane %v1456, 1
      %v1631 = vsel %vm1598, %v1629, %v1630
      %v1632 = vrot.slane %v1457, 1
      %v1633 = vrot.slane %v1458, 1
      %v1634 = vsel %vm1598, %v1632, %v1633
      %v1635 = vrot.slane %v1459, 1
      %v1636 = vrot.slane %v1460, 1
      %v1637 = vsel %vm1598, %v1635, %v1636
      %v1638 = vrot.slane %v1461, 1
      %v1639 = vrot.slane %v1462, 1
      %v1640 = vsel %vm1598, %v1638, %v1639
      %v1641 = vrot.slane %v1463, 1
      %v1642 = vrot.slane %v1464, 1
      %v1643 = vsel %vm1598, %v1641, %v1642
      %v1644 = vrot.slane %v1465, 1
      %v1645 = vrot.slane %v1466, 1
      %v1646 = vsel %vm1598, %v1644, %v1645
      %v1647 = vrot.slane %v1467, 1
      %v1648 = vrot.slane %v1468, 1
      %v1649 = vsel %vm1598, %v1647, %v1648
      %v1650 = vrot.slane %v1469, 1
      %v1651 = vrot.slane %v1470, 1
      %v1652 = vsel %vm1598, %v1650, %v1651
      %v1671 = vsel %vm1598, %v1600, 0.0
      %v1672 = vsel %vm1598, %v1603, 0.0
      %v1673 = vsel %vm1598, %v1606, 0.0
      %v1674 = vsel %vm1598, %v1609, 0.0
      %v1675 = vsel %vm1598, %v1612, 0.0
      %v1676 = vsel %vm1598, %v1615, 0.0
      %v1677 = vsel %vm1598, %v1618, 0.0
      %v1678 = vsel %vm1598, %v1621, 0.0
      %v1679 = vsel %vm1598, %v1624, 0.0
      %v1680 = vsel %vm1598, %v1627, 0.0
      %v1681 = vsel %vm1598, %v1630, 0.0
      %v1682 = vsel %vm1598, %v1633, 0.0
      %v1683 = vsel %vm1598, %v1636, 0.0
      %v1684 = vsel %vm1598, %v1639, 0.0
      %v1685 = vsel %vm1598, %v1642, 0.0
      %v1686 = vsel %vm1598, %v1645, 0.0
      %v1687 = vsel %vm1598, %v1648, 0.0
      %v1688 = vsel %vm1598, %v1651, 0.0
      %v1689 = vsel %vm311, %v1435, 0
      %v1691 = vsel %vm311, %v1436, 0
      %v1693 = vsel %vm311, %v1437, 0
      %v1695 = vsel %vm311, %v1438, 0
      %v1697 = vsel %vm311, %v1439, 0
      %v1699 = vsel %vm311, %v1440, 0
      %v1701 = vsel %vm311, %v1441, 0
      %v1703 = vsel %vm311, %v1442, 0
      %v1705 = vsel %vm311, %v1443, 0
      %v1707 = vsel %vm311, %v1444, 0
      %v1709 = vsel %vm311, %v1445, 0
      %v1711 = vsel %vm311, %v1446, 0
      %v1713 = vsel %vm311, %v1447, 0
      %v1715 = vsel %vm311, %v1448, 0
      %v1717 = vsel %vm311, %v1449, 0
      %v1719 = vsel %vm311, %v1450, 0
      %v1721 = vsel %vm311, %v1451, 0
      %v1723 = vsel %vm311, %v1452, 0
      %v1725 = vsel %vm311, %v1453, 0
      %v1727 = vsel %vm311, %v1454, 0
      %v1729 = vsel %vm311, %v1455, 0
      %v1731 = vsel %vm311, %v1456, 0
      %v1733 = vsel %vm311, %v1457, 0
      %v1735 = vsel %vm311, %v1458, 0
      %v1737 = vsel %vm311, %v1459, 0
      %v1739 = vsel %vm311, %v1460, 0
      %v1741 = vsel %vm311, %v1461, 0
      %v1743 = vsel %vm311, %v1462, 0
      %v1745 = vsel %vm311, %v1463, 0
      %v1747 = vsel %vm311, %v1464, 0
      %v1749 = vsel %vm311, %v1465, 0
      %v1751 = vsel %vm311, %v1466, 0
      %1753 = vmatpush.msra.mxu0 0.0
      %1754 = vmatpush.msra.mxu0 0.0
      %1755 = vmatpush.msra.mxu0 0.0
      %1756 = vmatpush.msra.mxu0 0.0
      %1757 = vmatpush.msra.mxu0 0.0
      %1758 = vmatpush.msra.mxu0 0.0
      %1759 = vmatpush.msra.mxu0 0.0
      %1760 = vmatpush.msra.mxu0 0.0
      %1761 = vmatpush.msra.mxu0 %v1375
      %1762 = vmatpush.msra.mxu0 %v1374
      %1763 = vmatpush.msra.mxu0 %v1373
      %1764 = vmatpush.msra.mxu0 %v1372
      %1765 = vmatpush.msra.mxu0 %v1371
      %1766 = vmatpush.msra.mxu0 %v1370
      %1767 = vmatpush.msra.mxu0 %v1369
      %1768 = vmatpush.msra.mxu0 %v1368
      %1769 = vmatmul.f32.gmra.mxu0 %v1689
      %v1770 = vpop.f32.mrf.mxu0
      %v1771 = vadd.f32 0.0, %v1770
      %1772 = vmatmul.f32.gmra.mxu0 %v1691
      %v1773 = vpop.f32.mrf.mxu0
      %v1774 = vadd.f32 0.0, %v1773
      %1775 = vmatmul.f32.gmra.mxu0 %v1693
      %v1776 = vpop.f32.mrf.mxu0
      %v1777 = vadd.f32 0.0, %v1776
      %1778 = vmatmul.f32.gmra.mxu0 %v1695
      %v1779 = vpop.f32.mrf.mxu0
      %v1780 = vadd.f32 0.0, %v1779
      %1781 = vmatmul.f32.gmra.mxu0 %v1697
      %v1782 = vpop.f32.mrf.mxu0
      %v1783 = vadd.f32 0.0, %v1782
      %1784 = vmatmul.f32.gmra.mxu0 %v1699
      %v1785 = vpop.f32.mrf.mxu0
      %v1786 = vadd.f32 0.0, %v1785
      %1787 = vmatmul.f32.gmra.mxu0 %v1701
      %v1788 = vpop.f32.mrf.mxu0
      %v1789 = vadd.f32 0.0, %v1788
      %1790 = vmatmul.f32.gmra.mxu0 %v1703
      %v1791 = vpop.f32.mrf.mxu0
      %v1792 = vadd.f32 0.0, %v1791
      %1793 = vmatmul.f32.gmra.mxu0 %v1705
      %v1794 = vpop.f32.mrf.mxu0
      %v1795 = vadd.f32 0.0, %v1794
      %1796 = vmatmul.f32.gmra.mxu0 %v1707
      %v1797 = vpop.f32.mrf.mxu0
      %v1798 = vadd.f32 0.0, %v1797
      %1799 = vmatmul.f32.gmra.mxu0 %v1709
      %v1800 = vpop.f32.mrf.mxu0
      %v1801 = vadd.f32 0.0, %v1800
      %1802 = vmatmul.f32.gmra.mxu0 %v1711
      %v1803 = vpop.f32.mrf.mxu0
      %v1804 = vadd.f32 0.0, %v1803
      %1805 = vmatmul.f32.gmra.mxu0 %v1713
      %v1806 = vpop.f32.mrf.mxu0
      %v1807 = vadd.f32 0.0, %v1806
      %1808 = vmatmul.f32.gmra.mxu0 %v1715
      %v1809 = vpop.f32.mrf.mxu0
      %v1810 = vadd.f32 0.0, %v1809
      %1811 = vmatmul.f32.gmra.mxu0 %v1717
      %v1812 = vpop.f32.mrf.mxu0
      %v1813 = vadd.f32 0.0, %v1812
      %1814 = vmatmul.f32.gmra.mxu0 %v1719
      %v1815 = vpop.f32.mrf.mxu0
      %v1816 = vadd.f32 0.0, %v1815
      %1817 = vmatmul.f32.gmra.mxu0 %v1721
      %v1818 = vpop.f32.mrf.mxu0
      %v1819 = vadd.f32 0.0, %v1818
      %1820 = vmatmul.f32.gmra.mxu0 %v1723
      %v1821 = vpop.f32.mrf.mxu0
      %v1822 = vadd.f32 0.0, %v1821
      %1823 = vmatmul.f32.gmra.mxu0 %v1725
      %v1824 = vpop.f32.mrf.mxu0
      %v1825 = vadd.f32 0.0, %v1824
      %1826 = vmatmul.f32.gmra.mxu0 %v1727
      %v1827 = vpop.f32.mrf.mxu0
      %v1828 = vadd.f32 0.0, %v1827
      %1829 = vmatmul.f32.gmra.mxu0 %v1729
      %v1830 = vpop.f32.mrf.mxu0
      %v1831 = vadd.f32 0.0, %v1830
      %1832 = vmatmul.f32.gmra.mxu0 %v1731
      %v1833 = vpop.f32.mrf.mxu0
      %v1834 = vadd.f32 0.0, %v1833
      %1835 = vmatmul.f32.gmra.mxu0 %v1733
      %v1836 = vpop.f32.mrf.mxu0
      %v1837 = vadd.f32 0.0, %v1836
      %1838 = vmatmul.f32.gmra.mxu0 %v1735
      %v1839 = vpop.f32.mrf.mxu0
      %v1840 = vadd.f32 0.0, %v1839
      %1841 = vmatmul.f32.gmra.mxu0 %v1737
      %v1842 = vpop.f32.mrf.mxu0
      %v1843 = vadd.f32 0.0, %v1842
      %1844 = vmatmul.f32.gmra.mxu0 %v1739
      %v1845 = vpop.f32.mrf.mxu0
      %v1846 = vadd.f32 0.0, %v1845
      %1847 = vmatmul.f32.gmra.mxu0 %v1741
      %v1848 = vpop.f32.mrf.mxu0
      %v1849 = vadd.f32 0.0, %v1848
      %1850 = vmatmul.f32.gmra.mxu0 %v1743
      %v1851 = vpop.f32.mrf.mxu0
      %v1852 = vadd.f32 0.0, %v1851
      %1853 = vmatmul.f32.gmra.mxu0 %v1745
      %v1854 = vpop.f32.mrf.mxu0
      %v1855 = vadd.f32 0.0, %v1854
      %1856 = vmatmul.f32.gmra.mxu0 %v1747
      %v1857 = vpop.f32.mrf.mxu0
      %v1858 = vadd.f32 0.0, %v1857
      %1859 = vmatmul.f32.gmra.mxu0 %v1749
      %v1860 = vpop.f32.mrf.mxu0
      %v1861 = vadd.f32 0.0, %v1860
      %1862 = vmatmul.f32.gmra.mxu0 %v1751
      %v1863 = vpop.f32.mrf.mxu0
      %v1864 = vadd.f32 0.0, %v1863
      %1865 = vdwg.mxu0
      %v1867 = vsel %vm311, %v1580, 0
      %v1869 = vsel %vm311, %v1510, 0
      %v1872 = vsel %vm311, %v1581, 0
      %v1874 = vsel %vm311, %v1513, 0
      %v1877 = vsel %vm311, %v1582, 0
      %v1879 = vsel %vm311, %v1516, 0
      %v1882 = vsel %vm311, %v1583, 0
      %v1884 = vsel %vm311, %v1519, 0
      %v1887 = vsel %vm311, %v1584, 0
      %v1889 = vsel %vm311, %v1522, 0
      %v1892 = vsel %vm311, %v1585, 0
      %v1894 = vsel %vm311, %v1525, 0
      %v1897 = vsel %vm311, %v1586, 0
      %v1899 = vsel %vm311, %v1528, 0
      %v1902 = vsel %vm311, %v1587, 0
      %v1904 = vsel %vm311, %v1531, 0
      %v1907 = vsel %vm311, %v1588, 0
      %v1909 = vsel %vm311, %v1534, 0
      %v1912 = vsel %vm311, %v1589, 0
      %v1914 = vsel %vm311, %v1537, 0
      %v1917 = vsel %vm311, %v1590, 0
      %v1919 = vsel %vm311, %v1540, 0
      %v1922 = vsel %vm311, %v1591, 0
      %v1924 = vsel %vm311, %v1543, 0
      %v1927 = vsel %vm311, %v1592, 0
      %v1929 = vsel %vm311, %v1546, 0
      %v1932 = vsel %vm311, %v1593, 0
      %v1934 = vsel %vm311, %v1549, 0
      %v1937 = vsel %vm311, %v1594, 0
      %v1939 = vsel %vm311, %v1552, 0
      %v1942 = vsel %vm311, %v1595, 0
      %v1944 = vsel %vm311, %v1555, 0
      %1946 = vmatpush.msra.mxu0 0.0
      %1947 = vmatpush.msra.mxu0 0.0
      %1948 = vmatpush.msra.mxu0 0.0
      %1949 = vmatpush.msra.mxu0 0.0
      %1950 = vmatpush.msra.mxu0 0.0
      %1951 = vmatpush.msra.mxu0 0.0
      %1952 = vmatpush.msra.mxu0 0.0
      %1953 = vmatpush.msra.mxu0 0.0
      %1954 = vmatpush.msra.mxu0 %v1367
      %1955 = vmatpush.msra.mxu0 %v1366
      %1956 = vmatpush.msra.mxu0 %v1365
      %1957 = vmatpush.msra.mxu0 %v1364
      %1958 = vmatpush.msra.mxu0 %v1363
      %1959 = vmatpush.msra.mxu0 %v1362
      %1960 = vmatpush.msra.mxu0 %v1361
      %1961 = vmatpush.msra.mxu0 %v1360
      %1962 = vmatmul.f32.gmra.mxu0 %v1867
      %v1963 = vpop.f32.mrf.mxu0
      %v1964 = vadd.f32 %v1771, %v1963
      %1965 = vmatmul.f32.gmra.mxu0 %v1869
      %v1966 = vpop.f32.mrf.mxu0
      %v1967 = vadd.f32 %v1774, %v1966
      %1968 = vmatmul.f32.gmra.mxu0 %v1872
      %v1969 = vpop.f32.mrf.mxu0
      %v1970 = vadd.f32 %v1777, %v1969
      %1971 = vmatmul.f32.gmra.mxu0 %v1874
      %v1972 = vpop.f32.mrf.mxu0
      %v1973 = vadd.f32 %v1780, %v1972
      %1974 = vmatmul.f32.gmra.mxu0 %v1877
      %v1975 = vpop.f32.mrf.mxu0
      %v1976 = vadd.f32 %v1783, %v1975
      %1977 = vmatmul.f32.gmra.mxu0 %v1879
      %v1978 = vpop.f32.mrf.mxu0
      %v1979 = vadd.f32 %v1786, %v1978
      %1980 = vmatmul.f32.gmra.mxu0 %v1882
      %v1981 = vpop.f32.mrf.mxu0
      %v1982 = vadd.f32 %v1789, %v1981
      %1983 = vmatmul.f32.gmra.mxu0 %v1884
      %v1984 = vpop.f32.mrf.mxu0
      %v1985 = vadd.f32 %v1792, %v1984
      %1986 = vmatmul.f32.gmra.mxu0 %v1887
      %v1987 = vpop.f32.mrf.mxu0
      %v1988 = vadd.f32 %v1795, %v1987
      %1989 = vmatmul.f32.gmra.mxu0 %v1889
      %v1990 = vpop.f32.mrf.mxu0
      %v1991 = vadd.f32 %v1798, %v1990
      %1992 = vmatmul.f32.gmra.mxu0 %v1892
      %v1993 = vpop.f32.mrf.mxu0
      %v1994 = vadd.f32 %v1801, %v1993
      %1995 = vmatmul.f32.gmra.mxu0 %v1894
      %v1996 = vpop.f32.mrf.mxu0
      %v1997 = vadd.f32 %v1804, %v1996
      %1998 = vmatmul.f32.gmra.mxu0 %v1897
      %v1999 = vpop.f32.mrf.mxu0
      %v2000 = vadd.f32 %v1807, %v1999
      %2001 = vmatmul.f32.gmra.mxu0 %v1899
      %v2002 = vpop.f32.mrf.mxu0
      %v2003 = vadd.f32 %v1810, %v2002
      %2004 = vmatmul.f32.gmra.mxu0 %v1902
      %v2005 = vpop.f32.mrf.mxu0
      %v2006 = vadd.f32 %v1813, %v2005
      %2007 = vmatmul.f32.gmra.mxu0 %v1904
      %v2008 = vpop.f32.mrf.mxu0
      %v2009 = vadd.f32 %v1816, %v2008
      %2010 = vmatmul.f32.gmra.mxu0 %v1907
      %v2011 = vpop.f32.mrf.mxu0
      %v2012 = vadd.f32 %v1819, %v2011
      %2013 = vmatmul.f32.gmra.mxu0 %v1909
      %v2014 = vpop.f32.mrf.mxu0
      %v2015 = vadd.f32 %v1822, %v2014
      %2016 = vmatmul.f32.gmra.mxu0 %v1912
      %v2017 = vpop.f32.mrf.mxu0
      %v2018 = vadd.f32 %v1825, %v2017
      %2019 = vmatmul.f32.gmra.mxu0 %v1914
      %v2020 = vpop.f32.mrf.mxu0
      %v2021 = vadd.f32 %v1828, %v2020
      %2022 = vmatmul.f32.gmra.mxu0 %v1917
      %v2023 = vpop.f32.mrf.mxu0
      %v2024 = vadd.f32 %v1831, %v2023
      %2025 = vmatmul.f32.gmra.mxu0 %v1919
      %v2026 = vpop.f32.mrf.mxu0
      %v2027 = vadd.f32 %v1834, %v2026
      %2028 = vmatmul.f32.gmra.mxu0 %v1922
      %v2029 = vpop.f32.mrf.mxu0
      %v2030 = vadd.f32 %v1837, %v2029
      %2031 = vmatmul.f32.gmra.mxu0 %v1924
      %v2032 = vpop.f32.mrf.mxu0
      %v2033 = vadd.f32 %v1840, %v2032
      %2034 = vmatmul.f32.gmra.mxu0 %v1927
      %v2035 = vpop.f32.mrf.mxu0
      %v2036 = vadd.f32 %v1843, %v2035
      %2037 = vmatmul.f32.gmra.mxu0 %v1929
      %v2038 = vpop.f32.mrf.mxu0
      %v2039 = vadd.f32 %v1846, %v2038
      %2040 = vmatmul.f32.gmra.mxu0 %v1932
      %v2041 = vpop.f32.mrf.mxu0
      %v2042 = vadd.f32 %v1849, %v2041
      %2043 = vmatmul.f32.gmra.mxu0 %v1934
      %v2044 = vpop.f32.mrf.mxu0
      %v2045 = vadd.f32 %v1852, %v2044
      %2046 = vmatmul.f32.gmra.mxu0 %v1937
      %v2047 = vpop.f32.mrf.mxu0
      %v2048 = vadd.f32 %v1855, %v2047
      %2049 = vmatmul.f32.gmra.mxu0 %v1939
      %v2050 = vpop.f32.mrf.mxu0
      %v2051 = vadd.f32 %v1858, %v2050
      %2052 = vmatmul.f32.gmra.mxu0 %v1942
      %v2053 = vpop.f32.mrf.mxu0
      %v2054 = vadd.f32 %v1861, %v2053
      %2055 = vmatmul.f32.gmra.mxu0 %v1944
      %v2056 = vpop.f32.mrf.mxu0
      %v2057 = vadd.f32 %v1864, %v2056
      %2058 = vdwg.mxu0
      %v2059 = vsel %vm311, %v1601, 0
      %v2062 = vsel %vm311, %v1671, 0
      %v2064 = vsel %vm311, %v1604, 0
      %v2067 = vsel %vm311, %v1672, 0
      %v2069 = vsel %vm311, %v1607, 0
      %v2072 = vsel %vm311, %v1673, 0
      %v2074 = vsel %vm311, %v1610, 0
      %v2077 = vsel %vm311, %v1674, 0
      %v2079 = vsel %vm311, %v1613, 0
      %v2082 = vsel %vm311, %v1675, 0
      %v2084 = vsel %vm311, %v1616, 0
      %v2087 = vsel %vm311, %v1676, 0
      %v2089 = vsel %vm311, %v1619, 0
      %v2092 = vsel %vm311, %v1677, 0
      %v2094 = vsel %vm311, %v1622, 0
      %v2097 = vsel %vm311, %v1678, 0
      %v2099 = vsel %vm311, %v1625, 0
      %v2102 = vsel %vm311, %v1679, 0
      %v2104 = vsel %vm311, %v1628, 0
      %v2107 = vsel %vm311, %v1680, 0
      %v2109 = vsel %vm311, %v1631, 0
      %v2112 = vsel %vm311, %v1681, 0
      %v2114 = vsel %vm311, %v1634, 0
      %v2117 = vsel %vm311, %v1682, 0
      %v2119 = vsel %vm311, %v1637, 0
      %v2122 = vsel %vm311, %v1683, 0
      %v2124 = vsel %vm311, %v1640, 0
      %v2127 = vsel %vm311, %v1684, 0
      %v2129 = vsel %vm311, %v1643, 0
      %v2132 = vsel %vm311, %v1685, 0
      %v2134 = vsel %vm311, %v1646, 0
      %v2137 = vsel %vm311, %v1686, 0
      %2139 = vmatpush.msra.mxu0 0.0
      %2140 = vmatpush.msra.mxu0 0.0
      %2141 = vmatpush.msra.mxu0 0.0
      %2142 = vmatpush.msra.mxu0 0.0
      %2143 = vmatpush.msra.mxu0 0.0
      %2144 = vmatpush.msra.mxu0 0.0
      %2145 = vmatpush.msra.mxu0 0.0
      %2146 = vmatpush.msra.mxu0 0.0
      %2147 = vmatpush.msra.mxu0 %v1383
      %2148 = vmatpush.msra.mxu0 %v1382
      %2149 = vmatpush.msra.mxu0 %v1381
      %2150 = vmatpush.msra.mxu0 %v1380
      %2151 = vmatpush.msra.mxu0 %v1379
      %2152 = vmatpush.msra.mxu0 %v1378
      %2153 = vmatpush.msra.mxu0 %v1377
      %2154 = vmatpush.msra.mxu0 %v1376
      %2155 = vmatmul.f32.gmra.mxu0 %v2059
      %v2156 = vpop.f32.mrf.mxu0
      %v2157 = vadd.f32 0.0, %v2156
      %2158 = vmatmul.f32.gmra.mxu0 %v2062
      %v2159 = vpop.f32.mrf.mxu0
      %v2160 = vadd.f32 0.0, %v2159
      %2161 = vmatmul.f32.gmra.mxu0 %v2064
      %v2162 = vpop.f32.mrf.mxu0
      %v2163 = vadd.f32 0.0, %v2162
      %2164 = vmatmul.f32.gmra.mxu0 %v2067
      %v2165 = vpop.f32.mrf.mxu0
      %v2166 = vadd.f32 0.0, %v2165
      %2167 = vmatmul.f32.gmra.mxu0 %v2069
      %v2168 = vpop.f32.mrf.mxu0
      %v2169 = vadd.f32 0.0, %v2168
      %2170 = vmatmul.f32.gmra.mxu0 %v2072
      %v2171 = vpop.f32.mrf.mxu0
      %v2172 = vadd.f32 0.0, %v2171
      %2173 = vmatmul.f32.gmra.mxu0 %v2074
      %v2174 = vpop.f32.mrf.mxu0
      %v2175 = vadd.f32 0.0, %v2174
      %2176 = vmatmul.f32.gmra.mxu0 %v2077
      %v2177 = vpop.f32.mrf.mxu0
      %v2178 = vadd.f32 0.0, %v2177
      %2179 = vmatmul.f32.gmra.mxu0 %v2079
      %v2180 = vpop.f32.mrf.mxu0
      %v2181 = vadd.f32 0.0, %v2180
      %2182 = vmatmul.f32.gmra.mxu0 %v2082
      %v2183 = vpop.f32.mrf.mxu0
      %v2184 = vadd.f32 0.0, %v2183
      %2185 = vmatmul.f32.gmra.mxu0 %v2084
      %v2186 = vpop.f32.mrf.mxu0
      %v2187 = vadd.f32 0.0, %v2186
      %2188 = vmatmul.f32.gmra.mxu0 %v2087
      %v2189 = vpop.f32.mrf.mxu0
      %v2190 = vadd.f32 0.0, %v2189
      %2191 = vmatmul.f32.gmra.mxu0 %v2089
      %v2192 = vpop.f32.mrf.mxu0
      %v2193 = vadd.f32 0.0, %v2192
      %2194 = vmatmul.f32.gmra.mxu0 %v2092
      %v2195 = vpop.f32.mrf.mxu0
      %v2196 = vadd.f32 0.0, %v2195
      %2197 = vmatmul.f32.gmra.mxu0 %v2094
      %v2198 = vpop.f32.mrf.mxu0
      %v2199 = vadd.f32 0.0, %v2198
      %2200 = vmatmul.f32.gmra.mxu0 %v2097
      %v2201 = vpop.f32.mrf.mxu0
      %v2202 = vadd.f32 0.0, %v2201
      %2203 = vmatmul.f32.gmra.mxu0 %v2099
      %v2204 = vpop.f32.mrf.mxu0
      %v2205 = vadd.f32 0.0, %v2204
      %2206 = vmatmul.f32.gmra.mxu0 %v2102
      %v2207 = vpop.f32.mrf.mxu0
      %v2208 = vadd.f32 0.0, %v2207
      %2209 = vmatmul.f32.gmra.mxu0 %v2104
      %v2210 = vpop.f32.mrf.mxu0
      %v2211 = vadd.f32 0.0, %v2210
      %2212 = vmatmul.f32.gmra.mxu0 %v2107
      %v2213 = vpop.f32.mrf.mxu0
      %v2214 = vadd.f32 0.0, %v2213
      %2215 = vmatmul.f32.gmra.mxu0 %v2109
      %v2216 = vpop.f32.mrf.mxu0
      %v2217 = vadd.f32 0.0, %v2216
      %2218 = vmatmul.f32.gmra.mxu0 %v2112
      %v2219 = vpop.f32.mrf.mxu0
      %v2220 = vadd.f32 0.0, %v2219
      %2221 = vmatmul.f32.gmra.mxu0 %v2114
      %v2222 = vpop.f32.mrf.mxu0
      %v2223 = vadd.f32 0.0, %v2222
      %2224 = vmatmul.f32.gmra.mxu0 %v2117
      %v2225 = vpop.f32.mrf.mxu0
      %v2226 = vadd.f32 0.0, %v2225
      %2227 = vmatmul.f32.gmra.mxu0 %v2119
      %v2228 = vpop.f32.mrf.mxu0
      %v2229 = vadd.f32 0.0, %v2228
      %2230 = vmatmul.f32.gmra.mxu0 %v2122
      %v2231 = vpop.f32.mrf.mxu0
      %v2232 = vadd.f32 0.0, %v2231
      %2233 = vmatmul.f32.gmra.mxu0 %v2124
      %v2234 = vpop.f32.mrf.mxu0
      %v2235 = vadd.f32 0.0, %v2234
      %2236 = vmatmul.f32.gmra.mxu0 %v2127
      %v2237 = vpop.f32.mrf.mxu0
      %v2238 = vadd.f32 0.0, %v2237
      %2239 = vmatmul.f32.gmra.mxu0 %v2129
      %v2240 = vpop.f32.mrf.mxu0
      %v2241 = vadd.f32 0.0, %v2240
      %2242 = vmatmul.f32.gmra.mxu0 %v2132
      %v2243 = vpop.f32.mrf.mxu0
      %v2244 = vadd.f32 0.0, %v2243
      %2245 = vmatmul.f32.gmra.mxu0 %v2134
      %v2246 = vpop.f32.mrf.mxu0
      %v2247 = vadd.f32 0.0, %v2246
      %2248 = vmatmul.f32.gmra.mxu0 %v2137
      %v2249 = vpop.f32.mrf.mxu0
      %v2250 = vadd.f32 0.0, %v2249
      %2251 = vdwg.mxu0
      %v2252 = vadd.f32 %v1964, %v2157
      %v2253 = vadd.f32 %v1967, %v2160
      %v2254 = vadd.f32 %v1970, %v2163
      %v2255 = vadd.f32 %v1973, %v2166
      %v2256 = vadd.f32 %v1976, %v2169
      %v2257 = vadd.f32 %v1979, %v2172
      %v2258 = vadd.f32 %v1982, %v2175
      %v2259 = vadd.f32 %v1985, %v2178
      %v2260 = vadd.f32 %v1988, %v2181
      %v2261 = vadd.f32 %v1991, %v2184
      %v2262 = vadd.f32 %v1994, %v2187
      %v2263 = vadd.f32 %v1997, %v2190
      %v2264 = vadd.f32 %v2000, %v2193
      %v2265 = vadd.f32 %v2003, %v2196
      %v2266 = vadd.f32 %v2006, %v2199
      %v2267 = vadd.f32 %v2009, %v2202
      %v2268 = vadd.f32 %v2012, %v2205
      %v2269 = vadd.f32 %v2015, %v2208
      %v2270 = vadd.f32 %v2018, %v2211
      %v2271 = vadd.f32 %v2021, %v2214
      %v2272 = vadd.f32 %v2024, %v2217
      %v2273 = vadd.f32 %v2027, %v2220
      %v2274 = vadd.f32 %v2030, %v2223
      %v2275 = vadd.f32 %v2033, %v2226
      %v2276 = vadd.f32 %v2036, %v2229
      %v2277 = vadd.f32 %v2039, %v2232
      %v2278 = vadd.f32 %v2042, %v2235
      %v2279 = vadd.f32 %v2045, %v2238
      %v2280 = vadd.f32 %v2048, %v2241
      %v2281 = vadd.f32 %v2051, %v2244
      %v2282 = vadd.f32 %v2054, %v2247
      %v2283 = vadd.f32 %v2057, %v2250
      %v2285 = vsel %vm311, %v1596, 0
      %v2287 = vsel %vm311, %v1558, 0
      %2289 = vmatpush.msra.mxu0 0.0
      %2290 = vmatpush.msra.mxu0 0.0
      %2291 = vmatpush.msra.mxu0 0.0
      %2292 = vmatpush.msra.mxu0 0.0
      %2293 = vmatpush.msra.mxu0 0.0
      %2294 = vmatpush.msra.mxu0 0.0
      %2295 = vmatpush.msra.mxu0 0.0
      %2296 = vmatpush.msra.mxu0 0.0
      %2297 = vmatpush.msra.mxu0 %v1391
      %2298 = vmatpush.msra.mxu0 %v1390
      %2299 = vmatpush.msra.mxu0 %v1389
      %2300 = vmatpush.msra.mxu0 %v1388
      %2301 = vmatpush.msra.mxu0 %v1387
      %2302 = vmatpush.msra.mxu0 %v1386
      %2303 = vmatpush.msra.mxu0 %v1385
      %2304 = vmatpush.msra.mxu0 %v1384
      %2305 = vmatmul.f32.gmra.mxu0 %v1872
      %v2306 = vpop.f32.mrf.mxu0
      %v2307 = vadd.f32 0.0, %v2306
      %2308 = vmatmul.f32.gmra.mxu0 %v1874
      %v2309 = vpop.f32.mrf.mxu0
      %v2310 = vadd.f32 0.0, %v2309
      %2311 = vmatmul.f32.gmra.mxu0 %v1877
      %v2312 = vpop.f32.mrf.mxu0
      %v2313 = vadd.f32 0.0, %v2312
      %2314 = vmatmul.f32.gmra.mxu0 %v1879
      %v2315 = vpop.f32.mrf.mxu0
      %v2316 = vadd.f32 0.0, %v2315
      %2317 = vmatmul.f32.gmra.mxu0 %v1882
      %v2318 = vpop.f32.mrf.mxu0
      %v2319 = vadd.f32 0.0, %v2318
      %2320 = vmatmul.f32.gmra.mxu0 %v1884
      %v2321 = vpop.f32.mrf.mxu0
      %v2322 = vadd.f32 0.0, %v2321
      %2323 = vmatmul.f32.gmra.mxu0 %v1887
      %v2324 = vpop.f32.mrf.mxu0
      %v2325 = vadd.f32 0.0, %v2324
      %2326 = vmatmul.f32.gmra.mxu0 %v1889
      %v2327 = vpop.f32.mrf.mxu0
      %v2328 = vadd.f32 0.0, %v2327
      %2329 = vmatmul.f32.gmra.mxu0 %v1892
      %v2330 = vpop.f32.mrf.mxu0
      %v2331 = vadd.f32 0.0, %v2330
      %2332 = vmatmul.f32.gmra.mxu0 %v1894
      %v2333 = vpop.f32.mrf.mxu0
      %v2334 = vadd.f32 0.0, %v2333
      %2335 = vmatmul.f32.gmra.mxu0 %v1897
      %v2336 = vpop.f32.mrf.mxu0
      %v2337 = vadd.f32 0.0, %v2336
      %2338 = vmatmul.f32.gmra.mxu0 %v1899
      %v2339 = vpop.f32.mrf.mxu0
      %v2340 = vadd.f32 0.0, %v2339
      %2341 = vmatmul.f32.gmra.mxu0 %v1902
      %v2342 = vpop.f32.mrf.mxu0
      %v2343 = vadd.f32 0.0, %v2342
      %2344 = vmatmul.f32.gmra.mxu0 %v1904
      %v2345 = vpop.f32.mrf.mxu0
      %v2346 = vadd.f32 0.0, %v2345
      %2347 = vmatmul.f32.gmra.mxu0 %v1907
      %v2348 = vpop.f32.mrf.mxu0
      %v2349 = vadd.f32 0.0, %v2348
      %2350 = vmatmul.f32.gmra.mxu0 %v1909
      %v2351 = vpop.f32.mrf.mxu0
      %v2352 = vadd.f32 0.0, %v2351
      %2353 = vmatmul.f32.gmra.mxu0 %v1912
      %v2354 = vpop.f32.mrf.mxu0
      %v2355 = vadd.f32 0.0, %v2354
      %2356 = vmatmul.f32.gmra.mxu0 %v1914
      %v2357 = vpop.f32.mrf.mxu0
      %v2358 = vadd.f32 0.0, %v2357
      %2359 = vmatmul.f32.gmra.mxu0 %v1917
      %v2360 = vpop.f32.mrf.mxu0
      %v2361 = vadd.f32 0.0, %v2360
      %2362 = vmatmul.f32.gmra.mxu0 %v1919
      %v2363 = vpop.f32.mrf.mxu0
      %v2364 = vadd.f32 0.0, %v2363
      %2365 = vmatmul.f32.gmra.mxu0 %v1922
      %v2366 = vpop.f32.mrf.mxu0
      %v2367 = vadd.f32 0.0, %v2366
      %2368 = vmatmul.f32.gmra.mxu0 %v1924
      %v2369 = vpop.f32.mrf.mxu0
      %v2370 = vadd.f32 0.0, %v2369
      %2371 = vmatmul.f32.gmra.mxu0 %v1927
      %v2372 = vpop.f32.mrf.mxu0
      %v2373 = vadd.f32 0.0, %v2372
      %2374 = vmatmul.f32.gmra.mxu0 %v1929
      %v2375 = vpop.f32.mrf.mxu0
      %v2376 = vadd.f32 0.0, %v2375
      %2377 = vmatmul.f32.gmra.mxu0 %v1932
      %v2378 = vpop.f32.mrf.mxu0
      %v2379 = vadd.f32 0.0, %v2378
      %2380 = vmatmul.f32.gmra.mxu0 %v1934
      %v2381 = vpop.f32.mrf.mxu0
      %v2382 = vadd.f32 0.0, %v2381
      %2383 = vmatmul.f32.gmra.mxu0 %v1937
      %v2384 = vpop.f32.mrf.mxu0
      %v2385 = vadd.f32 0.0, %v2384
      %2386 = vmatmul.f32.gmra.mxu0 %v1939
      %v2387 = vpop.f32.mrf.mxu0
      %v2388 = vadd.f32 0.0, %v2387
      %2389 = vmatmul.f32.gmra.mxu0 %v1942
      %v2390 = vpop.f32.mrf.mxu0
      %v2391 = vadd.f32 0.0, %v2390
      %2392 = vmatmul.f32.gmra.mxu0 %v1944
      %v2393 = vpop.f32.mrf.mxu0
      %v2394 = vadd.f32 0.0, %v2393
      %2395 = vmatmul.f32.gmra.mxu0 %v2285
      %v2396 = vpop.f32.mrf.mxu0
      %v2397 = vadd.f32 0.0, %v2396
      %2398 = vmatmul.f32.gmra.mxu0 %v2287
      %v2399 = vpop.f32.mrf.mxu0
      %v2400 = vadd.f32 0.0, %v2399
      %2401 = vdwg.mxu0
      %v2402 = vadd.f32 %v2252, %v2307
      %v2403 = vadd.f32 %v2253, %v2310
      %v2404 = vadd.f32 %v2254, %v2313
      %v2405 = vadd.f32 %v2255, %v2316
      %v2406 = vadd.f32 %v2256, %v2319
      %v2407 = vadd.f32 %v2257, %v2322
      %v2408 = vadd.f32 %v2258, %v2325
      %v2409 = vadd.f32 %v2259, %v2328
      %v2410 = vadd.f32 %v2260, %v2331
      %v2411 = vadd.f32 %v2261, %v2334
      %v2412 = vadd.f32 %v2262, %v2337
      %v2413 = vadd.f32 %v2263, %v2340
      %v2414 = vadd.f32 %v2264, %v2343
      %v2415 = vadd.f32 %v2265, %v2346
      %v2416 = vadd.f32 %v2266, %v2349
      %v2417 = vadd.f32 %v2267, %v2352
      %v2418 = vadd.f32 %v2268, %v2355
      %v2419 = vadd.f32 %v2269, %v2358
      %v2420 = vadd.f32 %v2270, %v2361
      %v2421 = vadd.f32 %v2271, %v2364
      %v2422 = vadd.f32 %v2272, %v2367
      %v2423 = vadd.f32 %v2273, %v2370
      %v2424 = vadd.f32 %v2274, %v2373
      %v2425 = vadd.f32 %v2275, %v2376
      %v2426 = vadd.f32 %v2276, %v2379
      %v2427 = vadd.f32 %v2277, %v2382
      %v2428 = vadd.f32 %v2278, %v2385
      %v2429 = vadd.f32 %v2279, %v2388
      %v2430 = vadd.f32 %v2280, %v2391
      %v2431 = vadd.f32 %v2281, %v2394
      %v2432 = vadd.f32 %v2282, %v2397
      %v2433 = vadd.f32 %v2283, %v2400
      %v2434 = vsel %vm311, %v1467, 0
      %v2436 = vsel %vm311, %v1468, 0
      %2438 = vmatpush.msra.mxu0 0.0
      %2439 = vmatpush.msra.mxu0 0.0
      %2440 = vmatpush.msra.mxu0 0.0
      %2441 = vmatpush.msra.mxu0 0.0
      %2442 = vmatpush.msra.mxu0 0.0
      %2443 = vmatpush.msra.mxu0 0.0
      %2444 = vmatpush.msra.mxu0 0.0
      %2445 = vmatpush.msra.mxu0 0.0
      %2446 = vmatpush.msra.mxu0 %v1399
      %2447 = vmatpush.msra.mxu0 %v1398
      %2448 = vmatpush.msra.mxu0 %v1397
      %2449 = vmatpush.msra.mxu0 %v1396
      %2450 = vmatpush.msra.mxu0 %v1395
      %2451 = vmatpush.msra.mxu0 %v1394
      %2452 = vmatpush.msra.mxu0 %v1393
      %2453 = vmatpush.msra.mxu0 %v1392
      %2454 = vmatmul.f32.gmra.mxu0 %v1693
      %v2455 = vpop.f32.mrf.mxu0
      %v2456 = vadd.f32 0.0, %v2455
      %2457 = vmatmul.f32.gmra.mxu0 %v1695
      %v2458 = vpop.f32.mrf.mxu0
      %v2459 = vadd.f32 0.0, %v2458
      %2460 = vmatmul.f32.gmra.mxu0 %v1697
      %v2461 = vpop.f32.mrf.mxu0
      %v2462 = vadd.f32 0.0, %v2461
      %2463 = vmatmul.f32.gmra.mxu0 %v1699
      %v2464 = vpop.f32.mrf.mxu0
      %v2465 = vadd.f32 0.0, %v2464
      %2466 = vmatmul.f32.gmra.mxu0 %v1701
      %v2467 = vpop.f32.mrf.mxu0
      %v2468 = vadd.f32 0.0, %v2467
      %2469 = vmatmul.f32.gmra.mxu0 %v1703
      %v2470 = vpop.f32.mrf.mxu0
      %v2471 = vadd.f32 0.0, %v2470
      %2472 = vmatmul.f32.gmra.mxu0 %v1705
      %v2473 = vpop.f32.mrf.mxu0
      %v2474 = vadd.f32 0.0, %v2473
      %2475 = vmatmul.f32.gmra.mxu0 %v1707
      %v2476 = vpop.f32.mrf.mxu0
      %v2477 = vadd.f32 0.0, %v2476
      %2478 = vmatmul.f32.gmra.mxu0 %v1709
      %v2479 = vpop.f32.mrf.mxu0
      %v2480 = vadd.f32 0.0, %v2479
      %2481 = vmatmul.f32.gmra.mxu0 %v1711
      %v2482 = vpop.f32.mrf.mxu0
      %v2483 = vadd.f32 0.0, %v2482
      %2484 = vmatmul.f32.gmra.mxu0 %v1713
      %v2485 = vpop.f32.mrf.mxu0
      %v2486 = vadd.f32 0.0, %v2485
      %2487 = vmatmul.f32.gmra.mxu0 %v1715
      %v2488 = vpop.f32.mrf.mxu0
      %v2489 = vadd.f32 0.0, %v2488
      %2490 = vmatmul.f32.gmra.mxu0 %v1717
      %v2491 = vpop.f32.mrf.mxu0
      %v2492 = vadd.f32 0.0, %v2491
      %2493 = vmatmul.f32.gmra.mxu0 %v1719
      %v2494 = vpop.f32.mrf.mxu0
      %v2495 = vadd.f32 0.0, %v2494
      %2496 = vmatmul.f32.gmra.mxu0 %v1721
      %v2497 = vpop.f32.mrf.mxu0
      %v2498 = vadd.f32 0.0, %v2497
      %2499 = vmatmul.f32.gmra.mxu0 %v1723
      %v2500 = vpop.f32.mrf.mxu0
      %v2501 = vadd.f32 0.0, %v2500
      %2502 = vmatmul.f32.gmra.mxu0 %v1725
      %v2503 = vpop.f32.mrf.mxu0
      %v2504 = vadd.f32 0.0, %v2503
      %2505 = vmatmul.f32.gmra.mxu0 %v1727
      %v2506 = vpop.f32.mrf.mxu0
      %v2507 = vadd.f32 0.0, %v2506
      %2508 = vmatmul.f32.gmra.mxu0 %v1729
      %v2509 = vpop.f32.mrf.mxu0
      %v2510 = vadd.f32 0.0, %v2509
      %2511 = vmatmul.f32.gmra.mxu0 %v1731
      %v2512 = vpop.f32.mrf.mxu0
      %v2513 = vadd.f32 0.0, %v2512
      %2514 = vmatmul.f32.gmra.mxu0 %v1733
      %v2515 = vpop.f32.mrf.mxu0
      %v2516 = vadd.f32 0.0, %v2515
      %2517 = vmatmul.f32.gmra.mxu0 %v1735
      %v2518 = vpop.f32.mrf.mxu0
      %v2519 = vadd.f32 0.0, %v2518
      %2520 = vmatmul.f32.gmra.mxu0 %v1737
      %v2521 = vpop.f32.mrf.mxu0
      %v2522 = vadd.f32 0.0, %v2521
      %2523 = vmatmul.f32.gmra.mxu0 %v1739
      %v2524 = vpop.f32.mrf.mxu0
      %v2525 = vadd.f32 0.0, %v2524
      %2526 = vmatmul.f32.gmra.mxu0 %v1741
      %v2527 = vpop.f32.mrf.mxu0
      %v2528 = vadd.f32 0.0, %v2527
      %2529 = vmatmul.f32.gmra.mxu0 %v1743
      %v2530 = vpop.f32.mrf.mxu0
      %v2531 = vadd.f32 0.0, %v2530
      %2532 = vmatmul.f32.gmra.mxu0 %v1745
      %v2533 = vpop.f32.mrf.mxu0
      %v2534 = vadd.f32 0.0, %v2533
      %2535 = vmatmul.f32.gmra.mxu0 %v1747
      %v2536 = vpop.f32.mrf.mxu0
      %v2537 = vadd.f32 0.0, %v2536
      %2538 = vmatmul.f32.gmra.mxu0 %v1749
      %v2539 = vpop.f32.mrf.mxu0
      %v2540 = vadd.f32 0.0, %v2539
      %2541 = vmatmul.f32.gmra.mxu0 %v1751
      %v2542 = vpop.f32.mrf.mxu0
      %v2543 = vadd.f32 0.0, %v2542
      %2544 = vmatmul.f32.gmra.mxu0 %v2434
      %v2545 = vpop.f32.mrf.mxu0
      %v2546 = vadd.f32 0.0, %v2545
      %2547 = vmatmul.f32.gmra.mxu0 %v2436
      %v2548 = vpop.f32.mrf.mxu0
      %v2549 = vadd.f32 0.0, %v2548
      %2550 = vdwg.mxu0
      %v2551 = vadd.f32 %v2402, %v2456
      %v2552 = vadd.f32 %v2403, %v2459
      %v2553 = vadd.f32 %v2404, %v2462
      %v2554 = vadd.f32 %v2405, %v2465
      %v2555 = vadd.f32 %v2406, %v2468
      %v2556 = vadd.f32 %v2407, %v2471
      %v2557 = vadd.f32 %v2408, %v2474
      %v2558 = vadd.f32 %v2409, %v2477
      %v2559 = vadd.f32 %v2410, %v2480
      %v2560 = vadd.f32 %v2411, %v2483
      %v2561 = vadd.f32 %v2412, %v2486
      %v2562 = vadd.f32 %v2413, %v2489
      %v2563 = vadd.f32 %v2414, %v2492
      %v2564 = vadd.f32 %v2415, %v2495
      %v2565 = vadd.f32 %v2416, %v2498
      %v2566 = vadd.f32 %v2417, %v2501
      %v2567 = vadd.f32 %v2418, %v2504
      %v2568 = vadd.f32 %v2419, %v2507
      %v2569 = vadd.f32 %v2420, %v2510
      %v2570 = vadd.f32 %v2421, %v2513
      %v2571 = vadd.f32 %v2422, %v2516
      %v2572 = vadd.f32 %v2423, %v2519
      %v2573 = vadd.f32 %v2424, %v2522
      %v2574 = vadd.f32 %v2425, %v2525
      %v2575 = vadd.f32 %v2426, %v2528
      %v2576 = vadd.f32 %v2427, %v2531
      %v2577 = vadd.f32 %v2428, %v2534
      %v2578 = vadd.f32 %v2429, %v2537
      %v2579 = vadd.f32 %v2430, %v2540
      %v2580 = vadd.f32 %v2431, %v2543
      %v2581 = vadd.f32 %v2432, %v2546
      %v2582 = vadd.f32 %v2433, %v2549
      %v2583 = vsel %vm311, %v1649, 0
      %v2586 = vsel %vm311, %v1687, 0
      %2588 = vmatpush.msra.mxu0 0.0
      %2589 = vmatpush.msra.mxu0 0.0
      %2590 = vmatpush.msra.mxu0 0.0
      %2591 = vmatpush.msra.mxu0 0.0
      %2592 = vmatpush.msra.mxu0 0.0
      %2593 = vmatpush.msra.mxu0 0.0
      %2594 = vmatpush.msra.mxu0 0.0
      %2595 = vmatpush.msra.mxu0 0.0
      %2596 = vmatpush.msra.mxu0 %v1407
      %2597 = vmatpush.msra.mxu0 %v1406
      %2598 = vmatpush.msra.mxu0 %v1405
      %2599 = vmatpush.msra.mxu0 %v1404
      %2600 = vmatpush.msra.mxu0 %v1403
      %2601 = vmatpush.msra.mxu0 %v1402
      %2602 = vmatpush.msra.mxu0 %v1401
      %2603 = vmatpush.msra.mxu0 %v1400
      %2604 = vmatmul.f32.gmra.mxu0 %v2064
      %v2605 = vpop.f32.mrf.mxu0
      %v2606 = vadd.f32 0.0, %v2605
      %2607 = vmatmul.f32.gmra.mxu0 %v2067
      %v2608 = vpop.f32.mrf.mxu0
      %v2609 = vadd.f32 0.0, %v2608
      %2610 = vmatmul.f32.gmra.mxu0 %v2069
      %v2611 = vpop.f32.mrf.mxu0
      %v2612 = vadd.f32 0.0, %v2611
      %2613 = vmatmul.f32.gmra.mxu0 %v2072
      %v2614 = vpop.f32.mrf.mxu0
      %v2615 = vadd.f32 0.0, %v2614
      %2616 = vmatmul.f32.gmra.mxu0 %v2074
      %v2617 = vpop.f32.mrf.mxu0
      %v2618 = vadd.f32 0.0, %v2617
      %2619 = vmatmul.f32.gmra.mxu0 %v2077
      %v2620 = vpop.f32.mrf.mxu0
      %v2621 = vadd.f32 0.0, %v2620
      %2622 = vmatmul.f32.gmra.mxu0 %v2079
      %v2623 = vpop.f32.mrf.mxu0
      %v2624 = vadd.f32 0.0, %v2623
      %2625 = vmatmul.f32.gmra.mxu0 %v2082
      %v2626 = vpop.f32.mrf.mxu0
      %v2627 = vadd.f32 0.0, %v2626
      %2628 = vmatmul.f32.gmra.mxu0 %v2084
      %v2629 = vpop.f32.mrf.mxu0
      %v2630 = vadd.f32 0.0, %v2629
      %2631 = vmatmul.f32.gmra.mxu0 %v2087
      %v2632 = vpop.f32.mrf.mxu0
      %v2633 = vadd.f32 0.0, %v2632
      %2634 = vmatmul.f32.gmra.mxu0 %v2089
      %v2635 = vpop.f32.mrf.mxu0
      %v2636 = vadd.f32 0.0, %v2635
      %2637 = vmatmul.f32.gmra.mxu0 %v2092
      %v2638 = vpop.f32.mrf.mxu0
      %v2639 = vadd.f32 0.0, %v2638
      %2640 = vmatmul.f32.gmra.mxu0 %v2094
      %v2641 = vpop.f32.mrf.mxu0
      %v2642 = vadd.f32 0.0, %v2641
      %2643 = vmatmul.f32.gmra.mxu0 %v2097
      %v2644 = vpop.f32.mrf.mxu0
      %v2645 = vadd.f32 0.0, %v2644
      %2646 = vmatmul.f32.gmra.mxu0 %v2099
      %v2647 = vpop.f32.mrf.mxu0
      %v2648 = vadd.f32 0.0, %v2647
      %2649 = vmatmul.f32.gmra.mxu0 %v2102
      %v2650 = vpop.f32.mrf.mxu0
      %v2651 = vadd.f32 0.0, %v2650
      %2652 = vmatmul.f32.gmra.mxu0 %v2104
      %v2653 = vpop.f32.mrf.mxu0
      %v2654 = vadd.f32 0.0, %v2653
      %2655 = vmatmul.f32.gmra.mxu0 %v2107
      %v2656 = vpop.f32.mrf.mxu0
      %v2657 = vadd.f32 0.0, %v2656
      %2658 = vmatmul.f32.gmra.mxu0 %v2109
      %v2659 = vpop.f32.mrf.mxu0
      %v2660 = vadd.f32 0.0, %v2659
      %2661 = vmatmul.f32.gmra.mxu0 %v2112
      %v2662 = vpop.f32.mrf.mxu0
      %v2663 = vadd.f32 0.0, %v2662
      %2664 = vmatmul.f32.gmra.mxu0 %v2114
      %v2665 = vpop.f32.mrf.mxu0
      %v2666 = vadd.f32 0.0, %v2665
      %2667 = vmatmul.f32.gmra.mxu0 %v2117
      %v2668 = vpop.f32.mrf.mxu0
      %v2669 = vadd.f32 0.0, %v2668
      %2670 = vmatmul.f32.gmra.mxu0 %v2119
      %v2671 = vpop.f32.mrf.mxu0
      %v2672 = vadd.f32 0.0, %v2671
      %2673 = vmatmul.f32.gmra.mxu0 %v2122
      %v2674 = vpop.f32.mrf.mxu0
      %v2675 = vadd.f32 0.0, %v2674
      %2676 = vmatmul.f32.gmra.mxu0 %v2124
      %v2677 = vpop.f32.mrf.mxu0
      %v2678 = vadd.f32 0.0, %v2677
      %2679 = vmatmul.f32.gmra.mxu0 %v2127
      %v2680 = vpop.f32.mrf.mxu0
      %v2681 = vadd.f32 0.0, %v2680
      %2682 = vmatmul.f32.gmra.mxu0 %v2129
      %v2683 = vpop.f32.mrf.mxu0
      %v2684 = vadd.f32 0.0, %v2683
      %2685 = vmatmul.f32.gmra.mxu0 %v2132
      %v2686 = vpop.f32.mrf.mxu0
      %v2687 = vadd.f32 0.0, %v2686
      %2688 = vmatmul.f32.gmra.mxu0 %v2134
      %v2689 = vpop.f32.mrf.mxu0
      %v2690 = vadd.f32 0.0, %v2689
      %2691 = vmatmul.f32.gmra.mxu0 %v2137
      %v2692 = vpop.f32.mrf.mxu0
      %v2693 = vadd.f32 0.0, %v2692
      %2694 = vmatmul.f32.gmra.mxu0 %v2583
      %v2695 = vpop.f32.mrf.mxu0
      %v2696 = vadd.f32 0.0, %v2695
      %2697 = vmatmul.f32.gmra.mxu0 %v2586
      %v2698 = vpop.f32.mrf.mxu0
      %v2699 = vadd.f32 0.0, %v2698
      %2700 = vdwg.mxu0
      %v2701 = vadd.f32 %v2551, %v2606
      %v2702 = vadd.f32 %v2552, %v2609
      %v2703 = vadd.f32 %v2553, %v2612
      %v2704 = vadd.f32 %v2554, %v2615
      %v2705 = vadd.f32 %v2555, %v2618
      %v2706 = vadd.f32 %v2556, %v2621
      %v2707 = vadd.f32 %v2557, %v2624
      %v2708 = vadd.f32 %v2558, %v2627
      %v2709 = vadd.f32 %v2559, %v2630
      %v2710 = vadd.f32 %v2560, %v2633
      %v2711 = vadd.f32 %v2561, %v2636
      %v2712 = vadd.f32 %v2562, %v2639
      %v2713 = vadd.f32 %v2563, %v2642
      %v2714 = vadd.f32 %v2564, %v2645
      %v2715 = vadd.f32 %v2565, %v2648
      %v2716 = vadd.f32 %v2566, %v2651
      %v2717 = vadd.f32 %v2567, %v2654
      %v2718 = vadd.f32 %v2568, %v2657
      %v2719 = vadd.f32 %v2569, %v2660
      %v2720 = vadd.f32 %v2570, %v2663
      %v2721 = vadd.f32 %v2571, %v2666
      %v2722 = vadd.f32 %v2572, %v2669
      %v2723 = vadd.f32 %v2573, %v2672
      %v2724 = vadd.f32 %v2574, %v2675
      %v2725 = vadd.f32 %v2575, %v2678
      %v2726 = vadd.f32 %v2576, %v2681
      %v2727 = vadd.f32 %v2577, %v2684
      %v2728 = vadd.f32 %v2578, %v2687
      %v2729 = vadd.f32 %v2579, %v2690
      %v2730 = vadd.f32 %v2580, %v2693
      %v2731 = vadd.f32 %v2581, %v2696
      %v2732 = vadd.f32 %v2582, %v2699
      %v2734 = vsel %vm311, %v1597, 0
      %v2736 = vsel %vm311, %v1561, 0
      %2738 = vmatpush.msra.mxu0 0.0
      %2739 = vmatpush.msra.mxu0 0.0
      %2740 = vmatpush.msra.mxu0 0.0
      %2741 = vmatpush.msra.mxu0 0.0
      %2742 = vmatpush.msra.mxu0 0.0
      %2743 = vmatpush.msra.mxu0 0.0
      %2744 = vmatpush.msra.mxu0 0.0
      %2745 = vmatpush.msra.mxu0 0.0
      %2746 = vmatpush.msra.mxu0 %v1415
      %2747 = vmatpush.msra.mxu0 %v1414
      %2748 = vmatpush.msra.mxu0 %v1413
      %2749 = vmatpush.msra.mxu0 %v1412
      %2750 = vmatpush.msra.mxu0 %v1411
      %2751 = vmatpush.msra.mxu0 %v1410
      %2752 = vmatpush.msra.mxu0 %v1409
      %2753 = vmatpush.msra.mxu0 %v1408
      %2754 = vmatmul.f32.gmra.mxu0 %v1877
      %v2755 = vpop.f32.mrf.mxu0
      %v2756 = vadd.f32 0.0, %v2755
      %2757 = vmatmul.f32.gmra.mxu0 %v1879
      %v2758 = vpop.f32.mrf.mxu0
      %v2759 = vadd.f32 0.0, %v2758
      %2760 = vmatmul.f32.gmra.mxu0 %v1882
      %v2761 = vpop.f32.mrf.mxu0
      %v2762 = vadd.f32 0.0, %v2761
      %2763 = vmatmul.f32.gmra.mxu0 %v1884
      %v2764 = vpop.f32.mrf.mxu0
      %v2765 = vadd.f32 0.0, %v2764
      %2766 = vmatmul.f32.gmra.mxu0 %v1887
      %v2767 = vpop.f32.mrf.mxu0
      %v2768 = vadd.f32 0.0, %v2767
      %2769 = vmatmul.f32.gmra.mxu0 %v1889
      %v2770 = vpop.f32.mrf.mxu0
      %v2771 = vadd.f32 0.0, %v2770
      %2772 = vmatmul.f32.gmra.mxu0 %v1892
      %v2773 = vpop.f32.mrf.mxu0
      %v2774 = vadd.f32 0.0, %v2773
      %2775 = vmatmul.f32.gmra.mxu0 %v1894
      %v2776 = vpop.f32.mrf.mxu0
      %v2777 = vadd.f32 0.0, %v2776
      %2778 = vmatmul.f32.gmra.mxu0 %v1897
      %v2779 = vpop.f32.mrf.mxu0
      %v2780 = vadd.f32 0.0, %v2779
      %2781 = vmatmul.f32.gmra.mxu0 %v1899
      %v2782 = vpop.f32.mrf.mxu0
      %v2783 = vadd.f32 0.0, %v2782
      %2784 = vmatmul.f32.gmra.mxu0 %v1902
      %v2785 = vpop.f32.mrf.mxu0
      %v2786 = vadd.f32 0.0, %v2785
      %2787 = vmatmul.f32.gmra.mxu0 %v1904
      %v2788 = vpop.f32.mrf.mxu0
      %v2789 = vadd.f32 0.0, %v2788
      %2790 = vmatmul.f32.gmra.mxu0 %v1907
      %v2791 = vpop.f32.mrf.mxu0
      %v2792 = vadd.f32 0.0, %v2791
      %2793 = vmatmul.f32.gmra.mxu0 %v1909
      %v2794 = vpop.f32.mrf.mxu0
      %v2795 = vadd.f32 0.0, %v2794
      %2796 = vmatmul.f32.gmra.mxu0 %v1912
      %v2797 = vpop.f32.mrf.mxu0
      %v2798 = vadd.f32 0.0, %v2797
      %2799 = vmatmul.f32.gmra.mxu0 %v1914
      %v2800 = vpop.f32.mrf.mxu0
      %v2801 = vadd.f32 0.0, %v2800
      %2802 = vmatmul.f32.gmra.mxu0 %v1917
      %v2803 = vpop.f32.mrf.mxu0
      %v2804 = vadd.f32 0.0, %v2803
      %2805 = vmatmul.f32.gmra.mxu0 %v1919
      %v2806 = vpop.f32.mrf.mxu0
      %v2807 = vadd.f32 0.0, %v2806
      %2808 = vmatmul.f32.gmra.mxu0 %v1922
      %v2809 = vpop.f32.mrf.mxu0
      %v2810 = vadd.f32 0.0, %v2809
      %2811 = vmatmul.f32.gmra.mxu0 %v1924
      %v2812 = vpop.f32.mrf.mxu0
      %v2813 = vadd.f32 0.0, %v2812
      %2814 = vmatmul.f32.gmra.mxu0 %v1927
      %v2815 = vpop.f32.mrf.mxu0
      %v2816 = vadd.f32 0.0, %v2815
      %2817 = vmatmul.f32.gmra.mxu0 %v1929
      %v2818 = vpop.f32.mrf.mxu0
      %v2819 = vadd.f32 0.0, %v2818
      %2820 = vmatmul.f32.gmra.mxu0 %v1932
      %v2821 = vpop.f32.mrf.mxu0
      %v2822 = vadd.f32 0.0, %v2821
      %2823 = vmatmul.f32.gmra.mxu0 %v1934
      %v2824 = vpop.f32.mrf.mxu0
      %v2825 = vadd.f32 0.0, %v2824
      %2826 = vmatmul.f32.gmra.mxu0 %v1937
      %v2827 = vpop.f32.mrf.mxu0
      %v2828 = vadd.f32 0.0, %v2827
      %2829 = vmatmul.f32.gmra.mxu0 %v1939
      %v2830 = vpop.f32.mrf.mxu0
      %v2831 = vadd.f32 0.0, %v2830
      %2832 = vmatmul.f32.gmra.mxu0 %v1942
      %v2833 = vpop.f32.mrf.mxu0
      %v2834 = vadd.f32 0.0, %v2833
      %2835 = vmatmul.f32.gmra.mxu0 %v1944
      %v2836 = vpop.f32.mrf.mxu0
      %v2837 = vadd.f32 0.0, %v2836
      %2838 = vmatmul.f32.gmra.mxu0 %v2285
      %v2839 = vpop.f32.mrf.mxu0
      %v2840 = vadd.f32 0.0, %v2839
      %2841 = vmatmul.f32.gmra.mxu0 %v2287
      %v2842 = vpop.f32.mrf.mxu0
      %v2843 = vadd.f32 0.0, %v2842
      %2844 = vmatmul.f32.gmra.mxu0 %v2734
      %v2845 = vpop.f32.mrf.mxu0
      %v2846 = vadd.f32 0.0, %v2845
      %2847 = vmatmul.f32.gmra.mxu0 %v2736
      %v2848 = vpop.f32.mrf.mxu0
      %v2849 = vadd.f32 0.0, %v2848
      %2850 = vdwg.mxu0
      %v2851 = vadd.f32 %v2701, %v2756
      %v2852 = vadd.f32 %v2702, %v2759
      %v2853 = vadd.f32 %v2703, %v2762
      %v2854 = vadd.f32 %v2704, %v2765
      %v2855 = vadd.f32 %v2705, %v2768
      %v2856 = vadd.f32 %v2706, %v2771
      %v2857 = vadd.f32 %v2707, %v2774
      %v2858 = vadd.f32 %v2708, %v2777
      %v2859 = vadd.f32 %v2709, %v2780
      %v2860 = vadd.f32 %v2710, %v2783
      %v2861 = vadd.f32 %v2711, %v2786
      %v2862 = vadd.f32 %v2712, %v2789
      %v2863 = vadd.f32 %v2713, %v2792
      %v2864 = vadd.f32 %v2714, %v2795
      %v2865 = vadd.f32 %v2715, %v2798
      %v2866 = vadd.f32 %v2716, %v2801
      %v2867 = vadd.f32 %v2717, %v2804
      %v2868 = vadd.f32 %v2718, %v2807
      %v2869 = vadd.f32 %v2719, %v2810
      %v2870 = vadd.f32 %v2720, %v2813
      %v2871 = vadd.f32 %v2721, %v2816
      %v2872 = vadd.f32 %v2722, %v2819
      %v2873 = vadd.f32 %v2723, %v2822
      %v2874 = vadd.f32 %v2724, %v2825
      %v2875 = vadd.f32 %v2725, %v2828
      %v2876 = vadd.f32 %v2726, %v2831
      %v2877 = vadd.f32 %v2727, %v2834
      %v2878 = vadd.f32 %v2728, %v2837
      %v2879 = vadd.f32 %v2729, %v2840
      %v2880 = vadd.f32 %v2730, %v2843
      %v2881 = vadd.f32 %v2731, %v2846
      %v2882 = vadd.f32 %v2732, %v2849
      %v2883 = vsel %vm311, %v1469, 0
      %v2885 = vsel %vm311, %v1470, 0
      %2887 = vmatpush.msra.mxu0 0.0
      %2888 = vmatpush.msra.mxu0 0.0
      %2889 = vmatpush.msra.mxu0 0.0
      %2890 = vmatpush.msra.mxu0 0.0
      %2891 = vmatpush.msra.mxu0 0.0
      %2892 = vmatpush.msra.mxu0 0.0
      %2893 = vmatpush.msra.mxu0 0.0
      %2894 = vmatpush.msra.mxu0 0.0
      %2895 = vmatpush.msra.mxu0 %v1423
      %2896 = vmatpush.msra.mxu0 %v1422
      %2897 = vmatpush.msra.mxu0 %v1421
      %2898 = vmatpush.msra.mxu0 %v1420
      %2899 = vmatpush.msra.mxu0 %v1419
      %2900 = vmatpush.msra.mxu0 %v1418
      %2901 = vmatpush.msra.mxu0 %v1417
      %2902 = vmatpush.msra.mxu0 %v1416
      %2903 = vmatmul.f32.gmra.mxu0 %v1697
      %v2904 = vpop.f32.mrf.mxu0
      %v2905 = vadd.f32 0.0, %v2904
      %2906 = vmatmul.f32.gmra.mxu0 %v1699
      %v2907 = vpop.f32.mrf.mxu0
      %v2908 = vadd.f32 0.0, %v2907
      %2909 = vmatmul.f32.gmra.mxu0 %v1701
      %v2910 = vpop.f32.mrf.mxu0
      %v2911 = vadd.f32 0.0, %v2910
      %2912 = vmatmul.f32.gmra.mxu0 %v1703
      %v2913 = vpop.f32.mrf.mxu0
      %v2914 = vadd.f32 0.0, %v2913
      %2915 = vmatmul.f32.gmra.mxu0 %v1705
      %v2916 = vpop.f32.mrf.mxu0
      %v2917 = vadd.f32 0.0, %v2916
      %2918 = vmatmul.f32.gmra.mxu0 %v1707
      %v2919 = vpop.f32.mrf.mxu0
      %v2920 = vadd.f32 0.0, %v2919
      %2921 = vmatmul.f32.gmra.mxu0 %v1709
      %v2922 = vpop.f32.mrf.mxu0
      %v2923 = vadd.f32 0.0, %v2922
      %2924 = vmatmul.f32.gmra.mxu0 %v1711
      %v2925 = vpop.f32.mrf.mxu0
      %v2926 = vadd.f32 0.0, %v2925
      %2927 = vmatmul.f32.gmra.mxu0 %v1713
      %v2928 = vpop.f32.mrf.mxu0
      %v2929 = vadd.f32 0.0, %v2928
      %2930 = vmatmul.f32.gmra.mxu0 %v1715
      %v2931 = vpop.f32.mrf.mxu0
      %v2932 = vadd.f32 0.0, %v2931
      %2933 = vmatmul.f32.gmra.mxu0 %v1717
      %v2934 = vpop.f32.mrf.mxu0
      %v2935 = vadd.f32 0.0, %v2934
      %2936 = vmatmul.f32.gmra.mxu0 %v1719
      %v2937 = vpop.f32.mrf.mxu0
      %v2938 = vadd.f32 0.0, %v2937
      %2939 = vmatmul.f32.gmra.mxu0 %v1721
      %v2940 = vpop.f32.mrf.mxu0
      %v2941 = vadd.f32 0.0, %v2940
      %2942 = vmatmul.f32.gmra.mxu0 %v1723
      %v2943 = vpop.f32.mrf.mxu0
      %v2944 = vadd.f32 0.0, %v2943
      %2945 = vmatmul.f32.gmra.mxu0 %v1725
      %v2946 = vpop.f32.mrf.mxu0
      %v2947 = vadd.f32 0.0, %v2946
      %2948 = vmatmul.f32.gmra.mxu0 %v1727
      %v2949 = vpop.f32.mrf.mxu0
      %v2950 = vadd.f32 0.0, %v2949
      %2951 = vmatmul.f32.gmra.mxu0 %v1729
      %v2952 = vpop.f32.mrf.mxu0
      %v2953 = vadd.f32 0.0, %v2952
      %2954 = vmatmul.f32.gmra.mxu0 %v1731
      %v2955 = vpop.f32.mrf.mxu0
      %v2956 = vadd.f32 0.0, %v2955
      %2957 = vmatmul.f32.gmra.mxu0 %v1733
      %v2958 = vpop.f32.mrf.mxu0
      %v2959 = vadd.f32 0.0, %v2958
      %2960 = vmatmul.f32.gmra.mxu0 %v1735
      %v2961 = vpop.f32.mrf.mxu0
      %v2962 = vadd.f32 0.0, %v2961
      %2963 = vmatmul.f32.gmra.mxu0 %v1737
      %v2964 = vpop.f32.mrf.mxu0
      %v2965 = vadd.f32 0.0, %v2964
      %2966 = vmatmul.f32.gmra.mxu0 %v1739
      %v2967 = vpop.f32.mrf.mxu0
      %v2968 = vadd.f32 0.0, %v2967
      %2969 = vmatmul.f32.gmra.mxu0 %v1741
      %v2970 = vpop.f32.mrf.mxu0
      %v2971 = vadd.f32 0.0, %v2970
      %2972 = vmatmul.f32.gmra.mxu0 %v1743
      %v2973 = vpop.f32.mrf.mxu0
      %v2974 = vadd.f32 0.0, %v2973
      %2975 = vmatmul.f32.gmra.mxu0 %v1745
      %v2976 = vpop.f32.mrf.mxu0
      %v2977 = vadd.f32 0.0, %v2976
      %2978 = vmatmul.f32.gmra.mxu0 %v1747
      %v2979 = vpop.f32.mrf.mxu0
      %v2980 = vadd.f32 0.0, %v2979
      %2981 = vmatmul.f32.gmra.mxu0 %v1749
      %v2982 = vpop.f32.mrf.mxu0
      %v2983 = vadd.f32 0.0, %v2982
      %2984 = vmatmul.f32.gmra.mxu0 %v1751
      %v2985 = vpop.f32.mrf.mxu0
      %v2986 = vadd.f32 0.0, %v2985
      %2987 = vmatmul.f32.gmra.mxu0 %v2434
      %v2988 = vpop.f32.mrf.mxu0
      %v2989 = vadd.f32 0.0, %v2988
      %2990 = vmatmul.f32.gmra.mxu0 %v2436
      %v2991 = vpop.f32.mrf.mxu0
      %v2992 = vadd.f32 0.0, %v2991
      %2993 = vmatmul.f32.gmra.mxu0 %v2883
      %v2994 = vpop.f32.mrf.mxu0
      %v2995 = vadd.f32 0.0, %v2994
      %2996 = vmatmul.f32.gmra.mxu0 %v2885
      %v2997 = vpop.f32.mrf.mxu0
      %v2998 = vadd.f32 0.0, %v2997
      %2999 = vdwg.mxu0
      %v3000 = vadd.f32 %v2851, %v2905
      %v3001 = vadd.f32 %v2852, %v2908
      %v3002 = vadd.f32 %v2853, %v2911
      %v3003 = vadd.f32 %v2854, %v2914
      %v3004 = vadd.f32 %v2855, %v2917
      %v3005 = vadd.f32 %v2856, %v2920
      %v3006 = vadd.f32 %v2857, %v2923
      %v3007 = vadd.f32 %v2858, %v2926
      %v3008 = vadd.f32 %v2859, %v2929
      %v3009 = vadd.f32 %v2860, %v2932
      %v3010 = vadd.f32 %v2861, %v2935
      %v3011 = vadd.f32 %v2862, %v2938
      %v3012 = vadd.f32 %v2863, %v2941
      %v3013 = vadd.f32 %v2864, %v2944
      %v3014 = vadd.f32 %v2865, %v2947
      %v3015 = vadd.f32 %v2866, %v2950
      %v3016 = vadd.f32 %v2867, %v2953
      %v3017 = vadd.f32 %v2868, %v2956
      %v3018 = vadd.f32 %v2869, %v2959
      %v3019 = vadd.f32 %v2870, %v2962
      %v3020 = vadd.f32 %v2871, %v2965
      %v3021 = vadd.f32 %v2872, %v2968
      %v3022 = vadd.f32 %v2873, %v2971
      %v3023 = vadd.f32 %v2874, %v2974
      %v3024 = vadd.f32 %v2875, %v2977
      %v3025 = vadd.f32 %v2876, %v2980
      %v3026 = vadd.f32 %v2877, %v2983
      %v3027 = vadd.f32 %v2878, %v2986
      %v3028 = vadd.f32 %v2879, %v2989
      %v3029 = vadd.f32 %v2880, %v2992
      %v3030 = vadd.f32 %v2881, %v2995
      %v3031 = vadd.f32 %v2882, %v2998
      %v3032 = vsel %vm311, %v1652, 0
      %v3035 = vsel %vm311, %v1688, 0
      %3037 = vmatpush.msra.mxu0 0.0
      %3038 = vmatpush.msra.mxu0 0.0
      %3039 = vmatpush.msra.mxu0 0.0
      %3040 = vmatpush.msra.mxu0 0.0
      %3041 = vmatpush.msra.mxu0 0.0
      %3042 = vmatpush.msra.mxu0 0.0
      %3043 = vmatpush.msra.mxu0 0.0
      %3044 = vmatpush.msra.mxu0 0.0
      %3045 = vmatpush.msra.mxu0 %v1431
      %3046 = vmatpush.msra.mxu0 %v1430
      %3047 = vmatpush.msra.mxu0 %v1429
      %3048 = vmatpush.msra.mxu0 %v1428
      %3049 = vmatpush.msra.mxu0 %v1427
      %3050 = vmatpush.msra.mxu0 %v1426
      %3051 = vmatpush.msra.mxu0 %v1425
      %3052 = vmatpush.msra.mxu0 %v1424
      %3053 = vmatmul.f32.gmra.mxu0 %v2069
      %v3054 = vpop.f32.mrf.mxu0
      %v3055 = vadd.f32 0.0, %v3054
      %3056 = vmatmul.f32.gmra.mxu0 %v2072
      %v3057 = vpop.f32.mrf.mxu0
      %v3058 = vadd.f32 0.0, %v3057
      %3059 = vmatmul.f32.gmra.mxu0 %v2074
      %v3060 = vpop.f32.mrf.mxu0
      %v3061 = vadd.f32 0.0, %v3060
      %3062 = vmatmul.f32.gmra.mxu0 %v2077
      %v3063 = vpop.f32.mrf.mxu0
      %v3064 = vadd.f32 0.0, %v3063
      %3065 = vmatmul.f32.gmra.mxu0 %v2079
      %v3066 = vpop.f32.mrf.mxu0
      %v3067 = vadd.f32 0.0, %v3066
      %3068 = vmatmul.f32.gmra.mxu0 %v2082
      %v3069 = vpop.f32.mrf.mxu0
      %v3070 = vadd.f32 0.0, %v3069
      %3071 = vmatmul.f32.gmra.mxu0 %v2084
      %v3072 = vpop.f32.mrf.mxu0
      %v3073 = vadd.f32 0.0, %v3072
      %3074 = vmatmul.f32.gmra.mxu0 %v2087
      %v3075 = vpop.f32.mrf.mxu0
      %v3076 = vadd.f32 0.0, %v3075
      %3077 = vmatmul.f32.gmra.mxu0 %v2089
      %v3078 = vpop.f32.mrf.mxu0
      %v3079 = vadd.f32 0.0, %v3078
      %3080 = vmatmul.f32.gmra.mxu0 %v2092
      %v3081 = vpop.f32.mrf.mxu0
      %v3082 = vadd.f32 0.0, %v3081
      %3083 = vmatmul.f32.gmra.mxu0 %v2094
      %v3084 = vpop.f32.mrf.mxu0
      %v3085 = vadd.f32 0.0, %v3084
      %3086 = vmatmul.f32.gmra.mxu0 %v2097
      %v3087 = vpop.f32.mrf.mxu0
      %v3088 = vadd.f32 0.0, %v3087
      %3089 = vmatmul.f32.gmra.mxu0 %v2099
      %v3090 = vpop.f32.mrf.mxu0
      %v3091 = vadd.f32 0.0, %v3090
      %3092 = vmatmul.f32.gmra.mxu0 %v2102
      %v3093 = vpop.f32.mrf.mxu0
      %v3094 = vadd.f32 0.0, %v3093
      %3095 = vmatmul.f32.gmra.mxu0 %v2104
      %v3096 = vpop.f32.mrf.mxu0
      %v3097 = vadd.f32 0.0, %v3096
      %3098 = vmatmul.f32.gmra.mxu0 %v2107
      %v3099 = vpop.f32.mrf.mxu0
      %v3100 = vadd.f32 0.0, %v3099
      %3101 = vmatmul.f32.gmra.mxu0 %v2109
      %v3102 = vpop.f32.mrf.mxu0
      %v3103 = vadd.f32 0.0, %v3102
      %3104 = vmatmul.f32.gmra.mxu0 %v2112
      %v3105 = vpop.f32.mrf.mxu0
      %v3106 = vadd.f32 0.0, %v3105
      %3107 = vmatmul.f32.gmra.mxu0 %v2114
      %v3108 = vpop.f32.mrf.mxu0
      %v3109 = vadd.f32 0.0, %v3108
      %3110 = vmatmul.f32.gmra.mxu0 %v2117
      %v3111 = vpop.f32.mrf.mxu0
      %v3112 = vadd.f32 0.0, %v3111
      %3113 = vmatmul.f32.gmra.mxu0 %v2119
      %v3114 = vpop.f32.mrf.mxu0
      %v3115 = vadd.f32 0.0, %v3114
      %3116 = vmatmul.f32.gmra.mxu0 %v2122
      %v3117 = vpop.f32.mrf.mxu0
      %v3118 = vadd.f32 0.0, %v3117
      %3119 = vmatmul.f32.gmra.mxu0 %v2124
      %v3120 = vpop.f32.mrf.mxu0
      %v3121 = vadd.f32 0.0, %v3120
      %3122 = vmatmul.f32.gmra.mxu0 %v2127
      %v3123 = vpop.f32.mrf.mxu0
      %v3124 = vadd.f32 0.0, %v3123
      %3125 = vmatmul.f32.gmra.mxu0 %v2129
      %v3126 = vpop.f32.mrf.mxu0
      %v3127 = vadd.f32 0.0, %v3126
      %3128 = vmatmul.f32.gmra.mxu0 %v2132
      %v3129 = vpop.f32.mrf.mxu0
      %v3130 = vadd.f32 0.0, %v3129
      %3131 = vmatmul.f32.gmra.mxu0 %v2134
      %v3132 = vpop.f32.mrf.mxu0
      %v3133 = vadd.f32 0.0, %v3132
      %3134 = vmatmul.f32.gmra.mxu0 %v2137
      %v3135 = vpop.f32.mrf.mxu0
      %v3136 = vadd.f32 0.0, %v3135
      %3137 = vmatmul.f32.gmra.mxu0 %v2583
      %v3138 = vpop.f32.mrf.mxu0
      %v3139 = vadd.f32 0.0, %v3138
      %3140 = vmatmul.f32.gmra.mxu0 %v2586
      %v3141 = vpop.f32.mrf.mxu0
      %v3142 = vadd.f32 0.0, %v3141
      %3143 = vmatmul.f32.gmra.mxu0 %v3032
      %v3144 = vpop.f32.mrf.mxu0
      %v3145 = vadd.f32 0.0, %v3144
      %3146 = vmatmul.f32.gmra.mxu0 %v3035
      %v3147 = vpop.f32.mrf.mxu0
      %v3148 = vadd.f32 0.0, %v3147
      %3149 = vdwg.mxu0
      %v3150 = vadd.f32 %v3000, %v3055
      %v3151 = vadd.f32 %v3001, %v3058
      %v3152 = vadd.f32 %v3002, %v3061
      %v3153 = vadd.f32 %v3003, %v3064
      %v3154 = vadd.f32 %v3004, %v3067
      %v3155 = vadd.f32 %v3005, %v3070
      %v3156 = vadd.f32 %v3006, %v3073
      %v3157 = vadd.f32 %v3007, %v3076
      %v3158 = vadd.f32 %v3008, %v3079
      %v3159 = vadd.f32 %v3009, %v3082
      %v3160 = vadd.f32 %v3010, %v3085
      %v3161 = vadd.f32 %v3011, %v3088
      %v3162 = vadd.f32 %v3012, %v3091
      %v3163 = vadd.f32 %v3013, %v3094
      %v3164 = vadd.f32 %v3014, %v3097
      %v3165 = vadd.f32 %v3015, %v3100
      %v3166 = vadd.f32 %v3016, %v3103
      %v3167 = vadd.f32 %v3017, %v3106
      %v3168 = vadd.f32 %v3018, %v3109
      %v3169 = vadd.f32 %v3019, %v3112
      %v3170 = vadd.f32 %v3020, %v3115
      %v3171 = vadd.f32 %v3021, %v3118
      %v3172 = vadd.f32 %v3022, %v3121
      %v3173 = vadd.f32 %v3023, %v3124
      %v3174 = vadd.f32 %v3024, %v3127
      %v3175 = vadd.f32 %v3025, %v3130
      %v3176 = vadd.f32 %v3026, %v3133
      %v3177 = vadd.f32 %v3027, %v3136
      %v3178 = vadd.f32 %v3028, %v3139
      %v3179 = vadd.f32 %v3029, %v3142
      %v3180 = vadd.f32 %v3030, %v3145
      %v3181 = vadd.f32 %v3031, %v3148
      %v3183 = vperm.slane %v1432, 0
      %v3185 = vadd.f32 %v3150, %v3183
      %v3186 = vadd.f32 %v3151, %v3183
      %v3187 = vadd.f32 %v3152, %v3183
      %v3188 = vadd.f32 %v3153, %v3183
      %v3189 = vadd.f32 %v3154, %v3183
      %v3190 = vadd.f32 %v3155, %v3183
      %v3191 = vadd.f32 %v3156, %v3183
      %v3192 = vadd.f32 %v3157, %v3183
      %v3193 = vadd.f32 %v3158, %v3183
      %v3194 = vadd.f32 %v3159, %v3183
      %v3195 = vadd.f32 %v3160, %v3183
      %v3196 = vadd.f32 %v3161, %v3183
      %v3197 = vadd.f32 %v3162, %v3183
      %v3198 = vadd.f32 %v3163, %v3183
      %v3199 = vadd.f32 %v3164, %v3183
      %v3200 = vadd.f32 %v3165, %v3183
      %v3201 = vadd.f32 %v3166, %v3183
      %v3202 = vadd.f32 %v3167, %v3183
      %v3203 = vadd.f32 %v3168, %v3183
      %v3204 = vadd.f32 %v3169, %v3183
      %v3205 = vadd.f32 %v3170, %v3183
      %v3206 = vadd.f32 %v3171, %v3183
      %v3207 = vadd.f32 %v3172, %v3183
      %v3208 = vadd.f32 %v3173, %v3183
      %v3209 = vadd.f32 %v3174, %v3183
      %v3210 = vadd.f32 %v3175, %v3183
      %v3211 = vadd.f32 %v3176, %v3183
      %v3212 = vadd.f32 %v3177, %v3183
      %v3213 = vadd.f32 %v3178, %v3183
      %v3214 = vadd.f32 %v3179, %v3183
      %v3215 = vadd.f32 %v3180, %v3183
      %v3216 = vadd.f32 %v3181, %v3183
      %s3217 = scalar_lea.vmem %s278, %s1433
      %vm3218 = vcmask 31744
      %3219 = vst.msk [vmem:[%s3217] sm:$0xff] %vm3218, %v3185
      %3220 = vst.msk [vmem:[%s3217 + $0x8] sm:$0xff] %vm3218, %v3186
      %3221 = vst.msk [vmem:[%s3217 + $0x10] sm:$0xff] %vm3218, %v3187
      %3222 = vst.msk [vmem:[%s3217 + $0x18] sm:$0xff] %vm3218, %v3188
      %3223 = vst.msk [vmem:[%s3217 + $0x20] sm:$0xff] %vm3218, %v3189
      %3224 = vst.msk [vmem:[%s3217 + $0x28] sm:$0xff] %vm3218, %v3190
      %3225 = vst.msk [vmem:[%s3217 + $0x30] sm:$0xff] %vm3218, %v3191
      %3226 = vst.msk [vmem:[%s3217 + $0x38] sm:$0xff] %vm3218, %v3192
      %3227 = vst.msk [vmem:[%s3217 + $0x40] sm:$0xff] %vm3218, %v3193
      %3228 = vst.msk [vmem:[%s3217 + $0x48] sm:$0xff] %vm3218, %v3194
      %3229 = vst.msk [vmem:[%s3217 + $0x50] sm:$0xff] %vm3218, %v3195
      %3230 = vst.msk [vmem:[%s3217 + $0x58] sm:$0xff] %vm3218, %v3196
      %3231 = vst.msk [vmem:[%s3217 + $0x60] sm:$0xff] %vm3218, %v3197
      %3232 = vst.msk [vmem:[%s3217 + $0x68] sm:$0xff] %vm3218, %v3198
      %3233 = vst.msk [vmem:[%s3217 + $0x70] sm:$0xff] %vm3218, %v3199
      %3234 = vst.msk [vmem:[%s3217 + $0x78] sm:$0xff] %vm3218, %v3200
      %3235 = vst.msk [vmem:[%s3217 + $0x80] sm:$0xff] %vm3218, %v3201
      %3236 = vst.msk [vmem:[%s3217 + $0x88] sm:$0xff] %vm3218, %v3202
      %3237 = vst.msk [vmem:[%s3217 + $0x90] sm:$0xff] %vm3218, %v3203
      %3238 = vst.msk [vmem:[%s3217 + $0x98] sm:$0xff] %vm3218, %v3204
      %3239 = vst.msk [vmem:[%s3217 + $0xa0] sm:$0xff] %vm3218, %v3205
      %3240 = vst.msk [vmem:[%s3217 + $0xa8] sm:$0xff] %vm3218, %v3206
      %3241 = vst.msk [vmem:[%s3217 + $0xb0] sm:$0xff] %vm3218, %v3207
      %3242 = vst.msk [vmem:[%s3217 + $0xb8] sm:$0xff] %vm3218, %v3208
      %3243 = vst.msk [vmem:[%s3217 + $0xc0] sm:$0xff] %vm3218, %v3209
      %3244 = vst.msk [vmem:[%s3217 + $0xc8] sm:$0xff] %vm3218, %v3210
      %3245 = vst.msk [vmem:[%s3217 + $0xd0] sm:$0xff] %vm3218, %v3211
      %3246 = vst.msk [vmem:[%s3217 + $0xd8] sm:$0xff] %vm3218, %v3212
      %3247 = vst.msk [vmem:[%s3217 + $0xe0] sm:$0xff] %vm3218, %v3213
      %3248 = vst.msk [vmem:[%s3217 + $0xe8] sm:$0xff] %vm3218, %v3214
      %3249 = vst.msk [vmem:[%s3217 + $0xf0] sm:$0xff] %vm3218, %v3215
      %3250 = vst.msk [vmem:[%s3217 + $0xf8] sm:$0xff] %vm3218, %v3216
      %p3251 = scmp.lt.s32.totalorder %s18, 1
      %s3252 = scalar_select %p3251, %s18, 1
      %s3253 = smul.addr %s3252, 32
      %s3254 = smul.addr %s3253, 8
      %s3255 = scalar_lea.vmem %s7, %s3254
      // Predicated region
      $region49: #{tpu_custom_call.1} parent=47 // pred_check
        %p3256 = pneg %p188
      $region50: #{tpu_custom_call.1} parent=47 // pred_check_branch
        %3258 = sbr.rel (%p3256) target = $region52
      $region51: #{tpu_custom_call.1} parent=47 // pred_region
        _
      $region52: #{tpu_custom_call.1} parent=47 // pred_fallthru
        _
    $region48: #{tpu_custom_call.1} parent=5 // pred_fallthru
      _
    %p3259 = scmp.le.s32.totalorder 2, %s13
    // Predicated region
    $region53: #{tpu_custom_call.1} parent=5 // pred_check
      %p3260 = pneg %p3259
    $region54: #{tpu_custom_call.1} parent=5 // pred_check_branch
      %3262 = sbr.rel (%p3260) target = $region56
    $region55: #{tpu_custom_call.1} parent=5 // pred_region
      %s3263 = ssub.s32 %s13, 2
      // Predicated region
      $region57: #{tpu_custom_call.1} parent=55 // pred_check
        %p3264 = pneg %p194
      $region58: #{tpu_custom_call.1} parent=55 // pred_check_branch
        %3266 = sbr.rel (%p3264) target = $region60
      $region59: #{tpu_custom_call.1} parent=55 // pred_region
        %p3267 = scmp.lt.s32.totalorder %s19, 1
        %s3268 = scalar_select %p3267, %s19, 1
        %s3269 = smul.addr %s3268, 32
        %s3270 = smul.addr %s3269, 8
        %s3271 = scalar_lea.vmem %s7, %s3270
      $region60: #{tpu_custom_call.1} parent=55 // pred_fallthru
        _
    $region56: #{tpu_custom_call.1} parent=5 // pred_fallthru
      _
  $region6: #{tpu_custom_call.1} parent=0 // loop_footer
    %s17 = sadd.s32 1, %s13
  $region7: #{tpu_custom_call.1} parent=0 // loop_footer_branch
    %12 = sbr.rel target = $region3
  $region8: #{tpu_custom_call.1} parent=0 // loop_exit
    _

</llo_original>
